<compile_context>
chip_gen: v5e
topology: v5e:2x2
jax: 0.10.0
libtpu: 0.0.40
codegen_flags: <defaults>
</compile_context>

<pallas_src>
import functools

import jax
import jax.numpy as jnp
from jax.experimental import pallas as pl
from jax.experimental.pallas import tpu as pltpu


_PARALLEL = pltpu.CompilerParams(dimension_semantics=("parallel",))


# --------------------------------------------------------------------------- tiling
def _round_up(x, m):
    return (x + m - 1) // m * m


def _row_tile(m, row_bytes, budget=4 << 20, cap=512):
    """Row tile (multiple of 8).  `row_bytes` is the (8,128)-padded VMEM bytes per row
    INCLUDING in-kernel temporaries; the tile keeps a double-buffered block inside
    `budget` (safe for v7x 64 MiB/TC VMEM and the 16 MiB v5e scoped default) while
    targeting >= 4 grid steps so both v7x TensorCores get a pipelined grid slice."""
    limit = max(8, (budget // max(1, 2 * row_bytes)) // 8 * 8)
    limit = min(limit, cap)
    target = _round_up(-(-m // 4), 8)          # aim for >= 4 grid steps
    return max(8, min(limit, target))


def _pad_rows(x, rows):
    pad = rows - x.shape[0]
    if pad == 0:
        return x
    return jnp.pad(x, ((0, pad),) + ((0, 0),) * (x.ndim - 1))


# --------------------------------------------------------------------------- kernels
def _linear_act_kernel(x_ref, w_ref, b_ref, o_ref):
    # (TM, K) @ (K, Cout) + (1, Cout) then LeakyReLU(0.2).
    y = jnp.dot(x_ref[...], w_ref[...], preferred_element_type=jnp.float32) + b_ref[...]
    o_ref[...] = jnp.where(y > 0, y, 0.2 * y).astype(o_ref.dtype)


def _mha_kernel(x_ref, g_ref, win_ref, bin_ref, wout_ref, bout_ref, o_ref,
                *, num_heads, scale):
    # x: (T, k, E) -- T independent token groups of sequence length k.
    # g: (T, 1, E) squeeze-excite gate, applied in-kernel (no gated HBM copy).
    T, K, E = x_ref.shape
    Dh = E // num_heads
    xg = x_ref[...] * g_ref[...]
    x2 = xg.reshape(T * K, E)                                   # free merge (K == 8)
    qkv = jnp.dot(x2, win_ref[...], preferred_element_type=jnp.float32) + bin_ref[...]
    qkv = qkv.reshape(T, K, 3 * E)
    ctx = []
    for h in range(num_heads):                                  # 4 short iterations
        q = qkv[:, :, h * Dh:(h + 1) * Dh] * scale
        kk = qkv[:, :, E + h * Dh:E + (h + 1) * Dh]
        v = qkv[:, :, 2 * E + h * Dh:2 * E + (h + 1) * Dh]
        s = jnp.einsum("tqd,tkd->tqk", q, kk, preferred_element_type=jnp.float32)
        s = s - jnp.max(s, axis=-1, keepdims=True)
        p = jnp.exp(s)
        p = p / jnp.sum(p, axis=-1, keepdims=True)              # exact softmax
        ctx.append(jnp.einsum("tqk,tkd->tqd", p, v, preferred_element_type=jnp.float32))
    ctx = jnp.concatenate(ctx, axis=-1)                         # (T, K, E)
    # Hoisted output projection: one (T*K, E) @ (E, E) matmul for all heads.
    y = jnp.dot(ctx.reshape(T * K, E), wout_ref[...],
                preferred_element_type=jnp.float32) + bout_ref[...]
    o_ref[...] = y.reshape(T, K, E).astype(o_ref.dtype)


def _attpool_kernel(fnb_ref, fxyz_ref, ftr_ref, g_ref, wfc_ref, o_ref):
    # Attentive pooling on the (never-materialised) concat [gate*f_nb, f_xyz, f_tr]:
    # scores = fcat @ wfc ; softmax over k ; per-channel weighted sum over k.
    T, K, C = fnb_ref.shape
    Ccat = wfc_ref.shape[0]
    fn = fnb_ref[...] * g_ref[...]
    fcat = jnp.concatenate([fn, fxyz_ref[...], ftr_ref[...]], axis=-1)   # VMEM only
    s = jnp.dot(fcat.reshape(T * K, Ccat), wfc_ref[...],
                preferred_element_type=jnp.float32).reshape(T, K, Ccat)
    s = s - jnp.max(s, axis=1, keepdims=True)
    e = jnp.exp(s)
    attn = e / jnp.sum(e, axis=1, keepdims=True)                # exact softmax
    o_ref[...] = jnp.sum(fcat * attn, axis=1).astype(o_ref.dtype)


# --------------------------------------------------------------------------- BN fold
def _fold_bn(x, w, b, gamma, beta, eps):
    """Fold train-mode BatchNorm of y = x @ w + b into (w_eff, b_eff).
    Batch stats of y are derived analytically from x (cov = x^T x / M - mu mu^T,
    so no centered copy of x is materialised)."""
    M = x.shape[0]
    mu = jnp.mean(x, axis=0)                                    # (K,)
    cov = (x.T @ x) / M - jnp.outer(mu, mu)                     # (K, K)
    mean_y = mu @ w + b                                         # (Cout,)
    var_y = jnp.sum((cov @ w) * w, axis=0)                      # diag(w^T cov w)
    s = gamma * jax.lax.rsqrt(var_y + eps)
    return w * s[None, :], ((b - mean_y) * s + beta)[None, :]


# --------------------------------------------------------------------------- wrappers
def linear_bn_leaky(x, w, b, gamma, beta, eps=1e-5):
    """Fused LeakyReLU(BatchNorm(x @ w + b)) for small pooled tensors, x: (M, K)."""
    M, K = x.shape
    Cout = w.shape[1]
    w_eff, b_eff = _fold_bn(x, w, b, gamma, beta, eps)
    row_bytes = (_round_up(K, 128) + 2 * _round_up(Cout, 128)) * 4     # padded
    T = _row_tile(M, row_bytes)
    Mp = _round_up(M, T)
    out = pl.pallas_call(
        _linear_act_kernel,
        out_shape=jax.ShapeDtypeStruct((Mp, Cout), jnp.float32),
        grid=(Mp // T,),
        in_specs=[
            pl.BlockSpec((T, K), lambda i: (i, 0)),
            pl.BlockSpec((K, Cout), lambda i: (0, 0)),
            pl.BlockSpec((1, Cout), lambda i: (0, 0)),
        ],
        out_specs=pl.BlockSpec((T, Cout), lambda i: (i, 0)),
        compiler_params=_PARALLEL,
    )(_pad_rows(x, Mp), w_eff, b_eff)
    return out[:M]


def linear_bn_leaky_kfold(x_rows, k, w, b, gamma, beta, eps=1e-5):
    """Fused conv1x1 + BN + LeakyReLU with the neighbour axis k folded into lanes.

    x_rows: (R, k*Kin) -- the contiguous view of (R*k, Kin) samples.  The 1x1 conv is
    applied as ONE matmul against the block-diagonal kron(I_k, W_eff) weight, so the
    input block is (T, k*Kin) and the output block is (T, k*Cout) -- both lane-dense
    (>=80 / exactly 128 lanes here), with no in-kernel reshape or masked stores."""
    R, KK = x_rows.shape
    Kin = KK // k
    Cout = w.shape[1]
    w_eff, b_eff = _fold_bn(x_rows.reshape(R * k, Kin), w, b, gamma, beta, eps)
    w_bd = jnp.kron(jnp.eye(k, dtype=w.dtype), w_eff)           # (k*Kin, k*Cout), tiny
    b_bd = jnp.tile(b_eff, (1, k))                              # (1, k*Cout)
    row_bytes = (_round_up(k * Kin, 128) + 2 * _round_up(k * Cout, 128)) * 4
    T = _row_tile(R, row_bytes)
    Rp = _round_up(R, T)
    out = pl.pallas_call(
        _linear_act_kernel,
        out_shape=jax.ShapeDtypeStruct((Rp, k * Cout), jnp.float32),
        grid=(Rp // T,),
        in_specs=[
            pl.BlockSpec((T, k * Kin), lambda i: (i, 0)),
            pl.BlockSpec((k * Kin, k * Cout), lambda i: (0, 0)),
            pl.BlockSpec((1, k * Cout), lambda i: (0, 0)),
        ],
        out_specs=pl.BlockSpec((T, k * Cout), lambda i: (i, 0)),
        compiler_params=_PARALLEL,
    )(_pad_rows(x_rows, Rp), w_bd, b_bd)
    return out[:R]


def self_attention(x3, gate, p, num_heads=4):
    """Fused MHA over B*N independent groups of seq-len k; SE gate applied in-kernel."""
    BN, k, E = x3.shape
    Dh = E // num_heads
    kp = _round_up(k, 8)
    # Padded per-group VMEM: x, qkv, ctx, out slabs of (kp,128) f32 + gate/score temps.
    row_bytes = (5 * kp * 128 + 2 * 128) * 4
    T = _row_tile(BN, row_bytes, cap=256)
    BNp = _round_up(BN, T)
    kern = functools.partial(_mha_kernel, num_heads=num_heads, scale=float(Dh) ** -0.5)
    out = pl.pallas_call(
        kern,
        out_shape=jax.ShapeDtypeStruct((BNp, k, E), jnp.float32),
        grid=(BNp // T,),
        in_specs=[
            pl.BlockSpec((T, k, E), lambda i: (i, 0, 0)),
            pl.BlockSpec((T, 1, E), lambda i: (i, 0, 0)),
            pl.BlockSpec((E, 3 * E), lambda i: (0, 0)),
            pl.BlockSpec((1, 3 * E), lambda i: (0, 0)),
            pl.BlockSpec((E, E), lambda i: (0, 0)),
            pl.BlockSpec((1, E), lambda i: (0, 0)),
        ],
        out_specs=pl.BlockSpec((T, k, E), lambda i: (i, 0, 0)),
        compiler_params=_PARALLEL,
    )(_pad_rows(x3, BNp), _pad_rows(gate, BNp),
      p["in_w_t"], p["in_b"], p["out_w_t"], p["out_b"])
    return out[:BN]


def attentive_pool(f_nb, f_xyz, f_tr, gate, wfc):
    """Fused fc + softmax(k) + weighted-sum over the in-VMEM concat of the 3 parts."""
    BN, k, C = f_nb.shape
    kp = _round_up(k, 8)
    # Padded per-group VMEM: 3 input slabs + fcat + scores/attn + out.
    row_bytes = (6 * kp * 128 + 2 * 128) * 4
    T = _row_tile(BN, row_bytes, cap=256)
    BNp = _round_up(BN, T)
    Ccat = wfc.shape[0]
    out = pl.pallas_call(
        _attpool_kernel,
        out_shape=jax.ShapeDtypeStruct((BNp, Ccat), jnp.float32),
        grid=(BNp // T,),
        in_specs=[
            pl.BlockSpec((T, k, C), lambda i: (i, 0, 0)),
            pl.BlockSpec((T, k, C), lambda i: (i, 0, 0)),
            pl.BlockSpec((T, k, C), lambda i: (i, 0, 0)),
            pl.BlockSpec((T, 1, C), lambda i: (i, 0, 0)),
            pl.BlockSpec((Ccat, Ccat), lambda i: (0, 0)),
        ],
        out_specs=pl.BlockSpec((T, Ccat), lambda i: (i, 0)),
        compiler_params=_PARALLEL,
    )(_pad_rows(f_nb, BNp), _pad_rows(f_xyz, BNp), _pad_rows(f_tr, BNp),
      _pad_rows(gate, BNp), wfc)
    return out[:BN]


# --------------------------------------------------------------------------- JAX glue
def gather_neighbour(pc, neigh_idx):
    # pc: (B, N, d), neigh_idx: (B, N, k) -> (B, N, k, d)
    B, N, d = pc.shape
    k = neigh_idx.shape[-1]
    flat = neigh_idx.reshape(B, N * k)
    out = jnp.take_along_axis(pc, flat[:, :, None], axis=1)
    return out.reshape(B, N, k, d)


def relative_pos_encoding(xyz, neigh_idx):
    nb = gather_neighbour(xyz, neigh_idx)                       # (B,N,k,3)
    tile = jnp.broadcast_to(xyz[:, :, None, :], nb.shape)       # (B,N,k,3)
    rel = tile - nb
    dist = jnp.linalg.norm(rel, axis=-1, keepdims=True)         # (B,N,k,1)
    return jnp.concatenate([dist, rel, tile, nb], axis=-1)      # (B,N,k,10)


def se_gate(f_nb, B, p):
    # Tiny (B,C) FCs in plain XLA; gate is applied INSIDE the consumer kernels.
    BN, k, C = f_nb.shape
    pooled = jnp.mean(f_nb.reshape(B, -1, C), axis=1)           # AdaptiveAvgPool2d(1)
    h = pooled @ p["w1_t"] + p["b1"]
    h = h * jax.nn.sigmoid(h)                                   # SiLU
    return jax.nn.sigmoid(h @ p["w2_t"] + p["b2"])              # (B, C)


def gcn_adj(xyz_b, k):
    """Dense D^-1/2 (A + I) D^-1/2 for knn_graph (loop=False) + GCNConv self loops."""
    N = xyz_b.shape[0]
    diff = xyz_b[:, None, :] - xyz_b[None, :, :]
    d2 = jnp.sum(diff * diff, axis=-1) + jnp.eye(N, dtype=jnp.float32) * 1e10
    _, nbr = jax.lax.top_k(-d2, k)                              # k nearest (excl. self)
    A = jnp.zeros((N, N), jnp.float32).at[jnp.arange(N)[:, None], nbr].set(1.0)
    Ahat = A + jnp.eye(N, dtype=jnp.float32)
    dinv = jax.lax.rsqrt(jnp.sum(Ahat, axis=1))
    return Ahat * dinv[:, None] * dinv[None, :]


def gcn_block(x, Anorm, p):
    # GCNConv x2: 16x16 matmuls -> plain XLA (pallas launch would be pure overhead).
    h = jnp.maximum(Anorm @ (x @ p["w1_t"]) + p["b1"], 0.0)
    return Anorm @ (h @ p["w2_t"]) + p["b2"]


# --------------------------------------------------------------------------- forward
def building_block_forward(params, xyz, feature, neigh_idx):
    B, N, k = neigh_idx.shape
    C = feature.shape[1]                                        # d_out // 2
    BN = B * N

    # relative position encoding -> fused mlp1 (conv+BN+LeakyReLU, k folded into lanes)
    f_enc = relative_pos_encoding(xyz, neigh_idx)               # (B,N,k,10)
    f_xyz_flat = linear_bn_leaky_kfold(
        f_enc.reshape(BN, k * 10), k, params["mlp1_w"], params["mlp1_b"],
        params["mlp1_gamma"], params["mlp1_beta"])              # (BN, k*C)
    f_xyz = f_xyz_flat.reshape(BN, k, C)

    # gather neighbours of the input feature; SE gate stays (B,C) and is fused in.
    feat_cl = jnp.transpose(feature[..., 0], (0, 2, 1))         # (B,N,C)
    f_nb = gather_neighbour(feat_cl, neigh_idx).reshape(BN, k, C)
    g1 = se_gate(f_nb, B, params["se"])                         # (B,C)
    gate1 = jnp.repeat(g1, N, axis=0)[:, None, :]               # (BN,1,C)

    # fused transformer attention (+ replication of torch's raw .reshape(B,C,N,k))
    att = self_attention(f_nb, gate1, params["attn"])           # (BN,k,C)
    f_tr = jnp.transpose(att.reshape(B, C, N, k), (0, 2, 3, 1)).reshape(BN, k, C)

    # attentive pooling 1: concat happens only inside VMEM
    agg1 = attentive_pool(f_nb, f_xyz, f_tr, gate1, params["ap1_fc"])     # (BN,3C)
    f_agg = linear_bn_leaky(agg1, params["ap1_w"], params["ap1_b"],
                            params["ap1_gamma"], params["ap1_beta"])      # (BN,C)
    f_agg = f_agg.reshape(B, N, C)

    # per-batch kNN graph + GCN block, vmapped over the batch (plain XLA), residual add
    gcn_out = jax.vmap(
        lambda xyz_b, f_b: gcn_block(f_b, gcn_adj(xyz_b, k), params["gcn"])
    )(xyz, f_agg)
    f_agg = f_agg + gcn_out

    # fused mlp2 on f_xyz (input is already the lane-dense (BN, k*C) buffer)
    f_xyz2 = linear_bn_leaky_kfold(
        f_xyz_flat, k, params["mlp2_w"], params["mlp2_b"],
        params["mlp2_gamma"], params["mlp2_beta"]).reshape(BN, k, C)

    # second round: gather / SE gate / attention / attentive pooling 2
    f_nb2 = gather_neighbour(f_agg, neigh_idx).reshape(BN, k, C)
    g2 = se_gate(f_nb2, B, params["se"])
    gate2 = jnp.repeat(g2, N, axis=0)[:, None, :]
    att2 = self_attention(f_nb2, gate2, params["attn"])
    f_tr2 = jnp.transpose(att2.reshape(B, C, N, k), (0, 2, 3, 1)).reshape(BN, k, C)
    agg2 = attentive_pool(f_nb2, f_xyz2, f_tr2, gate2, params["ap2_fc"])
    out = linear_bn_leaky(agg2, params["ap2_w"], params["ap2_b"],
                          params["ap2_gamma"], params["ap2_beta"])        # (BN,d_out)

    # return in PyTorch layout (B, d_out, N, 1)
    out = out.reshape(B, N, -1)
    return jnp.transpose(out, (0, 2, 1))[..., None]


# --------------------------------------------------------------------------- params
def init_params(key, d_out=32):
    C = d_out // 2
    Cr = d_out // 8
    Ccat = d_out * 3 // 2
    ks = list(jax.random.split(key, 24))
    it = iter(ks)

    def nrm(shape, s=0.1):
        return jax.random.normal(next(it), shape, jnp.float32) * s

    p = {}
    p["mlp1_w"], p["mlp1_b"] = nrm((10, C)), nrm((C,))
    p["mlp1_gamma"], p["mlp1_beta"] = jnp.ones((C,), jnp.float32), jnp.zeros((C,), jnp.float32)
    p["se"] = {"w1_t": nrm((C, Cr)), "b1": nrm((Cr,)),
               "w2_t": nrm((Cr, C)), "b2": nrm((C,))}
    p["attn"] = {"in_w_t": nrm((C, 3 * C)), "in_b": nrm((1, 3 * C)),
                 "out_w_t": nrm((C, C)), "out_b": nrm((1, C))}
    p["ap1_fc"] = nrm((Ccat, Ccat))
    p["ap1_w"], p["ap1_b"] = nrm((Ccat, C)), nrm((C,))
    p["ap1_gamma"], p["ap1_beta"] = jnp.ones((C,), jnp.float32), jnp.zeros((C,), jnp.float32)
    p["gcn"] = {"w1_t": nrm((C, C // 2)), "b1": nrm((C // 2,)),
                "w2_t": nrm((C // 2, C)), "b2": nrm((C,))}
    p["mlp2_w"], p["mlp2_b"] = nrm((C, C)), nrm((C,))
    p["mlp2_gamma"], p["mlp2_beta"] = jnp.ones((C,), jnp.float32), jnp.zeros((C,), jnp.float32)
    p["ap2_fc"] = nrm((Ccat, Ccat))
    p["ap2_w"], p["ap2_b"] = nrm((Ccat, d_out)), nrm((d_out,))
    p["ap2_gamma"], p["ap2_beta"] = jnp.ones((d_out,), jnp.float32), jnp.zeros((d_out,), jnp.float32)
    return p


# --------------------------------------------------------------------------- main
if __name__ == "__main__":
    d_out = 32                       # -> C = 16, heads = 4, head_dim = 4
    B, N, k = 2, 16, 8

    key = jax.random.PRNGKey(0)
    k1, k2, k3, kp = jax.random.split(key, 4)
    xyz = jax.random.normal(k1, (B, N, 3), jnp.float32)
    feature = jax.random.normal(k2, (B, d_out // 2, N, 1), jnp.float32)
    neigh_idx = jax.random.randint(k3, (B, N, k), 0, N, dtype=jnp.int32)

    params = init_params(kp, d_out)
    fwd = jax.jit(building_block_forward)
    out = jax.block_until_ready(fwd(params, xyz, feature, neigh_idx))
    assert out.shape == (B, d_out, N, 1), out.shape
    assert bool(jnp.all(jnp.isfinite(out)))
    print("KERNEL_OK")
</pallas_src>

<mosaic_0001>
module attributes {stable_mosaic.version = 11 : i64} {
  func.func @_linear_act_kernel(%arg0: i32, %arg1: memref<8x80xf32, #tpu.memory_space<vmem>>, %arg2: memref<80x128xf32, #tpu.memory_space<vmem>>, %arg3: memref<1x128xf32, #tpu.memory_space<vmem>>, %arg4: memref<8x128xf32, #tpu.memory_space<vmem>>) attributes {dimension_semantics = [#tpu.dimension_semantics<parallel>], iteration_bounds = array<i64: 4>, scalar_prefetch = 0 : i64, scratch_operands = 0 : i64, tpu.core_type = #tpu.core_type<tc>, window_params = [{transform_indices = @transform_0, window_bounds = array<i64: 8, 80>}, {pipeline_mode = #tpu.pipeline_mode<synchronous>, transform_indices = @transform_1, window_bounds = array<i64: 80, 128>}, {pipeline_mode = #tpu.pipeline_mode<synchronous>, transform_indices = @transform_2, window_bounds = array<i64: 1, 128>}, {transform_indices = @transform_3, window_bounds = array<i64: 8, 128>}]} {
    %c0 = arith.constant 0 : index
    %c0_0 = arith.constant 0 : index
    %0 = vector.load %arg1[%c0, %c0_0] : memref<8x80xf32, #tpu.memory_space<vmem>>, vector<8x80xf32>
    %c0_1 = arith.constant 0 : index
    %c0_2 = arith.constant 0 : index
    %1 = vector.load %arg2[%c0_1, %c0_2] : memref<80x128xf32, #tpu.memory_space<vmem>>, vector<80x128xf32>
    %cst = arith.constant dense<0.000000e+00> : vector<8x128xf32>
    %2 = tpu.matmul %0, %1, %cst {dimension_numbers = #tpu.dot_dimension_numbers<[1], [0], [0], [1], [0, 0, 1, 1], [], []>} : vector<8x80xf32>, vector<80x128xf32>, vector<8x128xf32> -> vector<8x128xf32>
    %c0_3 = arith.constant 0 : index
    %c0_4 = arith.constant 0 : index
    %3 = vector.load %arg3[%c0_3, %c0_4] : memref<1x128xf32, #tpu.memory_space<vmem>>, vector<1x128xf32>
    %4 = vector.broadcast %3 : vector<1x128xf32> to vector<8x128xf32>
    %5 = arith.addf %2, %4 : vector<8x128xf32>
    %cst_5 = arith.constant 0.000000e+00 : f32
    %6 = vector.broadcast %cst_5 : f32 to vector<8x128xf32>
    %7 = arith.cmpf ogt, %5, %6 : vector<8x128xf32>
    %cst_6 = arith.constant 2.000000e-01 : f32
    %8 = vector.broadcast %cst_6 : f32 to vector<8x128xf32>
    %9 = arith.mulf %8, %5 : vector<8x128xf32>
    %10 = arith.select %7, %5, %9 : vector<8x128xi1>, vector<8x128xf32>
    %c0_7 = arith.constant 0 : index
    %c0_8 = arith.constant 0 : index
    %11 = vector.load %arg4[%c0_7, %c0_8] : memref<8x128xf32, #tpu.memory_space<vmem>>, vector<8x128xf32>
    tpu.vector_store %arg4[%c0_7, %c0_8], %10 {strides = array<i32>} : memref<8x128xf32, #tpu.memory_space<vmem>>, vector<8x128xf32>,
    return
  }
  func.func @transform_0(%arg0: i32) -> (i32, i32) {
    %c0_i32 = arith.constant 0 : i32
    %c0_i32_0 = arith.constant 0 : i32
    return %arg0, %c0_i32 : i32, i32
  }
  func.func @transform_1(%arg0: i32) -> (i32, i32) {
    %c0_i32 = arith.constant 0 : i32
    %c0_i32_0 = arith.constant 0 : i32
    %c0_i32_1 = arith.constant 0 : i32
    return %c0_i32, %c0_i32_0 : i32, i32
  }
  func.func @transform_2(%arg0: i32) -> (i32, i32) {
    %c0_i32 = arith.constant 0 : i32
    %c0_i32_0 = arith.constant 0 : i32
    %c0_i32_1 = arith.constant 0 : i32
    return %c0_i32, %c0_i32_0 : i32, i32
  }
  func.func @transform_3(%arg0: i32) -> (i32, i32) {
    %c0_i32 = arith.constant 0 : i32
    %c0_i32_0 = arith.constant 0 : i32
    return %arg0, %c0_i32 : i32, i32
  }
}

module attributes {stable_mosaic.version = 11 : i64} {
  func.func @_mha_kernel(%arg0: i32, %arg1: memref<8x8x16xf32, #tpu.memory_space<vmem>>, %arg2: memref<8x1x16xf32, #tpu.memory_space<vmem>>, %arg3: memref<16x48xf32, #tpu.memory_space<vmem>>, %arg4: memref<1x48xf32, #tpu.memory_space<vmem>>, %arg5: memref<16x16xf32, #tpu.memory_space<vmem>>, %arg6: memref<1x16xf32, #tpu.memory_space<vmem>>, %arg7: memref<8x8x16xf32, #tpu.memory_space<vmem>>) attributes {dimension_semantics = [#tpu.dimension_semantics<parallel>], iteration_bounds = array<i64: 4>, scalar_prefetch = 0 : i64, scratch_operands = 0 : i64, tpu.core_type = #tpu.core_type<tc>, window_params = [{transform_indices = @transform_0, window_bounds = array<i64: 8, 8, 16>}, {transform_indices = @transform_1, window_bounds = array<i64: 8, 1, 16>}, {pipeline_mode = #tpu.pipeline_mode<synchronous>, transform_indices = @transform_2, window_bounds = array<i64: 16, 48>}, {pipeline_mode = #tpu.pipeline_mode<synchronous>, transform_indices = @transform_3, window_bounds = array<i64: 1, 48>}, {pipeline_mode = #tpu.pipeline_mode<synchronous>, transform_indices = @transform_4, window_bounds = array<i64: 16, 16>}, {pipeline_mode = #tpu.pipeline_mode<synchronous>, transform_indices = @transform_5, window_bounds = array<i64: 1, 16>}, {transform_indices = @transform_6, window_bounds = array<i64: 8, 8, 16>}]} {
    %c0 = arith.constant 0 : index
    %c0_0 = arith.constant 0 : index
    %c0_1 = arith.constant 0 : index
    %0 = vector.load %arg1[%c0, %c0_0, %c0_1] : memref<8x8x16xf32, #tpu.memory_space<vmem>>, vector<8x8x16xf32>
    %c0_2 = arith.constant 0 : index
    %c0_3 = arith.constant 0 : index
    %c0_4 = arith.constant 0 : index
    %1 = vector.load %arg2[%c0_2, %c0_3, %c0_4] : memref<8x1x16xf32, #tpu.memory_space<vmem>>, vector<8x1x16xf32>
    %2 = vector.broadcast %1 : vector<8x1x16xf32> to vector<8x8x16xf32>
    %3 = arith.mulf %0, %2 : vector<8x8x16xf32>
    %4 = vector.shape_cast %3 : vector<8x8x16xf32> to vector<64x16xf32>
    %c0_5 = arith.constant 0 : index
    %c0_6 = arith.constant 0 : index
    %5 = vector.load %arg3[%c0_5, %c0_6] : memref<16x48xf32, #tpu.memory_space<vmem>>, vector<16x48xf32>
    %cst = arith.constant dense<0.000000e+00> : vector<64x48xf32>
    %6 = tpu.matmul %4, %5, %cst {dimension_numbers = #tpu.dot_dimension_numbers<[1], [0], [0], [1], [0, 0, 1, 1], [], []>} : vector<64x16xf32>, vector<16x48xf32>, vector<64x48xf32> -> vector<64x48xf32>
    %c0_7 = arith.constant 0 : index
    %c0_8 = arith.constant 0 : index
    %7 = vector.load %arg4[%c0_7, %c0_8] : memref<1x48xf32, #tpu.memory_space<vmem>>, vector<1x48xf32>
    %8 = vector.broadcast %7 : vector<1x48xf32> to vector<64x48xf32>
    %9 = arith.addf %6, %8 : vector<64x48xf32>
    %10 = vector.shape_cast %9 : vector<64x48xf32> to vector<8x8x48xf32>
    %11 = vector.extract_strided_slice %10 {offsets = [0, 0, 0], sizes = [8, 8, 4], strides = [1, 1, 1]} : vector<8x8x48xf32> to vector<8x8x4xf32>
    %cst_9 = arith.constant 5.000000e-01 : f32
    %12 = vector.broadcast %cst_9 : f32 to vector<8x8x4xf32>
    %13 = arith.mulf %11, %12 : vector<8x8x4xf32>
    %14 = vector.extract_strided_slice %10 {offsets = [0, 0, 16], sizes = [8, 8, 4], strides = [1, 1, 1]} : vector<8x8x48xf32> to vector<8x8x4xf32>
    %15 = vector.extract_strided_slice %10 {offsets = [0, 0, 32], sizes = [8, 8, 4], strides = [1, 1, 1]} : vector<8x8x48xf32> to vector<8x8x4xf32>
    "tpu.trace_start"() <{level = 10 : i32, message = "tqd,tkd->tqk"}> : () -> ()
    %cst_10 = arith.constant dense<0.000000e+00> : vector<8x8x8xf32>
    %16 = tpu.matmul %13, %14, %cst_10 {dimension_numbers = #tpu.dot_dimension_numbers<[2], [2], [1], [1], [0, 0, 0, 1, 1, 1], [0], [0]>} : vector<8x8x4xf32>, vector<8x8x4xf32>, vector<8x8x8xf32> -> vector<8x8x8xf32>
    "tpu.trace_stop"() : () -> ()
    %cst_11 = arith.constant dense<0xFF800000> : vector<8x8xf32>
    %17 = vector.multi_reduction <maximumf>, %16, %cst_11 [2] : vector<8x8x8xf32> to vector<8x8xf32>
    %18 = vector.shape_cast %17 : vector<8x8xf32> to vector<8x8x1xf32>
    %19 = vector.broadcast %18 : vector<8x8x1xf32> to vector<8x8x8xf32>
    %20 = arith.subf %16, %19 : vector<8x8x8xf32>
    %21 = math.exp %20 : vector<8x8x8xf32>
    %cst_12 = arith.constant dense<0.000000e+00> : vector<8x8xf32>
    %22 = vector.multi_reduction <add>, %21, %cst_12 [2] : vector<8x8x8xf32> to vector<8x8xf32>
    %23 = vector.shape_cast %22 : vector<8x8xf32> to vector<8x8x1xf32>
    %24 = vector.broadcast %23 : vector<8x8x1xf32> to vector<8x8x8xf32>
    %25 = arith.divf %21, %24 : vector<8x8x8xf32>
    "tpu.trace_start"() <{level = 10 : i32, message = "tqk,tkd->tqd"}> : () -> ()
    %cst_13 = arith.constant dense<0.000000e+00> : vector<8x8x4xf32>
    %26 = tpu.matmul %25, %15, %cst_13 {dimension_numbers = #tpu.dot_dimension_numbers<[2], [1], [1], [2], [0, 0, 0, 1, 1, 2], [0], [0]>} : vector<8x8x8xf32>, vector<8x8x4xf32>, vector<8x8x4xf32> -> vector<8x8x4xf32>
    "tpu.trace_stop"() : () -> ()
    %27 = vector.extract_strided_slice %10 {offsets = [0, 0, 4], sizes = [8, 8, 4], strides = [1, 1, 1]} : vector<8x8x48xf32> to vector<8x8x4xf32>
    %cst_14 = arith.constant 5.000000e-01 : f32
    %28 = vector.broadcast %cst_14 : f32 to vector<8x8x4xf32>
    %29 = arith.mulf %27, %28 : vector<8x8x4xf32>
    %30 = vector.extract_strided_slice %10 {offsets = [0, 0, 20], sizes = [8, 8, 4], strides = [1, 1, 1]} : vector<8x8x48xf32> to vector<8x8x4xf32>
    %31 = vector.extract_strided_slice %10 {offsets = [0, 0, 36], sizes = [8, 8, 4], strides = [1, 1, 1]} : vector<8x8x48xf32> to vector<8x8x4xf32>
    "tpu.trace_start"() <{level = 10 : i32, message = "tqd,tkd->tqk"}> : () -> ()
    %cst_15 = arith.constant dense<0.000000e+00> : vector<8x8x8xf32>
    %32 = tpu.matmul %29, %30, %cst_15 {dimension_numbers = #tpu.dot_dimension_numbers<[2], [2], [1], [1], [0, 0, 0, 1, 1, 1], [0], [0]>} : vector<8x8x4xf32>, vector<8x8x4xf32>, vector<8x8x8xf32> -> vector<8x8x8xf32>
    "tpu.trace_stop"() : () -> ()
    %cst_16 = arith.constant dense<0xFF800000> : vector<8x8xf32>
    %33 = vector.multi_reduction <maximumf>, %32, %cst_16 [2] : vector<8x8x8xf32> to vector<8x8xf32>
    %34 = vector.shape_cast %33 : vector<8x8xf32> to vector<8x8x1xf32>
    %35 = vector.broadcast %34 : vector<8x8x1xf32> to vector<8x8x8xf32>
    %36 = arith.subf %32, %35 : vector<8x8x8xf32>
    %37 = math.exp %36 : vector<8x8x8xf32>
    %cst_17 = arith.constant dense<0.000000e+00> : vector<8x8xf32>
    %38 = vector.multi_reduction <add>, %37, %cst_17 [2] : vector<8x8x8xf32> to vector<8x8xf32>
    %39 = vector.shape_cast %38 : vector<8x8xf32> to vector<8x8x1xf32>
    %40 = vector.broadcast %39 : vector<8x8x1xf32> to vector<8x8x8xf32>
    %41 = arith.divf %37, %40 : vector<8x8x8xf32>
    "tpu.trace_start"() <{level = 10 : i32, message = "tqk,tkd->tqd"}> : () -> ()
    %cst_18 = arith.constant dense<0.000000e+00> : vector<8x8x4xf32>
    %42 = tpu.matmul %41, %31, %cst_18 {dimension_numbers = #tpu.dot_dimension_numbers<[2], [1], [1], [2], [0, 0, 0, 1, 1, 2], [0], [0]>} : vector<8x8x8xf32>, vector<8x8x4xf32>, vector<8x8x4xf32> -> vector<8x8x4xf32>
    "tpu.trace_stop"() : () -> ()
    %43 = vector.extract_strided_slice %10 {offsets = [0, 0, 8], sizes = [8, 8, 4], strides = [1, 1, 1]} : vector<8x8x48xf32> to vector<8x8x4xf32>
    %cst_19 = arith.constant 5.000000e-01 : f32
    %44 = vector.broadcast %cst_19 : f32 to vector<8x8x4xf32>
    %45 = arith.mulf %43, %44 : vector<8x8x4xf32>
    %46 = vector.extract_strided_slice %10 {offsets = [0, 0, 24], sizes = [8, 8, 4], strides = [1, 1, 1]} : vector<8x8x48xf32> to vector<8x8x4xf32>
    %47 = vector.extract_strided_slice %10 {offsets = [0, 0, 40], sizes = [8, 8, 4], strides = [1, 1, 1]} : vector<8x8x48xf32> to vector<8x8x4xf32>
    "tpu.trace_start"() <{level = 10 : i32, message = "tqd,tkd->tqk"}> : () -> ()
    %cst_20 = arith.constant dense<0.000000e+00> : vector<8x8x8xf32>
    %48 = tpu.matmul %45, %46, %cst_20 {dimension_numbers = #tpu.dot_dimension_numbers<[2], [2], [1], [1], [0, 0, 0, 1, 1, 1], [0], [0]>} : vector<8x8x4xf32>, vector<8x8x4xf32>, vector<8x8x8xf32> -> vector<8x8x8xf32>
    "tpu.trace_stop"() : () -> ()
    %cst_21 = arith.constant dense<0xFF800000> : vector<8x8xf32>
    %49 = vector.multi_reduction <maximumf>, %48, %cst_21 [2] : vector<8x8x8xf32> to vector<8x8xf32>
    %50 = vector.shape_cast %49 : vector<8x8xf32> to vector<8x8x1xf32>
    %51 = vector.broadcast %50 : vector<8x8x1xf32> to vector<8x8x8xf32>
    %52 = arith.subf %48, %51 : vector<8x8x8xf32>
    %53 = math.exp %52 : vector<8x8x8xf32>
    %cst_22 = arith.constant dense<0.000000e+00> : vector<8x8xf32>
    %54 = vector.multi_reduction <add>, %53, %cst_22 [2] : vector<8x8x8xf32> to vector<8x8xf32>
    %55 = vector.shape_cast %54 : vector<8x8xf32> to vector<8x8x1xf32>
    %56 = vector.broadcast %55 : vector<8x8x1xf32> to vector<8x8x8xf32>
    %57 = arith.divf %53, %56 : vector<8x8x8xf32>
    "tpu.trace_start"() <{level = 10 : i32, message = "tqk,tkd->tqd"}> : () -> ()
    %cst_23 = arith.constant dense<0.000000e+00> : vector<8x8x4xf32>
    %58 = tpu.matmul %57, %47, %cst_23 {dimension_numbers = #tpu.dot_dimension_numbers<[2], [1], [1], [2], [0, 0, 0, 1, 1, 2], [0], [0]>} : vector<8x8x8xf32>, vector<8x8x4xf32>, vector<8x8x4xf32> -> vector<8x8x4xf32>
    "tpu.trace_stop"() : () -> ()
    %59 = vector.extract_strided_slice %10 {offsets = [0, 0, 12], sizes = [8, 8, 4], strides = [1, 1, 1]} : vector<8x8x48xf32> to vector<8x8x4xf32>
    %cst_24 = arith.constant 5.000000e-01 : f32
    %60 = vector.broadcast %cst_24 : f32 to vector<8x8x4xf32>
    %61 = arith.mulf %59, %60 : vector<8x8x4xf32>
    %62 = vector.extract_strided_slice %10 {offsets = [0, 0, 28], sizes = [8, 8, 4], strides = [1, 1, 1]} : vector<8x8x48xf32> to vector<8x8x4xf32>
    %63 = vector.extract_strided_slice %10 {offsets = [0, 0, 44], sizes = [8, 8, 4], strides = [1, 1, 1]} : vector<8x8x48xf32> to vector<8x8x4xf32>
    "tpu.trace_start"() <{level = 10 : i32, message = "tqd,tkd->tqk"}> : () -> ()
    %cst_25 = arith.constant dense<0.000000e+00> : vector<8x8x8xf32>
    %64 = tpu.matmul %61, %62, %cst_25 {dimension_numbers = #tpu.dot_dimension_numbers<[2], [2], [1], [1], [0, 0, 0, 1, 1, 1], [0], [0]>} : vector<8x8x4xf32>, vector<8x8x4xf32>, vector<8x8x8xf32> -> vector<8x8x8xf32>
    "tpu.trace_stop"() : () -> ()
    %cst_26 = arith.constant dense<0xFF800000> : vector<8x8xf32>
    %65 = vector.multi_reduction <maximumf>, %64, %cst_26 [2] : vector<8x8x8xf32> to vector<8x8xf32>
    %66 = vector.shape_cast %65 : vector<8x8xf32> to vector<8x8x1xf32>
    %67 = vector.broadcast %66 : vector<8x8x1xf32> to vector<8x8x8xf32>
    %68 = arith.subf %64, %67 : vector<8x8x8xf32>
    %69 = math.exp %68 : vector<8x8x8xf32>
    %cst_27 = arith.constant dense<0.000000e+00> : vector<8x8xf32>
    %70 = vector.multi_reduction <add>, %69, %cst_27 [2] : vector<8x8x8xf32> to vector<8x8xf32>
    %71 = vector.shape_cast %70 : vector<8x8xf32> to vector<8x8x1xf32>
    %72 = vector.broadcast %71 : vector<8x8x1xf32> to vector<8x8x8xf32>
    %73 = arith.divf %69, %72 : vector<8x8x8xf32>
    "tpu.trace_start"() <{level = 10 : i32, message = "tqk,tkd->tqd"}> : () -> ()
    %cst_28 = arith.constant dense<0.000000e+00> : vector<8x8x4xf32>
    %74 = tpu.matmul %73, %63, %cst_28 {dimension_numbers = #tpu.dot_dimension_numbers<[2], [1], [1], [2], [0, 0, 0, 1, 1, 2], [0], [0]>} : vector<8x8x8xf32>, vector<8x8x4xf32>, vector<8x8x4xf32> -> vector<8x8x4xf32>
    "tpu.trace_stop"() : () -> ()
    %75 = tpu.concatenate %26, %42, %58, %74 in 2 : vector<8x8x4xf32>, vector<8x8x4xf32>, vector<8x8x4xf32>, vector<8x8x4xf32> -> vector<8x8x16xf32>
    %76 = vector.shape_cast %75 : vector<8x8x16xf32> to vector<64x16xf32>
    %c0_29 = arith.constant 0 : index
    %c0_30 = arith.constant 0 : index
    %77 = vector.load %arg5[%c0_29, %c0_30] : memref<16x16xf32, #tpu.memory_space<vmem>>, vector<16x16xf32>
    %cst_31 = arith.constant dense<0.000000e+00> : vector<64x16xf32>
    %78 = tpu.matmul %76, %77, %cst_31 {dimension_numbers = #tpu.dot_dimension_numbers<[1], [0], [0], [1], [0, 0, 1, 1], [], []>} : vector<64x16xf32>, vector<16x16xf32>, vector<64x16xf32> -> vector<64x16xf32>
    %c0_32 = arith.constant 0 : index
    %c0_33 = arith.constant 0 : index
    %79 = vector.load %arg6[%c0_32, %c0_33] : memref<1x16xf32, #tpu.memory_space<vmem>>, vector<1x16xf32>
    %80 = vector.broadcast %79 : vector<1x16xf32> to vector<64x16xf32>
    %81 = arith.addf %78, %80 : vector<64x16xf32>
    %82 = vector.shape_cast %81 : vector<64x16xf32> to vector<8x8x16xf32>
    %c0_34 = arith.constant 0 : index
    %c0_35 = arith.constant 0 : index
    %c0_36 = arith.constant 0 : index
    %83 = vector.load %arg7[%c0_34, %c0_35, %c0_36] : memref<8x8x16xf32, #tpu.memory_space<vmem>>, vector<8x8x16xf32>
    tpu.vector_store %arg7[%c0_34, %c0_35, %c0_36], %82 {strides = array<i32>} : memref<8x8x16xf32, #tpu.memory_space<vmem>>, vector<8x8x16xf32>,
    return
  }
  func.func @transform_0(%arg0: i32) -> (i32, i32, i32) {
    %c0_i32 = arith.constant 0 : i32
    %c0_i32_0 = arith.constant 0 : i32
    %c0_i32_1 = arith.constant 0 : i32
    return %arg0, %c0_i32, %c0_i32_0 : i32, i32, i32
  }
  func.func @transform_1(%arg0: i32) -> (i32, i32, i32) {
    %c0_i32 = arith.constant 0 : i32
    %c0_i32_0 = arith.constant 0 : i32
    %c0_i32_1 = arith.constant 0 : i32
    return %arg0, %c0_i32, %c0_i32_0 : i32, i32, i32
  }
  func.func @transform_2(%arg0: i32) -> (i32, i32) {
    %c0_i32 = arith.constant 0 : i32
    %c0_i32_0 = arith.constant 0 : i32
    %c0_i32_1 = arith.constant 0 : i32
    return %c0_i32, %c0_i32_0 : i32, i32
  }
  func.func @transform_3(%arg0: i32) -> (i32, i32) {
    %c0_i32 = arith.constant 0 : i32
    %c0_i32_0 = arith.constant 0 : i32
    %c0_i32_1 = arith.constant 0 : i32
    return %c0_i32, %c0_i32_0 : i32, i32
  }
  func.func @transform_4(%arg0: i32) -> (i32, i32) {
    %c0_i32 = arith.constant 0 : i32
    %c0_i32_0 = arith.constant 0 : i32
    %c0_i32_1 = arith.constant 0 : i32
    return %c0_i32, %c0_i32_0 : i32, i32
  }
  func.func @transform_5(%arg0: i32) -> (i32, i32) {
    %c0_i32 = arith.constant 0 : i32
    %c0_i32_0 = arith.constant 0 : i32
    %c0_i32_1 = arith.constant 0 : i32
    return %c0_i32, %c0_i32_0 : i32, i32
  }
  func.func @transform_6(%arg0: i32) -> (i32, i32, i32) {
    %c0_i32 = arith.constant 0 : i32
    %c0_i32_0 = arith.constant 0 : i32
    %c0_i32_1 = arith.constant 0 : i32
    return %arg0, %c0_i32, %c0_i32_0 : i32, i32, i32
  }
}

module attributes {stable_mosaic.version = 11 : i64} {
  func.func @_attpool_kernel(%arg0: i32, %arg1: memref<8x8x16xf32, #tpu.memory_space<vmem>>, %arg2: memref<8x8x16xf32, #tpu.memory_space<vmem>>, %arg3: memref<8x8x16xf32, #tpu.memory_space<vmem>>, %arg4: memref<8x1x16xf32, #tpu.memory_space<vmem>>, %arg5: memref<48x48xf32, #tpu.memory_space<vmem>>, %arg6: memref<8x48xf32, #tpu.memory_space<vmem>>) attributes {dimension_semantics = [#tpu.dimension_semantics<parallel>], iteration_bounds = array<i64: 4>, scalar_prefetch = 0 : i64, scratch_operands = 0 : i64, tpu.core_type = #tpu.core_type<tc>, window_params = [{transform_indices = @transform_0, window_bounds = array<i64: 8, 8, 16>}, {transform_indices = @transform_1, window_bounds = array<i64: 8, 8, 16>}, {transform_indices = @transform_2, window_bounds = array<i64: 8, 8, 16>}, {transform_indices = @transform_3, window_bounds = array<i64: 8, 1, 16>}, {pipeline_mode = #tpu.pipeline_mode<synchronous>, transform_indices = @transform_4, window_bounds = array<i64: 48, 48>}, {transform_indices = @transform_5, window_bounds = array<i64: 8, 48>}]} {
    %c0 = arith.constant 0 : index
    %c0_0 = arith.constant 0 : index
    %c0_1 = arith.constant 0 : index
    %0 = vector.load %arg1[%c0, %c0_0, %c0_1] : memref<8x8x16xf32, #tpu.memory_space<vmem>>, vector<8x8x16xf32>
    %c0_2 = arith.constant 0 : index
    %c0_3 = arith.constant 0 : index
    %c0_4 = arith.constant 0 : index
    %1 = vector.load %arg4[%c0_2, %c0_3, %c0_4] : memref<8x1x16xf32, #tpu.memory_space<vmem>>, vector<8x1x16xf32>
    %2 = vector.broadcast %1 : vector<8x1x16xf32> to vector<8x8x16xf32>
    %3 = arith.mulf %0, %2 : vector<8x8x16xf32>
    %c0_5 = arith.constant 0 : index
    %c0_6 = arith.constant 0 : index
    %c0_7 = arith.constant 0 : index
    %4 = vector.load %arg2[%c0_5, %c0_6, %c0_7] : memref<8x8x16xf32, #tpu.memory_space<vmem>>, vector<8x8x16xf32>
    %c0_8 = arith.constant 0 : index
    %c0_9 = arith.constant 0 : index
    %c0_10 = arith.constant 0 : index
    %5 = vector.load %arg3[%c0_8, %c0_9, %c0_10] : memref<8x8x16xf32, #tpu.memory_space<vmem>>, vector<8x8x16xf32>
    %6 = tpu.concatenate %3, %4, %5 in 2 : vector<8x8x16xf32>, vector<8x8x16xf32>, vector<8x8x16xf32> -> vector<8x8x48xf32>
    %7 = vector.shape_cast %6 : vector<8x8x48xf32> to vector<64x48xf32>
    %c0_11 = arith.constant 0 : index
    %c0_12 = arith.constant 0 : index
    %8 = vector.load %arg5[%c0_11, %c0_12] : memref<48x48xf32, #tpu.memory_space<vmem>>, vector<48x48xf32>
    %cst = arith.constant dense<0.000000e+00> : vector<64x48xf32>
    %9 = tpu.matmul %7, %8, %cst {dimension_numbers = #tpu.dot_dimension_numbers<[1], [0], [0], [1], [0, 0, 1, 1], [], []>} : vector<64x48xf32>, vector<48x48xf32>, vector<64x48xf32> -> vector<64x48xf32>
    %10 = vector.shape_cast %9 : vector<64x48xf32> to vector<8x8x48xf32>
    %cst_13 = arith.constant dense<0xFF800000> : vector<8x48xf32>
    %11 = vector.multi_reduction <maximumf>, %10, %cst_13 [1] : vector<8x8x48xf32> to vector<8x48xf32>
    %12 = vector.shape_cast %11 : vector<8x48xf32> to vector<8x1x48xf32>
    %13 = vector.broadcast %12 : vector<8x1x48xf32> to vector<8x8x48xf32>
    %14 = arith.subf %10, %13 : vector<8x8x48xf32>
    %15 = math.exp %14 : vector<8x8x48xf32>
    %cst_14 = arith.constant dense<0.000000e+00> : vector<8x48xf32>
    %16 = vector.multi_reduction <add>, %15, %cst_14 [1] : vector<8x8x48xf32> to vector<8x48xf32>
    %17 = vector.shape_cast %16 : vector<8x48xf32> to vector<8x1x48xf32>
    %18 = vector.broadcast %17 : vector<8x1x48xf32> to vector<8x8x48xf32>
    %19 = arith.divf %15, %18 : vector<8x8x48xf32>
    %20 = arith.mulf %6, %19 : vector<8x8x48xf32>
    %cst_15 = arith.constant dense<0.000000e+00> : vector<8x48xf32>
    %21 = vector.multi_reduction <add>, %20, %cst_15 [1] : vector<8x8x48xf32> to vector<8x48xf32>
    %c0_16 = arith.constant 0 : index
    %c0_17 = arith.constant 0 : index
    %22 = vector.load %arg6[%c0_16, %c0_17] : memref<8x48xf32, #tpu.memory_space<vmem>>, vector<8x48xf32>
    tpu.vector_store %arg6[%c0_16, %c0_17], %21 {strides = array<i32>} : memref<8x48xf32, #tpu.memory_space<vmem>>, vector<8x48xf32>,
    return
  }
  func.func @transform_0(%arg0: i32) -> (i32, i32, i32) {
    %c0_i32 = arith.constant 0 : i32
    %c0_i32_0 = arith.constant 0 : i32
    %c0_i32_1 = arith.constant 0 : i32
    return %arg0, %c0_i32, %c0_i32_0 : i32, i32, i32
  }
  func.func @transform_1(%arg0: i32) -> (i32, i32, i32) {
    %c0_i32 = arith.constant 0 : i32
    %c0_i32_0 = arith.constant 0 : i32
    %c0_i32_1 = arith.constant 0 : i32
    return %arg0, %c0_i32, %c0_i32_0 : i32, i32, i32
  }
  func.func @transform_2(%arg0: i32) -> (i32, i32, i32) {
    %c0_i32 = arith.constant 0 : i32
    %c0_i32_0 = arith.constant 0 : i32
    %c0_i32_1 = arith.constant 0 : i32
    return %arg0, %c0_i32, %c0_i32_0 : i32, i32, i32
  }
  func.func @transform_3(%arg0: i32) -> (i32, i32, i32) {
    %c0_i32 = arith.constant 0 : i32
    %c0_i32_0 = arith.constant 0 : i32
    %c0_i32_1 = arith.constant 0 : i32
    return %arg0, %c0_i32, %c0_i32_0 : i32, i32, i32
  }
  func.func @transform_4(%arg0: i32) -> (i32, i32) {
    %c0_i32 = arith.constant 0 : i32
    %c0_i32_0 = arith.constant 0 : i32
    %c0_i32_1 = arith.constant 0 : i32
    return %c0_i32, %c0_i32_0 : i32, i32
  }
  func.func @transform_5(%arg0: i32) -> (i32, i32) {
    %c0_i32 = arith.constant 0 : i32
    %c0_i32_0 = arith.constant 0 : i32
    return %arg0, %c0_i32 : i32, i32
  }
}

module attributes {stable_mosaic.version = 11 : i64} {
  func.func @_linear_act_kernel(%arg0: i32, %arg1: memref<8x48xf32, #tpu.memory_space<vmem>>, %arg2: memref<48x16xf32, #tpu.memory_space<vmem>>, %arg3: memref<1x16xf32, #tpu.memory_space<vmem>>, %arg4: memref<8x16xf32, #tpu.memory_space<vmem>>) attributes {dimension_semantics = [#tpu.dimension_semantics<parallel>], iteration_bounds = array<i64: 4>, scalar_prefetch = 0 : i64, scratch_operands = 0 : i64, tpu.core_type = #tpu.core_type<tc>, window_params = [{transform_indices = @transform_0, window_bounds = array<i64: 8, 48>}, {pipeline_mode = #tpu.pipeline_mode<synchronous>, transform_indices = @transform_1, window_bounds = array<i64: 48, 16>}, {pipeline_mode = #tpu.pipeline_mode<synchronous>, transform_indices = @transform_2, window_bounds = array<i64: 1, 16>}, {transform_indices = @transform_3, window_bounds = array<i64: 8, 16>}]} {
    %c0 = arith.constant 0 : index
    %c0_0 = arith.constant 0 : index
    %0 = vector.load %arg1[%c0, %c0_0] : memref<8x48xf32, #tpu.memory_space<vmem>>, vector<8x48xf32>
    %c0_1 = arith.constant 0 : index
    %c0_2 = arith.constant 0 : index
    %1 = vector.load %arg2[%c0_1, %c0_2] : memref<48x16xf32, #tpu.memory_space<vmem>>, vector<48x16xf32>
    %cst = arith.constant dense<0.000000e+00> : vector<8x16xf32>
    %2 = tpu.matmul %0, %1, %cst {dimension_numbers = #tpu.dot_dimension_numbers<[1], [0], [0], [1], [0, 0, 1, 1], [], []>} : vector<8x48xf32>, vector<48x16xf32>, vector<8x16xf32> -> vector<8x16xf32>
    %c0_3 = arith.constant 0 : index
    %c0_4 = arith.constant 0 : index
    %3 = vector.load %arg3[%c0_3, %c0_4] : memref<1x16xf32, #tpu.memory_space<vmem>>, vector<1x16xf32>
    %4 = vector.broadcast %3 : vector<1x16xf32> to vector<8x16xf32>
    %5 = arith.addf %2, %4 : vector<8x16xf32>
    %cst_5 = arith.constant 0.000000e+00 : f32
    %6 = vector.broadcast %cst_5 : f32 to vector<8x16xf32>
    %7 = arith.cmpf ogt, %5, %6 : vector<8x16xf32>
    %cst_6 = arith.constant 2.000000e-01 : f32
    %8 = vector.broadcast %cst_6 : f32 to vector<8x16xf32>
    %9 = arith.mulf %8, %5 : vector<8x16xf32>
    %10 = arith.select %7, %5, %9 : vector<8x16xi1>, vector<8x16xf32>
    %c0_7 = arith.constant 0 : index
    %c0_8 = arith.constant 0 : index
    %11 = vector.load %arg4[%c0_7, %c0_8] : memref<8x16xf32, #tpu.memory_space<vmem>>, vector<8x16xf32>
    tpu.vector_store %arg4[%c0_7, %c0_8], %10 {strides = array<i32>} : memref<8x16xf32, #tpu.memory_space<vmem>>, vector<8x16xf32>,
    return
  }
  func.func @transform_0(%arg0: i32) -> (i32, i32) {
    %c0_i32 = arith.constant 0 : i32
    %c0_i32_0 = arith.constant 0 : i32
    return %arg0, %c0_i32 : i32, i32
  }
  func.func @transform_1(%arg0: i32) -> (i32, i32) {
    %c0_i32 = arith.constant 0 : i32
    %c0_i32_0 = arith.constant 0 : i32
    %c0_i32_1 = arith.constant 0 : i32
    return %c0_i32, %c0_i32_0 : i32, i32
  }
  func.func @transform_2(%arg0: i32) -> (i32, i32) {
    %c0_i32 = arith.constant 0 : i32
    %c0_i32_0 = arith.constant 0 : i32
    %c0_i32_1 = arith.constant 0 : i32
    return %c0_i32, %c0_i32_0 : i32, i32
  }
  func.func @transform_3(%arg0: i32) -> (i32, i32) {
    %c0_i32 = arith.constant 0 : i32
    %c0_i32_0 = arith.constant 0 : i32
    return %arg0, %c0_i32 : i32, i32
  }
}

module attributes {stable_mosaic.version = 11 : i64} {
  func.func @_linear_act_kernel(%arg0: i32, %arg1: memref<8x128xf32, #tpu.memory_space<vmem>>, %arg2: memref<128x128xf32, #tpu.memory_space<vmem>>, %arg3: memref<1x128xf32, #tpu.memory_space<vmem>>, %arg4: memref<8x128xf32, #tpu.memory_space<vmem>>) attributes {dimension_semantics = [#tpu.dimension_semantics<parallel>], iteration_bounds = array<i64: 4>, scalar_prefetch = 0 : i64, scratch_operands = 0 : i64, tpu.core_type = #tpu.core_type<tc>, window_params = [{transform_indices = @transform_0, window_bounds = array<i64: 8, 128>}, {pipeline_mode = #tpu.pipeline_mode<synchronous>, transform_indices = @transform_1, window_bounds = array<i64: 128, 128>}, {pipeline_mode = #tpu.pipeline_mode<synchronous>, transform_indices = @transform_2, window_bounds = array<i64: 1, 128>}, {transform_indices = @transform_3, window_bounds = array<i64: 8, 128>}]} {
    %c0 = arith.constant 0 : index
    %c0_0 = arith.constant 0 : index
    %0 = vector.load %arg1[%c0, %c0_0] : memref<8x128xf32, #tpu.memory_space<vmem>>, vector<8x128xf32>
    %c0_1 = arith.constant 0 : index
    %c0_2 = arith.constant 0 : index
    %1 = vector.load %arg2[%c0_1, %c0_2] : memref<128x128xf32, #tpu.memory_space<vmem>>, vector<128x128xf32>
    %cst = arith.constant dense<0.000000e+00> : vector<8x128xf32>
    %2 = tpu.matmul %0, %1, %cst {dimension_numbers = #tpu.dot_dimension_numbers<[1], [0], [0], [1], [0, 0, 1, 1], [], []>} : vector<8x128xf32>, vector<128x128xf32>, vector<8x128xf32> -> vector<8x128xf32>
    %c0_3 = arith.constant 0 : index
    %c0_4 = arith.constant 0 : index
    %3 = vector.load %arg3[%c0_3, %c0_4] : memref<1x128xf32, #tpu.memory_space<vmem>>, vector<1x128xf32>
    %4 = vector.broadcast %3 : vector<1x128xf32> to vector<8x128xf32>
    %5 = arith.addf %2, %4 : vector<8x128xf32>
    %cst_5 = arith.constant 0.000000e+00 : f32
    %6 = vector.broadcast %cst_5 : f32 to vector<8x128xf32>
    %7 = arith.cmpf ogt, %5, %6 : vector<8x128xf32>
    %cst_6 = arith.constant 2.000000e-01 : f32
    %8 = vector.broadcast %cst_6 : f32 to vector<8x128xf32>
    %9 = arith.mulf %8, %5 : vector<8x128xf32>
    %10 = arith.select %7, %5, %9 : vector<8x128xi1>, vector<8x128xf32>
    %c0_7 = arith.constant 0 : index
    %c0_8 = arith.constant 0 : index
    %11 = vector.load %arg4[%c0_7, %c0_8] : memref<8x128xf32, #tpu.memory_space<vmem>>, vector<8x128xf32>
    tpu.vector_store %arg4[%c0_7, %c0_8], %10 {strides = array<i32>} : memref<8x128xf32, #tpu.memory_space<vmem>>, vector<8x128xf32>,
    return
  }
  func.func @transform_0(%arg0: i32) -> (i32, i32) {
    %c0_i32 = arith.constant 0 : i32
    %c0_i32_0 = arith.constant 0 : i32
    return %arg0, %c0_i32 : i32, i32
  }
  func.func @transform_1(%arg0: i32) -> (i32, i32) {
    %c0_i32 = arith.constant 0 : i32
    %c0_i32_0 = arith.constant 0 : i32
    %c0_i32_1 = arith.constant 0 : i32
    return %c0_i32, %c0_i32_0 : i32, i32
  }
  func.func @transform_2(%arg0: i32) -> (i32, i32) {
    %c0_i32 = arith.constant 0 : i32
    %c0_i32_0 = arith.constant 0 : i32
    %c0_i32_1 = arith.constant 0 : i32
    return %c0_i32, %c0_i32_0 : i32, i32
  }
  func.func @transform_3(%arg0: i32) -> (i32, i32) {
    %c0_i32 = arith.constant 0 : i32
    %c0_i32_0 = arith.constant 0 : i32
    return %arg0, %c0_i32 : i32, i32
  }
}

module attributes {stable_mosaic.version = 11 : i64} {
  func.func @_linear_act_kernel(%arg0: i32, %arg1: memref<8x48xf32, #tpu.memory_space<vmem>>, %arg2: memref<48x32xf32, #tpu.memory_space<vmem>>, %arg3: memref<1x32xf32, #tpu.memory_space<vmem>>, %arg4: memref<8x32xf32, #tpu.memory_space<vmem>>) attributes {dimension_semantics = [#tpu.dimension_semantics<parallel>], iteration_bounds = array<i64: 4>, scalar_prefetch = 0 : i64, scratch_operands = 0 : i64, tpu.core_type = #tpu.core_type<tc>, window_params = [{transform_indices = @transform_0, window_bounds = array<i64: 8, 48>}, {pipeline_mode = #tpu.pipeline_mode<synchronous>, transform_indices = @transform_1, window_bounds = array<i64: 48, 32>}, {pipeline_mode = #tpu.pipeline_mode<synchronous>, transform_indices = @transform_2, window_bounds = array<i64: 1, 32>}, {transform_indices = @transform_3, window_bounds = array<i64: 8, 32>}]} {
    %c0 = arith.constant 0 : index
    %c0_0 = arith.constant 0 : index
    %0 = vector.load %arg1[%c0, %c0_0] : memref<8x48xf32, #tpu.memory_space<vmem>>, vector<8x48xf32>
    %c0_1 = arith.constant 0 : index
    %c0_2 = arith.constant 0 : index
    %1 = vector.load %arg2[%c0_1, %c0_2] : memref<48x32xf32, #tpu.memory_space<vmem>>, vector<48x32xf32>
    %cst = arith.constant dense<0.000000e+00> : vector<8x32xf32>
    %2 = tpu.matmul %0, %1, %cst {dimension_numbers = #tpu.dot_dimension_numbers<[1], [0], [0], [1], [0, 0, 1, 1], [], []>} : vector<8x48xf32>, vector<48x32xf32>, vector<8x32xf32> -> vector<8x32xf32>
    %c0_3 = arith.constant 0 : index
    %c0_4 = arith.constant 0 : index
    %3 = vector.load %arg3[%c0_3, %c0_4] : memref<1x32xf32, #tpu.memory_space<vmem>>, vector<1x32xf32>
    %4 = vector.broadcast %3 : vector<1x32xf32> to vector<8x32xf32>
    %5 = arith.addf %2, %4 : vector<8x32xf32>
    %cst_5 = arith.constant 0.000000e+00 : f32
    %6 = vector.broadcast %cst_5 : f32 to vector<8x32xf32>
    %7 = arith.cmpf ogt, %5, %6 : vector<8x32xf32>
    %cst_6 = arith.constant 2.000000e-01 : f32
    %8 = vector.broadcast %cst_6 : f32 to vector<8x32xf32>
    %9 = arith.mulf %8, %5 : vector<8x32xf32>
    %10 = arith.select %7, %5, %9 : vector<8x32xi1>, vector<8x32xf32>
    %c0_7 = arith.constant 0 : index
    %c0_8 = arith.constant 0 : index
    %11 = vector.load %arg4[%c0_7, %c0_8] : memref<8x32xf32, #tpu.memory_space<vmem>>, vector<8x32xf32>
    tpu.vector_store %arg4[%c0_7, %c0_8], %10 {strides = array<i32>} : memref<8x32xf32, #tpu.memory_space<vmem>>, vector<8x32xf32>,
    return
  }
  func.func @transform_0(%arg0: i32) -> (i32, i32) {
    %c0_i32 = arith.constant 0 : i32
    %c0_i32_0 = arith.constant 0 : i32
    return %arg0, %c0_i32 : i32, i32
  }
  func.func @transform_1(%arg0: i32) -> (i32, i32) {
    %c0_i32 = arith.constant 0 : i32
    %c0_i32_0 = arith.constant 0 : i32
    %c0_i32_1 = arith.constant 0 : i32
    return %c0_i32, %c0_i32_0 : i32, i32
  }
  func.func @transform_2(%arg0: i32) -> (i32, i32) {
    %c0_i32 = arith.constant 0 : i32
    %c0_i32_0 = arith.constant 0 : i32
    %c0_i32_1 = arith.constant 0 : i32
    return %c0_i32, %c0_i32_0 : i32, i32
  }
  func.func @transform_3(%arg0: i32) -> (i32, i32) {
    %c0_i32 = arith.constant 0 : i32
    %c0_i32_0 = arith.constant 0 : i32
    return %arg0, %c0_i32 : i32, i32
  }
}

</mosaic_0001>

<llo_original>
// kernel: building_block_forward.8
$region0: #{building_block_forward.8}
  #allocation0 [shape = 'u32[]', space=smem, size = 0x4, offset = 0x4, fixed_abs, tag = 'smem constant byte address 0x4 - core index']
  #allocation1 [shape = 'u32[72,128]{1,0:T(1,128)}', space=vmem, size = 0x9000, scoped, tag = 'internal scratch']
  %s0 = inlined_call_operand.vmem [shape: f32[32,80], index: 0, kind: input, shape index: {}]
  %s1 = inlined_call_operand.vmem [shape: f32[80,128], index: 1, kind: input, shape index: {}]
  %s2 = inlined_call_operand.vmem [shape: f32[1,128], index: 2, kind: input, shape index: {}]
  %s3 = inlined_call_operand.vmem [shape: f32[32,128], index: 3, kind: output, shape index: {}]
  %s4 = sld [smem:[#allocation0]]
  $region45: #{building_block_forward.8} parent=0
    _
  %s6 = ssub.s32 1, %s4
  %s7 = scalar_select 0, %s6, %s4
  loop: start=0, step=1, limit=6
  $region2: #{building_block_forward.8} parent=0 // loop_pre_header
    _
  $region3: #{building_block_forward.8} parent=0 // loop_header
    %s9 = sphi 0, %s13
    %p10 = scmp.ge.s32.totalorder %s9, 6
    %s19 = sphi 0, %s21
    %s22 = sphi 0, %s19
    %s23 = sphi 0, %s22
    %s39 = sphi 0, %s23
    %s43 = sphi 0, %s43
    %s45 = sphi 0, %s43
    %s46 = sphi 0, %s45
    %s60 = sphi 0, %s46
    %s64 = sphi 0, %s64
    %s66 = sphi 0, %s64
    %s67 = sphi 0, %s66
    %s81 = sphi 0, %s67
    %s87 = sphi 0, %s89
    %s90 = sphi 0, %s87
    %s91 = sphi 0, %s90
    %s107 = sphi 0, %s91
  $region4: #{building_block_forward.8} parent=0 // loop_header_branch
    %12 = sbr.rel (%p10) target = $region8
  $region5: #{building_block_forward.8} parent=0 // loop_body
    %s14 = ssub.s32 %s9, 1
    %s15 = ssub.s32 %s9, 2
    %s16 = sadd.s32 %s9, 1
    %s17 = ssub.s32 %s9, %s16
    %p18 = scmp.eq.s32.totalorder %s17, 0
    %s20 = sadd.s32 %s19, 1
    %s21 = scalar_select %p18, %s19, %s20
    %p24 = pneg %p18
    %p25 = scmp.eq.s32.totalorder %s9, 3
    %p26 = por %p24, %p25
    %p27 = scmp.ne.s32.totalorder %s19, %s22
    %p28 = scmp.eq.s32.totalorder %s9, 0
    %p29 = por %p27, %p28
    %p30 = scmp.ne.s32.totalorder %s19, %s22
    %p31 = scmp.eq.s32.totalorder %s14, 3
    %p32 = por %p30, %p31
    %p33 = scmp.ne.s32.totalorder %s22, %s23
    %p34 = scmp.eq.s32.totalorder %s14, 0
    %p35 = por %p33, %p34
    %p36 = scmp.ne.s32.totalorder %s22, %s23
    %p37 = scmp.eq.s32.totalorder %s15, 3
    %p38 = por %p36, %p37
    %p40 = scmp.ne.s32.totalorder %s23, %s39
    %p41 = scmp.eq.s32.totalorder %s15, 0
    %p42 = por %p40, %p41
    %s44 = sadd.s32 %s43, 1
    %p47 = scmp.eq.s32.totalorder %s9, 3
    %p48 = scmp.ne.s32.totalorder %s43, %s45
    %p49 = scmp.eq.s32.totalorder %s9, 0
    %p50 = por %p48, %p49
    %p51 = scmp.ne.s32.totalorder %s43, %s45
    %p52 = scmp.eq.s32.totalorder %s14, 3
    %p53 = por %p51, %p52
    %p54 = scmp.ne.s32.totalorder %s45, %s46
    %p55 = scmp.eq.s32.totalorder %s14, 0
    %p56 = por %p54, %p55
    %p57 = scmp.ne.s32.totalorder %s45, %s46
    %p58 = scmp.eq.s32.totalorder %s15, 3
    %p59 = por %p57, %p58
    %p61 = scmp.ne.s32.totalorder %s46, %s60
    %p62 = scmp.eq.s32.totalorder %s15, 0
    %p63 = por %p61, %p62
    %s65 = sadd.s32 %s64, 1
    %p68 = scmp.eq.s32.totalorder %s9, 3
    %p69 = scmp.ne.s32.totalorder %s64, %s66
    %p70 = scmp.eq.s32.totalorder %s9, 0
    %p71 = por %p69, %p70
    %p72 = scmp.ne.s32.totalorder %s64, %s66
    %p73 = scmp.eq.s32.totalorder %s14, 3
    %p74 = por %p72, %p73
    %p75 = scmp.ne.s32.totalorder %s66, %s67
    %p76 = scmp.eq.s32.totalorder %s14, 0
    %p77 = por %p75, %p76
    %p78 = scmp.ne.s32.totalorder %s66, %s67
    %p79 = scmp.eq.s32.totalorder %s15, 3
    %p80 = por %p78, %p79
    %p82 = scmp.ne.s32.totalorder %s67, %s81
    %p83 = scmp.eq.s32.totalorder %s15, 0
    %p84 = por %p82, %p83
    %s85 = ssub.s32 %s9, %s16
    %p86 = scmp.eq.s32.totalorder %s85, 0
    %s88 = sadd.s32 %s87, 1
    %s89 = scalar_select %p86, %s87, %s88
    %p92 = pneg %p86
    %p93 = scmp.eq.s32.totalorder %s9, 3
    %p94 = por %p92, %p93
    %p95 = scmp.ne.s32.totalorder %s87, %s90
    %p96 = scmp.eq.s32.totalorder %s9, 0
    %p97 = por %p95, %p96
    %p98 = scmp.ne.s32.totalorder %s87, %s90
    %p99 = scmp.eq.s32.totalorder %s14, 3
    %p100 = por %p98, %p99
    %p101 = scmp.ne.s32.totalorder %s90, %s91
    %p102 = scmp.eq.s32.totalorder %s14, 0
    %p103 = por %p101, %p102
    %p104 = scmp.ne.s32.totalorder %s90, %s91
    %p105 = scmp.eq.s32.totalorder %s15, 3
    %p106 = por %p104, %p105
    %p108 = scmp.ne.s32.totalorder %s91, %s107
    %p109 = scmp.eq.s32.totalorder %s15, 0
    %p110 = por %p108, %p109
    %p111 = scmp.le.s32.totalorder 1, %s9
    %p112 = scmp.lt.s32.totalorder %s9, 5
    %p113 = pnand %p111, %p112
    %p114 = pneg %p113
    // Predicated region
    $region9: #{building_block_forward.8} parent=5 // pred_check
      _
    $region10: #{building_block_forward.8} parent=5 // pred_check_branch
      %116 = sbr.rel (%p113) target = $region12
    $region11: #{building_block_forward.8} parent=5 // pred_region
      %s117 = ssub.s32 %s9, 1
      // Predicated region
      $region13: #{building_block_forward.8} parent=11 // pred_check
        %p118 = pneg %p56
      $region14: #{building_block_forward.8} parent=11 // pred_check_branch
        %120 = sbr.rel (%p118) target = $region16
      $region15: #{building_block_forward.8} parent=11 // pred_region
        _
      $region16: #{building_block_forward.8} parent=11 // pred_fallthru
        _
      // Predicated region
      $region17: #{building_block_forward.8} parent=11 // pred_check
        %p121 = pneg %p77
      $region18: #{building_block_forward.8} parent=11 // pred_check_branch
        %123 = sbr.rel (%p121) target = $region20
      $region19: #{building_block_forward.8} parent=11 // pred_region
        _
      $region20: #{building_block_forward.8} parent=11 // pred_fallthru
        _
    $region12: #{building_block_forward.8} parent=5 // pred_fallthru
      _
    %p124 = scmp.lt.s32.totalorder %s9, 4
    // Predicated region
    $region21: #{building_block_forward.8} parent=5 // pred_check
      %p125 = pneg %p124
    $region22: #{building_block_forward.8} parent=5 // pred_check_branch
      %127 = sbr.rel (%p125) target = $region24
    $region23: #{building_block_forward.8} parent=5 // pred_region
      // Predicated region
      $region25: #{building_block_forward.8} parent=23 // pred_check
        %p128 = pneg %p29
      $region26: #{building_block_forward.8} parent=23 // pred_check_branch
        %130 = sbr.rel (%p128) target = $region28
      $region27: #{building_block_forward.8} parent=23 // pred_region
        %p131 = scmp.lt.s32.totalorder %s9, 3
        %s132 = scalar_select %p131, %s9, 3
        %s133 = smul.addr %s132, 8
        %s134 = scalar_lea.vmem %s0, %s133
      $region28: #{building_block_forward.8} parent=23 // pred_fallthru
        _
    $region24: #{building_block_forward.8} parent=5 // pred_fallthru
      _
    %p135 = scmp.le.s32.totalorder 1, %s9
    %p136 = scmp.lt.s32.totalorder %s9, 5
    %p137 = pnand %p135, %p136
    %p138 = pneg %p137
    // Predicated region
    $region29: #{building_block_forward.8} parent=5 // pred_check
      _
    $region30: #{building_block_forward.8} parent=5 // pred_check_branch
      %140 = sbr.rel (%p137) target = $region32
    $region31: #{building_block_forward.8} parent=5 // pred_region
      %s141 = ssub.s32 %s9, 1
      %p142 = scmp.lt.s32.totalorder %s14, 3
      %s143 = scalar_select %p142, %s14, 3
      %s144 = smul.addr %s143, 8
      %s145 = scalar_lea.vmem %s0, %s144
      %p146 = pneg %p35
      %p147 = pneg %p32
      %p148 = pneg %p56
      %p149 = pneg %p53
      %p150 = pneg %p77
      %p151 = pneg %p74
      %p152 = pneg %p103
      %p153 = pneg %p100
      %p154 = scmp.lt.s32.totalorder %s14, 3
      %s155 = scalar_select %p154, %s14, 3
      %s156 = smul.addr %s155, 8
      %s157 = scalar_lea.vmem %s3, %s156
      %p158 = scmp.lt.s32.totalorder %s14, 3
      %s159 = scalar_select %p158, %s14, 3
      %s160 = smul.addr %s159, 8
      %s161 = scalar_lea.vmem %s0, %s160
      %p162 = scmp.lt.s32.totalorder %s14, 3
      %s163 = scalar_select %p162, %s14, 3
      %s164 = smul.addr %s163, 8
      %s165 = scalar_lea.vmem %s3, %s164
      %v166 = vld [vmem:[%s161] sm:$0xff]
      %v167 = vld [vmem:[%s1] sm:$0xff]
      %v168 = vld [vmem:[%s1 + $0x8] sm:$0xff]
      %v169 = vld [vmem:[%s1 + $0x10] sm:$0xff]
      %v170 = vld [vmem:[%s1 + $0x18] sm:$0xff]
      %v171 = vld [vmem:[%s1 + $0x20] sm:$0xff]
      %v172 = vld [vmem:[%s1 + $0x28] sm:$0xff]
      %v173 = vld [vmem:[%s1 + $0x30] sm:$0xff]
      %v174 = vld [vmem:[%s1 + $0x38] sm:$0xff]
      %v175 = vld [vmem:[%s1 + $0x40] sm:$0xff]
      %v176 = vld [vmem:[%s1 + $0x48] sm:$0xff]
      %v177 = vld [vmem:[%s2] sm:$0x1]
      %v179 = vperm.slane %v177, 0
      %vm181 = vcmask 654336
      %v183 = vsel %vm181, %v166, 0
      %185 = vmatpush.msra.mxu0 0.0
      %186 = vmatpush.msra.mxu0 0.0
      %187 = vmatpush.msra.mxu0 0.0
      %188 = vmatpush.msra.mxu0 0.0
      %189 = vmatpush.msra.mxu0 0.0
      %190 = vmatpush.msra.mxu0 0.0
      %191 = vmatpush.msra.mxu0 %v176
      %192 = vmatpush.msra.mxu0 %v175
      %193 = vmatpush.msra.mxu0 %v174
      %194 = vmatpush.msra.mxu0 %v173
      %195 = vmatpush.msra.mxu0 %v172
      %196 = vmatpush.msra.mxu0 %v171
      %197 = vmatpush.msra.mxu0 %v170
      %198 = vmatpush.msra.mxu0 %v169
      %199 = vmatpush.msra.mxu0 %v168
      %200 = vmatpush.msra.mxu0 %v167
      %201 = vmatmul.f32.gmra.mxu0 %v183
      %v202 = vpop.f32.mrf.mxu0
      %v203 = vadd.f32 %v179, %v202
      %204 = vdwg.mxu0
      %vm205 = vcmp.gt.f32.partialorder %v203, 0.0
      %v206 = vmul.f32 %v203, 0.2
      %v207 = vsel %vm205, %v203, %v206
      %208 = vst [vmem:[%s165] sm:$0xff] %v207
      %p209 = scmp.lt.s32.totalorder %s14, 3
      %s210 = scalar_select %p209, %s14, 3
      %s211 = smul.addr %s210, 8
      %s212 = scalar_lea.vmem %s3, %s211
      // Predicated region
      $region33: #{building_block_forward.8} parent=31 // pred_check
        %p213 = pneg %p100
      $region34: #{building_block_forward.8} parent=31 // pred_check_branch
        %215 = sbr.rel (%p213) target = $region36
      $region35: #{building_block_forward.8} parent=31 // pred_region
        _
      $region36: #{building_block_forward.8} parent=31 // pred_fallthru
        _
    $region32: #{building_block_forward.8} parent=5 // pred_fallthru
      _
    %p216 = scmp.le.s32.totalorder 2, %s9
    // Predicated region
    $region37: #{building_block_forward.8} parent=5 // pred_check
      %p217 = pneg %p216
    $region38: #{building_block_forward.8} parent=5 // pred_check_branch
      %219 = sbr.rel (%p217) target = $region40
    $region39: #{building_block_forward.8} parent=5 // pred_region
      %s220 = ssub.s32 %s9, 2
      // Predicated region
      $region41: #{building_block_forward.8} parent=39 // pred_check
        %p221 = pneg %p106
      $region42: #{building_block_forward.8} parent=39 // pred_check_branch
        %223 = sbr.rel (%p221) target = $region44
      $region43: #{building_block_forward.8} parent=39 // pred_region
        %p224 = scmp.lt.s32.totalorder %s15, 3
        %s225 = scalar_select %p224, %s15, 3
        %s226 = smul.addr %s225, 8
        %s227 = scalar_lea.vmem %s3, %s226
      $region44: #{building_block_forward.8} parent=39 // pred_fallthru
        _
    $region40: #{building_block_forward.8} parent=5 // pred_fallthru
      _
  $region6: #{building_block_forward.8} parent=0 // loop_footer
    %s13 = sadd.s32 1, %s9
  $region7: #{building_block_forward.8} parent=0 // loop_footer_branch
    %8 = sbr.rel target = $region3
  $region8: #{building_block_forward.8} parent=0 // loop_exit
    _

// kernel: building_block_forward.11
$region0: #{building_block_forward.11}
  #allocation0 [shape = 'u32[]', space=smem, size = 0x4, offset = 0x4, fixed_abs, tag = 'smem constant byte address 0x4 - core index']
  #allocation1 [shape = 'u32[72,128]{1,0:T(1,128)}', space=vmem, size = 0x9000, scoped, tag = 'internal scratch']
  %s0 = inlined_call_operand.vmem [shape: f32[32,48], index: 0, kind: input, shape index: {}]
  %s1 = inlined_call_operand.vmem [shape: f32[48,16], index: 1, kind: input, shape index: {}]
  %s2 = inlined_call_operand.vmem [shape: f32[1,16], index: 2, kind: input, shape index: {}]
  %s3 = inlined_call_operand.vmem [shape: f32[32,16], index: 3, kind: output, shape index: {}]
  %s4 = sld [smem:[#allocation0]]
  $region45: #{building_block_forward.11} parent=0
    _
  %s6 = ssub.s32 1, %s4
  %s7 = scalar_select 0, %s6, %s4
  loop: start=0, step=1, limit=6
  $region2: #{building_block_forward.11} parent=0 // loop_pre_header
    _
  $region3: #{building_block_forward.11} parent=0 // loop_header
    %s9 = sphi 0, %s13
    %p10 = scmp.ge.s32.totalorder %s9, 6
    %s19 = sphi 0, %s21
    %s22 = sphi 0, %s19
    %s23 = sphi 0, %s22
    %s39 = sphi 0, %s23
    %s43 = sphi 0, %s43
    %s45 = sphi 0, %s43
    %s46 = sphi 0, %s45
    %s60 = sphi 0, %s46
    %s64 = sphi 0, %s64
    %s66 = sphi 0, %s64
    %s67 = sphi 0, %s66
    %s81 = sphi 0, %s67
    %s87 = sphi 0, %s89
    %s90 = sphi 0, %s87
    %s91 = sphi 0, %s90
    %s107 = sphi 0, %s91
  $region4: #{building_block_forward.11} parent=0 // loop_header_branch
    %12 = sbr.rel (%p10) target = $region8
  $region5: #{building_block_forward.11} parent=0 // loop_body
    %s14 = ssub.s32 %s9, 1
    %s15 = ssub.s32 %s9, 2
    %s16 = sadd.s32 %s9, 1
    %s17 = ssub.s32 %s9, %s16
    %p18 = scmp.eq.s32.totalorder %s17, 0
    %s20 = sadd.s32 %s19, 1
    %s21 = scalar_select %p18, %s19, %s20
    %p24 = pneg %p18
    %p25 = scmp.eq.s32.totalorder %s9, 3
    %p26 = por %p24, %p25
    %p27 = scmp.ne.s32.totalorder %s19, %s22
    %p28 = scmp.eq.s32.totalorder %s9, 0
    %p29 = por %p27, %p28
    %p30 = scmp.ne.s32.totalorder %s19, %s22
    %p31 = scmp.eq.s32.totalorder %s14, 3
    %p32 = por %p30, %p31
    %p33 = scmp.ne.s32.totalorder %s22, %s23
    %p34 = scmp.eq.s32.totalorder %s14, 0
    %p35 = por %p33, %p34
    %p36 = scmp.ne.s32.totalorder %s22, %s23
    %p37 = scmp.eq.s32.totalorder %s15, 3
    %p38 = por %p36, %p37
    %p40 = scmp.ne.s32.totalorder %s23, %s39
    %p41 = scmp.eq.s32.totalorder %s15, 0
    %p42 = por %p40, %p41
    %s44 = sadd.s32 %s43, 1
    %p47 = scmp.eq.s32.totalorder %s9, 3
    %p48 = scmp.ne.s32.totalorder %s43, %s45
    %p49 = scmp.eq.s32.totalorder %s9, 0
    %p50 = por %p48, %p49
    %p51 = scmp.ne.s32.totalorder %s43, %s45
    %p52 = scmp.eq.s32.totalorder %s14, 3
    %p53 = por %p51, %p52
    %p54 = scmp.ne.s32.totalorder %s45, %s46
    %p55 = scmp.eq.s32.totalorder %s14, 0
    %p56 = por %p54, %p55
    %p57 = scmp.ne.s32.totalorder %s45, %s46
    %p58 = scmp.eq.s32.totalorder %s15, 3
    %p59 = por %p57, %p58
    %p61 = scmp.ne.s32.totalorder %s46, %s60
    %p62 = scmp.eq.s32.totalorder %s15, 0
    %p63 = por %p61, %p62
    %s65 = sadd.s32 %s64, 1
    %p68 = scmp.eq.s32.totalorder %s9, 3
    %p69 = scmp.ne.s32.totalorder %s64, %s66
    %p70 = scmp.eq.s32.totalorder %s9, 0
    %p71 = por %p69, %p70
    %p72 = scmp.ne.s32.totalorder %s64, %s66
    %p73 = scmp.eq.s32.totalorder %s14, 3
    %p74 = por %p72, %p73
    %p75 = scmp.ne.s32.totalorder %s66, %s67
    %p76 = scmp.eq.s32.totalorder %s14, 0
    %p77 = por %p75, %p76
    %p78 = scmp.ne.s32.totalorder %s66, %s67
    %p79 = scmp.eq.s32.totalorder %s15, 3
    %p80 = por %p78, %p79
    %p82 = scmp.ne.s32.totalorder %s67, %s81
    %p83 = scmp.eq.s32.totalorder %s15, 0
    %p84 = por %p82, %p83
    %s85 = ssub.s32 %s9, %s16
    %p86 = scmp.eq.s32.totalorder %s85, 0
    %s88 = sadd.s32 %s87, 1
    %s89 = scalar_select %p86, %s87, %s88
    %p92 = pneg %p86
    %p93 = scmp.eq.s32.totalorder %s9, 3
    %p94 = por %p92, %p93
    %p95 = scmp.ne.s32.totalorder %s87, %s90
    %p96 = scmp.eq.s32.totalorder %s9, 0
    %p97 = por %p95, %p96
    %p98 = scmp.ne.s32.totalorder %s87, %s90
    %p99 = scmp.eq.s32.totalorder %s14, 3
    %p100 = por %p98, %p99
    %p101 = scmp.ne.s32.totalorder %s90, %s91
    %p102 = scmp.eq.s32.totalorder %s14, 0
    %p103 = por %p101, %p102
    %p104 = scmp.ne.s32.totalorder %s90, %s91
    %p105 = scmp.eq.s32.totalorder %s15, 3
    %p106 = por %p104, %p105
    %p108 = scmp.ne.s32.totalorder %s91, %s107
    %p109 = scmp.eq.s32.totalorder %s15, 0
    %p110 = por %p108, %p109
    %p111 = scmp.le.s32.totalorder 1, %s9
    %p112 = scmp.lt.s32.totalorder %s9, 5
    %p113 = pnand %p111, %p112
    %p114 = pneg %p113
    // Predicated region
    $region9: #{building_block_forward.11} parent=5 // pred_check
      _
    $region10: #{building_block_forward.11} parent=5 // pred_check_branch
      %116 = sbr.rel (%p113) target = $region12
    $region11: #{building_block_forward.11} parent=5 // pred_region
      %s117 = ssub.s32 %s9, 1
      // Predicated region
      $region13: #{building_block_forward.11} parent=11 // pred_check
        %p118 = pneg %p56
      $region14: #{building_block_forward.11} parent=11 // pred_check_branch
        %120 = sbr.rel (%p118) target = $region16
      $region15: #{building_block_forward.11} parent=11 // pred_region
        _
      $region16: #{building_block_forward.11} parent=11 // pred_fallthru
        _
      // Predicated region
      $region17: #{building_block_forward.11} parent=11 // pred_check
        %p121 = pneg %p77
      $region18: #{building_block_forward.11} parent=11 // pred_check_branch
        %123 = sbr.rel (%p121) target = $region20
      $region19: #{building_block_forward.11} parent=11 // pred_region
        _
      $region20: #{building_block_forward.11} parent=11 // pred_fallthru
        _
    $region12: #{building_block_forward.11} parent=5 // pred_fallthru
      _
    %p124 = scmp.lt.s32.totalorder %s9, 4
    // Predicated region
    $region21: #{building_block_forward.11} parent=5 // pred_check
      %p125 = pneg %p124
    $region22: #{building_block_forward.11} parent=5 // pred_check_branch
      %127 = sbr.rel (%p125) target = $region24
    $region23: #{building_block_forward.11} parent=5 // pred_region
      // Predicated region
      $region25: #{building_block_forward.11} parent=23 // pred_check
        %p128 = pneg %p29
      $region26: #{building_block_forward.11} parent=23 // pred_check_branch
        %130 = sbr.rel (%p128) target = $region28
      $region27: #{building_block_forward.11} parent=23 // pred_region
        %p131 = scmp.lt.s32.totalorder %s9, 3
        %s132 = scalar_select %p131, %s9, 3
        %s133 = smul.addr %s132, 8
        %s134 = scalar_lea.vmem %s0, %s133
      $region28: #{building_block_forward.11} parent=23 // pred_fallthru
        _
    $region24: #{building_block_forward.11} parent=5 // pred_fallthru
      _
    %p135 = scmp.le.s32.totalorder 1, %s9
    %p136 = scmp.lt.s32.totalorder %s9, 5
    %p137 = pnand %p135, %p136
    %p138 = pneg %p137
    // Predicated region
    $region29: #{building_block_forward.11} parent=5 // pred_check
      _
    $region30: #{building_block_forward.11} parent=5 // pred_check_branch
      %140 = sbr.rel (%p137) target = $region32
    $region31: #{building_block_forward.11} parent=5 // pred_region
      %s141 = ssub.s32 %s9, 1
      %p142 = scmp.lt.s32.totalorder %s14, 3
      %s143 = scalar_select %p142, %s14, 3
      %s144 = smul.addr %s143, 8
      %s145 = scalar_lea.vmem %s0, %s144
      %p146 = pneg %p35
      %p147 = pneg %p32
      %p148 = pneg %p56
      %p149 = pneg %p53
      %p150 = pneg %p77
      %p151 = pneg %p74
      %p152 = pneg %p103
      %p153 = pneg %p100
      %p154 = scmp.lt.s32.totalorder %s14, 3
      %s155 = scalar_select %p154, %s14, 3
      %s156 = smul.addr %s155, 8
      %s157 = scalar_lea.vmem %s3, %s156
      %p158 = scmp.lt.s32.totalorder %s14, 3
      %s159 = scalar_select %p158, %s14, 3
      %s160 = smul.addr %s159, 8
      %s161 = scalar_lea.vmem %s0, %s160
      %p162 = scmp.lt.s32.totalorder %s14, 3
      %s163 = scalar_select %p162, %s14, 3
      %s164 = smul.addr %s163, 8
      %s165 = scalar_lea.vmem %s3, %s164
      %v166 = vld [vmem:[%s161] sm:$0xff]
      %v167 = vld [vmem:[%s1] sm:$0xff]
      %v168 = vld [vmem:[%s1 + $0x8] sm:$0xff]
      %v169 = vld [vmem:[%s1 + $0x10] sm:$0xff]
      %v170 = vld [vmem:[%s1 + $0x18] sm:$0xff]
      %v171 = vld [vmem:[%s1 + $0x20] sm:$0xff]
      %v172 = vld [vmem:[%s1 + $0x28] sm:$0xff]
      %v173 = vld [vmem:[%s2] sm:$0x1]
      %v175 = vperm.slane %v173, 0
      %vm177 = vcmask 392192
      %v179 = vsel %vm177, %v166, 0
      %181 = vmatpush.msra.mxu0 0.0
      %182 = vmatpush.msra.mxu0 0.0
      %183 = vmatpush.msra.mxu0 0.0
      %184 = vmatpush.msra.mxu0 0.0
      %185 = vmatpush.msra.mxu0 0.0
      %186 = vmatpush.msra.mxu0 0.0
      %187 = vmatpush.msra.mxu0 0.0
      %188 = vmatpush.msra.mxu0 0.0
      %189 = vmatpush.msra.mxu0 0.0
      %190 = vmatpush.msra.mxu0 0.0
      %191 = vmatpush.msra.mxu0 %v172
      %192 = vmatpush.msra.mxu0 %v171
      %193 = vmatpush.msra.mxu0 %v170
      %194 = vmatpush.msra.mxu0 %v169
      %195 = vmatpush.msra.mxu0 %v168
      %196 = vmatpush.msra.mxu0 %v167
      %197 = vmatmul.f32.gmra.mxu0 %v179
      %v198 = vpop.f32.mrf.mxu0
      %v199 = vadd.f32 %v175, %v198
      %200 = vdwg.mxu0
      %vm201 = vcmp.gt.f32.partialorder %v199, 0.0
      %v202 = vmul.f32 %v199, 0.2
      %v203 = vsel %vm201, %v199, %v202
      %vm204 = vcmask 130048
      %205 = vst.msk [vmem:[%s165] sm:$0xff] %vm204, %v203
      %p206 = scmp.lt.s32.totalorder %s14, 3
      %s207 = scalar_select %p206, %s14, 3
      %s208 = smul.addr %s207, 8
      %s209 = scalar_lea.vmem %s3, %s208
      // Predicated region
      $region33: #{building_block_forward.11} parent=31 // pred_check
        %p210 = pneg %p100
      $region34: #{building_block_forward.11} parent=31 // pred_check_branch
        %212 = sbr.rel (%p210) target = $region36
      $region35: #{building_block_forward.11} parent=31 // pred_region
        _
      $region36: #{building_block_forward.11} parent=31 // pred_fallthru
        _
    $region32: #{building_block_forward.11} parent=5 // pred_fallthru
      _
    %p213 = scmp.le.s32.totalorder 2, %s9
    // Predicated region
    $region37: #{building_block_forward.11} parent=5 // pred_check
      %p214 = pneg %p213
    $region38: #{building_block_forward.11} parent=5 // pred_check_branch
      %216 = sbr.rel (%p214) target = $region40
    $region39: #{building_block_forward.11} parent=5 // pred_region
      %s217 = ssub.s32 %s9, 2
      // Predicated region
      $region41: #{building_block_forward.11} parent=39 // pred_check
        %p218 = pneg %p106
      $region42: #{building_block_forward.11} parent=39 // pred_check_branch
        %220 = sbr.rel (%p218) target = $region44
      $region43: #{building_block_forward.11} parent=39 // pred_region
        %p221 = scmp.lt.s32.totalorder %s15, 3
        %s222 = scalar_select %p221, %s15, 3
        %s223 = smul.addr %s222, 8
        %s224 = scalar_lea.vmem %s3, %s223
      $region44: #{building_block_forward.11} parent=39 // pred_fallthru
        _
    $region40: #{building_block_forward.11} parent=5 // pred_fallthru
      _
  $region6: #{building_block_forward.11} parent=0 // loop_footer
    %s13 = sadd.s32 1, %s9
  $region7: #{building_block_forward.11} parent=0 // loop_footer_branch
    %8 = sbr.rel target = $region3
  $region8: #{building_block_forward.11} parent=0 // loop_exit
    _

// kernel: building_block_forward.10
$region0: #{building_block_forward.10}
  #allocation0 [shape = 'u32[]', space=smem, size = 0x4, offset = 0x4, fixed_abs, tag = 'smem constant byte address 0x4 - core index']
  #allocation1 [shape = 'u32[72,128]{1,0:T(1,128)}', space=vmem, size = 0x9000, scoped, tag = 'internal scratch']
  %s0 = inlined_call_operand.vmem [shape: f32[32,8,16], index: 0, kind: input, shape index: {}]
  %s1 = inlined_call_operand.vmem [shape: f32[32,8,16], index: 1, kind: input, shape index: {}]
  %s2 = inlined_call_operand.vmem [shape: f32[32,8,16], index: 2, kind: input, shape index: {}]
  %s3 = inlined_call_operand.vmem [shape: f32[32,1,16], index: 3, kind: input, shape index: {}]
  %s4 = inlined_call_operand.vmem [shape: f32[48,48], index: 4, kind: input, shape index: {}]
  %s5 = inlined_call_operand.vmem [shape: f32[32,48], index: 5, kind: output, shape index: {}]
  %s6 = sld [smem:[#allocation0]]
  $region53: #{building_block_forward.10} parent=0
    _
  %s8 = ssub.s32 1, %s6
  %s9 = scalar_select 0, %s8, %s6
  loop: start=0, step=1, limit=6
  $region2: #{building_block_forward.10} parent=0 // loop_pre_header
    _
  $region3: #{building_block_forward.10} parent=0 // loop_header
    %s11 = sphi 0, %s15
    %p12 = scmp.ge.s32.totalorder %s11, 6
    %s21 = sphi 0, %s23
    %s24 = sphi 0, %s21
    %s25 = sphi 0, %s24
    %s41 = sphi 0, %s25
    %s47 = sphi 0, %s49
    %s50 = sphi 0, %s47
    %s51 = sphi 0, %s50
    %s67 = sphi 0, %s51
    %s73 = sphi 0, %s75
    %s76 = sphi 0, %s73
    %s77 = sphi 0, %s76
    %s93 = sphi 0, %s77
    %s99 = sphi 0, %s101
    %s102 = sphi 0, %s99
    %s103 = sphi 0, %s102
    %s119 = sphi 0, %s103
    %s123 = sphi 0, %s123
    %s125 = sphi 0, %s123
    %s126 = sphi 0, %s125
    %s140 = sphi 0, %s126
    %s146 = sphi 0, %s148
    %s149 = sphi 0, %s146
    %s150 = sphi 0, %s149
    %s166 = sphi 0, %s150
  $region4: #{building_block_forward.10} parent=0 // loop_header_branch
    %14 = sbr.rel (%p12) target = $region8
  $region5: #{building_block_forward.10} parent=0 // loop_body
    %s16 = ssub.s32 %s11, 1
    %s17 = ssub.s32 %s11, 2
    %s18 = sadd.s32 %s11, 1
    %s19 = ssub.s32 %s11, %s18
    %p20 = scmp.eq.s32.totalorder %s19, 0
    %s22 = sadd.s32 %s21, 1
    %s23 = scalar_select %p20, %s21, %s22
    %p26 = pneg %p20
    %p27 = scmp.eq.s32.totalorder %s11, 3
    %p28 = por %p26, %p27
    %p29 = scmp.ne.s32.totalorder %s21, %s24
    %p30 = scmp.eq.s32.totalorder %s11, 0
    %p31 = por %p29, %p30
    %p32 = scmp.ne.s32.totalorder %s21, %s24
    %p33 = scmp.eq.s32.totalorder %s16, 3
    %p34 = por %p32, %p33
    %p35 = scmp.ne.s32.totalorder %s24, %s25
    %p36 = scmp.eq.s32.totalorder %s16, 0
    %p37 = por %p35, %p36
    %p38 = scmp.ne.s32.totalorder %s24, %s25
    %p39 = scmp.eq.s32.totalorder %s17, 3
    %p40 = por %p38, %p39
    %p42 = scmp.ne.s32.totalorder %s25, %s41
    %p43 = scmp.eq.s32.totalorder %s17, 0
    %p44 = por %p42, %p43
    %s45 = ssub.s32 %s11, %s18
    %p46 = scmp.eq.s32.totalorder %s45, 0
    %s48 = sadd.s32 %s47, 1
    %s49 = scalar_select %p46, %s47, %s48
    %p52 = pneg %p46
    %p53 = scmp.eq.s32.totalorder %s11, 3
    %p54 = por %p52, %p53
    %p55 = scmp.ne.s32.totalorder %s47, %s50
    %p56 = scmp.eq.s32.totalorder %s11, 0
    %p57 = por %p55, %p56
    %p58 = scmp.ne.s32.totalorder %s47, %s50
    %p59 = scmp.eq.s32.totalorder %s16, 3
    %p60 = por %p58, %p59
    %p61 = scmp.ne.s32.totalorder %s50, %s51
    %p62 = scmp.eq.s32.totalorder %s16, 0
    %p63 = por %p61, %p62
    %p64 = scmp.ne.s32.totalorder %s50, %s51
    %p65 = scmp.eq.s32.totalorder %s17, 3
    %p66 = por %p64, %p65
    %p68 = scmp.ne.s32.totalorder %s51, %s67
    %p69 = scmp.eq.s32.totalorder %s17, 0
    %p70 = por %p68, %p69
    %s71 = ssub.s32 %s11, %s18
    %p72 = scmp.eq.s32.totalorder %s71, 0
    %s74 = sadd.s32 %s73, 1
    %s75 = scalar_select %p72, %s73, %s74
    %p78 = pneg %p72
    %p79 = scmp.eq.s32.totalorder %s11, 3
    %p80 = por %p78, %p79
    %p81 = scmp.ne.s32.totalorder %s73, %s76
    %p82 = scmp.eq.s32.totalorder %s11, 0
    %p83 = por %p81, %p82
    %p84 = scmp.ne.s32.totalorder %s73, %s76
    %p85 = scmp.eq.s32.totalorder %s16, 3
    %p86 = por %p84, %p85
    %p87 = scmp.ne.s32.totalorder %s76, %s77
    %p88 = scmp.eq.s32.totalorder %s16, 0
    %p89 = por %p87, %p88
    %p90 = scmp.ne.s32.totalorder %s76, %s77
    %p91 = scmp.eq.s32.totalorder %s17, 3
    %p92 = por %p90, %p91
    %p94 = scmp.ne.s32.totalorder %s77, %s93
    %p95 = scmp.eq.s32.totalorder %s17, 0
    %p96 = por %p94, %p95
    %s97 = ssub.s32 %s11, %s18
    %p98 = scmp.eq.s32.totalorder %s97, 0
    %s100 = sadd.s32 %s99, 1
    %s101 = scalar_select %p98, %s99, %s100
    %p104 = pneg %p98
    %p105 = scmp.eq.s32.totalorder %s11, 3
    %p106 = por %p104, %p105
    %p107 = scmp.ne.s32.totalorder %s99, %s102
    %p108 = scmp.eq.s32.totalorder %s11, 0
    %p109 = por %p107, %p108
    %p110 = scmp.ne.s32.totalorder %s99, %s102
    %p111 = scmp.eq.s32.totalorder %s16, 3
    %p112 = por %p110, %p111
    %p113 = scmp.ne.s32.totalorder %s102, %s103
    %p114 = scmp.eq.s32.totalorder %s16, 0
    %p115 = por %p113, %p114
    %p116 = scmp.ne.s32.totalorder %s102, %s103
    %p117 = scmp.eq.s32.totalorder %s17, 3
    %p118 = por %p116, %p117
    %p120 = scmp.ne.s32.totalorder %s103, %s119
    %p121 = scmp.eq.s32.totalorder %s17, 0
    %p122 = por %p120, %p121
    %s124 = sadd.s32 %s123, 1
    %p127 = scmp.eq.s32.totalorder %s11, 3
    %p128 = scmp.ne.s32.totalorder %s123, %s125
    %p129 = scmp.eq.s32.totalorder %s11, 0
    %p130 = por %p128, %p129
    %p131 = scmp.ne.s32.totalorder %s123, %s125
    %p132 = scmp.eq.s32.totalorder %s16, 3
    %p133 = por %p131, %p132
    %p134 = scmp.ne.s32.totalorder %s125, %s126
    %p135 = scmp.eq.s32.totalorder %s16, 0
    %p136 = por %p134, %p135
    %p137 = scmp.ne.s32.totalorder %s125, %s126
    %p138 = scmp.eq.s32.totalorder %s17, 3
    %p139 = por %p137, %p138
    %p141 = scmp.ne.s32.totalorder %s126, %s140
    %p142 = scmp.eq.s32.totalorder %s17, 0
    %p143 = por %p141, %p142
    %s144 = ssub.s32 %s11, %s18
    %p145 = scmp.eq.s32.totalorder %s144, 0
    %s147 = sadd.s32 %s146, 1
    %s148 = scalar_select %p145, %s146, %s147
    %p151 = pneg %p145
    %p152 = scmp.eq.s32.totalorder %s11, 3
    %p153 = por %p151, %p152
    %p154 = scmp.ne.s32.totalorder %s146, %s149
    %p155 = scmp.eq.s32.totalorder %s11, 0
    %p156 = por %p154, %p155
    %p157 = scmp.ne.s32.totalorder %s146, %s149
    %p158 = scmp.eq.s32.totalorder %s16, 3
    %p159 = por %p157, %p158
    %p160 = scmp.ne.s32.totalorder %s149, %s150
    %p161 = scmp.eq.s32.totalorder %s16, 0
    %p162 = por %p160, %p161
    %p163 = scmp.ne.s32.totalorder %s149, %s150
    %p164 = scmp.eq.s32.totalorder %s17, 3
    %p165 = por %p163, %p164
    %p167 = scmp.ne.s32.totalorder %s150, %s166
    %p168 = scmp.eq.s32.totalorder %s17, 0
    %p169 = por %p167, %p168
    %p170 = scmp.le.s32.totalorder 1, %s11
    %p171 = scmp.lt.s32.totalorder %s11, 5
    %p172 = pnand %p170, %p171
    %p173 = pneg %p172
    // Predicated region
    $region9: #{building_block_forward.10} parent=5 // pred_check
      _
    $region10: #{building_block_forward.10} parent=5 // pred_check_branch
      %175 = sbr.rel (%p172) target = $region12
    $region11: #{building_block_forward.10} parent=5 // pred_region
      %s176 = ssub.s32 %s11, 1
      // Predicated region
      $region13: #{building_block_forward.10} parent=11 // pred_check
        %p177 = pneg %p136
      $region14: #{building_block_forward.10} parent=11 // pred_check_branch
        %179 = sbr.rel (%p177) target = $region16
      $region15: #{building_block_forward.10} parent=11 // pred_region
        _
      $region16: #{building_block_forward.10} parent=11 // pred_fallthru
        _
    $region12: #{building_block_forward.10} parent=5 // pred_fallthru
      _
    %p180 = scmp.lt.s32.totalorder %s11, 4
    // Predicated region
    $region17: #{building_block_forward.10} parent=5 // pred_check
      %p181 = pneg %p180
    $region18: #{building_block_forward.10} parent=5 // pred_check_branch
      %183 = sbr.rel (%p181) target = $region20
    $region19: #{building_block_forward.10} parent=5 // pred_region
      // Predicated region
      $region21: #{building_block_forward.10} parent=19 // pred_check
        %p184 = pneg %p31
      $region22: #{building_block_forward.10} parent=19 // pred_check_branch
        %186 = sbr.rel (%p184) target = $region24
      $region23: #{building_block_forward.10} parent=19 // pred_region
        %s187 = smul.u32 8, %s11
        %p188 = scmp.lt.s32.totalorder %s187, 31
        %s189 = scalar_select %p188, %s187, 31
        %s190 = smul.addr %s189, 8
        %s191 = scalar_lea.vmem %s0, %s190
        %s192 = smul.u32 8, %s11
      $region24: #{building_block_forward.10} parent=19 // pred_fallthru
        _
      // Predicated region
      $region25: #{building_block_forward.10} parent=19 // pred_check
        %p193 = pneg %p57
      $region26: #{building_block_forward.10} parent=19 // pred_check_branch
        %195 = sbr.rel (%p193) target = $region28
      $region27: #{building_block_forward.10} parent=19 // pred_region
        %s196 = smul.u32 8, %s11
        %p197 = scmp.lt.s32.totalorder %s196, 31
        %s198 = scalar_select %p197, %s196, 31
        %s199 = smul.addr %s198, 8
        %s200 = scalar_lea.vmem %s1, %s199
        %s201 = smul.u32 8, %s11
      $region28: #{building_block_forward.10} parent=19 // pred_fallthru
        _
      // Predicated region
      $region29: #{building_block_forward.10} parent=19 // pred_check
        %p202 = pneg %p83
      $region30: #{building_block_forward.10} parent=19 // pred_check_branch
        %204 = sbr.rel (%p202) target = $region32
      $region31: #{building_block_forward.10} parent=19 // pred_region
        %s205 = smul.u32 8, %s11
        %p206 = scmp.lt.s32.totalorder %s205, 31
        %s207 = scalar_select %p206, %s205, 31
        %s208 = smul.addr %s207, 8
        %s209 = scalar_lea.vmem %s2, %s208
        %s210 = smul.u32 8, %s11
      $region32: #{building_block_forward.10} parent=19 // pred_fallthru
        _
      // Predicated region
      $region33: #{building_block_forward.10} parent=19 // pred_check
        %p211 = pneg %p109
      $region34: #{building_block_forward.10} parent=19 // pred_check_branch
        %213 = sbr.rel (%p211) target = $region36
      $region35: #{building_block_forward.10} parent=19 // pred_region
        %s214 = smul.u32 8, %s11
        %p215 = scmp.lt.s32.totalorder %s214, 31
        %s216 = scalar_select %p215, %s214, 31
        %s217 = scalar_lea.vmem %s3, %s216
        %s218 = smul.u32 8, %s11
      $region36: #{building_block_forward.10} parent=19 // pred_fallthru
        _
    $region20: #{building_block_forward.10} parent=5 // pred_fallthru
      _
    %p219 = scmp.le.s32.totalorder 1, %s11
    %p220 = scmp.lt.s32.totalorder %s11, 5
    %p221 = pnand %p219, %p220
    %p222 = pneg %p221
    // Predicated region
    $region37: #{building_block_forward.10} parent=5 // pred_check
      _
    $region38: #{building_block_forward.10} parent=5 // pred_check_branch
      %224 = sbr.rel (%p221) target = $region40
    $region39: #{building_block_forward.10} parent=5 // pred_region
      %s225 = ssub.s32 %s11, 1
      %s226 = smul.u32 8, %s16
      %p227 = scmp.lt.s32.totalorder %s226, 31
      %s228 = scalar_select %p227, %s226, 31
      %s229 = smul.addr %s228, 8
      %s230 = scalar_lea.vmem %s0, %s229
      %p231 = pneg %p37
      %p232 = pneg %p34
      %s233 = smul.u32 8, %s16
      %p234 = scmp.lt.s32.totalorder %s233, 31
      %s235 = scalar_select %p234, %s233, 31
      %s236 = smul.addr %s235, 8
      %s237 = scalar_lea.vmem %s1, %s236
      %p238 = pneg %p63
      %p239 = pneg %p60
      %s240 = smul.u32 8, %s16
      %p241 = scmp.lt.s32.totalorder %s240, 31
      %s242 = scalar_select %p241, %s240, 31
      %s243 = smul.addr %s242, 8
      %s244 = scalar_lea.vmem %s2, %s243
      %p245 = pneg %p89
      %p246 = pneg %p86
      %s247 = smul.u32 8, %s16
      %p248 = scmp.lt.s32.totalorder %s247, 31
      %s249 = scalar_select %p248, %s247, 31
      %s250 = scalar_lea.vmem %s3, %s249
      %p251 = pneg %p115
      %p252 = pneg %p112
      %p253 = pneg %p136
      %p254 = pneg %p133
      %p255 = pneg %p162
      %p256 = pneg %p159
      %p257 = scmp.lt.s32.totalorder %s16, 3
      %s258 = scalar_select %p257, %s16, 3
      %s259 = smul.addr %s258, 8
      %s260 = scalar_lea.vmem %s5, %s259
      %s261 = smul.u32 8, %s16
      %p262 = scmp.lt.s32.totalorder %s261, 31
      %s263 = scalar_select %p262, %s261, 31
      %s264 = smul.addr %s263, 8
      %s265 = scalar_lea.vmem %s0, %s264
      %s266 = smul.u32 8, %s16
      %s267 = smul.u32 8, %s16
      %p268 = scmp.lt.s32.totalorder %s267, 31
      %s269 = scalar_select %p268, %s267, 31
      %s270 = smul.addr %s269, 8
      %s271 = scalar_lea.vmem %s1, %s270
      %s272 = smul.u32 8, %s16
      %s273 = smul.u32 8, %s16
      %p274 = scmp.lt.s32.totalorder %s273, 31
      %s275 = scalar_select %p274, %s273, 31
      %s276 = smul.addr %s275, 8
      %s277 = scalar_lea.vmem %s2, %s276
      %s278 = smul.u32 8, %s16
      %s279 = smul.u32 8, %s16
      %p280 = scmp.lt.s32.totalorder %s279, 31
      %s281 = scalar_select %p280, %s279, 31
      %s282 = scalar_lea.vmem %s3, %s281
      %s283 = smul.u32 8, %s16
      %p284 = scmp.lt.s32.totalorder %s16, 3
      %s285 = scalar_select %p284, %s16, 3
      %s286 = smul.addr %s285, 8
      %s287 = scalar_lea.vmem %s5, %s286
      %v288 = vld [vmem:[%s265] sm:$0xff]
      %v289 = vld [vmem:[%s265 + $0x8] sm:$0xff]
      %v290 = vld [vmem:[%s265 + $0x10] sm:$0xff]
      %v291 = vld [vmem:[%s265 + $0x18] sm:$0xff]
      %v292 = vld [vmem:[%s265 + $0x20] sm:$0xff]
      %v293 = vld [vmem:[%s265 + $0x28] sm:$0xff]
      %v294 = vld [vmem:[%s265 + $0x30] sm:$0xff]
      %v295 = vld [vmem:[%s265 + $0x38] sm:$0xff]
      %v296 = vld [vmem:[%s282] sm:$0x1]
      %v297 = vld [vmem:[%s282 + $0x1] sm:$0x1]
      %v298 = vld [vmem:[%s282 + $0x2] sm:$0x1]
      %v299 = vld [vmem:[%s282 + $0x3] sm:$0x1]
      %v300 = vld [vmem:[%s282 + $0x4] sm:$0x1]
      %v301 = vld [vmem:[%s282 + $0x5] sm:$0x1]
      %v302 = vld [vmem:[%s282 + $0x6] sm:$0x1]
      %v303 = vld [vmem:[%s282 + $0x7] sm:$0x1]
      %v312 = vperm.slane %v296, 0
      %v313 = vperm.slane %v297, 0
      %v314 = vperm.slane %v298, 0
      %v315 = vperm.slane %v299, 0
      %v316 = vperm.slane %v300, 0
      %v317 = vperm.slane %v301, 0
      %v318 = vperm.slane %v302, 0
      %v319 = vperm.slane %v303, 0
      %v328 = vmul.f32 %v288, %v312
      %v329 = vmul.f32 %v289, %v313
      %v330 = vmul.f32 %v290, %v314
      %v331 = vmul.f32 %v291, %v315
      %v332 = vmul.f32 %v292, %v316
      %v333 = vmul.f32 %v293, %v317
      %v334 = vmul.f32 %v294, %v318
      %v335 = vmul.f32 %v295, %v319
      %v336 = vld [vmem:[%s271] sm:$0xff]
      %v337 = vld [vmem:[%s271 + $0x8] sm:$0xff]
      %v338 = vld [vmem:[%s271 + $0x10] sm:$0xff]
      %v339 = vld [vmem:[%s271 + $0x18] sm:$0xff]
      %v340 = vld [vmem:[%s271 + $0x20] sm:$0xff]
      %v341 = vld [vmem:[%s271 + $0x28] sm:$0xff]
      %v342 = vld [vmem:[%s271 + $0x30] sm:$0xff]
      %v343 = vld [vmem:[%s271 + $0x38] sm:$0xff]
      %v344 = vld [vmem:[%s277] sm:$0xff]
      %v345 = vld [vmem:[%s277 + $0x8] sm:$0xff]
      %v346 = vld [vmem:[%s277 + $0x10] sm:$0xff]
      %v347 = vld [vmem:[%s277 + $0x18] sm:$0xff]
      %v348 = vld [vmem:[%s277 + $0x20] sm:$0xff]
      %v349 = vld [vmem:[%s277 + $0x28] sm:$0xff]
      %v350 = vld [vmem:[%s277 + $0x30] sm:$0xff]
      %v351 = vld [vmem:[%s277 + $0x38] sm:$0xff]
      %360 = vrot.lane.b32.xlu0 %v336, 16
      %v361 = vpop.permute.xlu0 %360
      %362 = vrot.lane.b32.xlu0 %v337, 16
      %v363 = vpop.permute.xlu0 %362
      %364 = vrot.lane.b32.xlu0 %v338, 16
      %v365 = vpop.permute.xlu0 %364
      %366 = vrot.lane.b32.xlu0 %v339, 16
      %v367 = vpop.permute.xlu0 %366
      %368 = vrot.lane.b32.xlu0 %v340, 16
      %v369 = vpop.permute.xlu0 %368
      %370 = vrot.lane.b32.xlu0 %v341, 16
      %v371 = vpop.permute.xlu0 %370
      %372 = vrot.lane.b32.xlu0 %v342, 16
      %v373 = vpop.permute.xlu0 %372
      %374 = vrot.lane.b32.xlu0 %v343, 16
      %v375 = vpop.permute.xlu0 %374
      %392 = vrot.lane.b32.xlu0 %v344, 32
      %v393 = vpop.permute.xlu0 %392
      %394 = vrot.lane.b32.xlu0 %v345, 32
      %v395 = vpop.permute.xlu0 %394
      %396 = vrot.lane.b32.xlu0 %v346, 32
      %v397 = vpop.permute.xlu0 %396
      %398 = vrot.lane.b32.xlu0 %v347, 32
      %v399 = vpop.permute.xlu0 %398
      %400 = vrot.lane.b32.xlu0 %v348, 32
      %v401 = vpop.permute.xlu0 %400
      %402 = vrot.lane.b32.xlu0 %v349, 32
      %v403 = vpop.permute.xlu0 %402
      %404 = vrot.lane.b32.xlu0 %v350, 32
      %v405 = vpop.permute.xlu0 %404
      %406 = vrot.lane.b32.xlu0 %v351, 32
      %v407 = vpop.permute.xlu0 %406
      %vm416 = vcmask 130048
      %v417 = vsel %vm416, %v328, %v361
      %v418 = vsel %vm416, %v329, %v363
      %v419 = vsel %vm416, %v330, %v365
      %v420 = vsel %vm416, %v331, %v367
      %v421 = vsel %vm416, %v332, %v369
      %v422 = vsel %vm416, %v333, %v371
      %v423 = vsel %vm416, %v334, %v373
      %v424 = vsel %vm416, %v335, %v375
      %vm425 = vcmask 261120
      %v426 = vsel %vm425, %v417, %v393
      %v427 = vsel %vm425, %v418, %v395
      %v428 = vsel %vm425, %v419, %v397
      %v429 = vsel %vm425, %v420, %v399
      %v430 = vsel %vm425, %v421, %v401
      %v431 = vsel %vm425, %v422, %v403
      %v432 = vsel %vm425, %v423, %v405
      %v433 = vsel %vm425, %v424, %v407
      %v434 = vld [vmem:[%s4] sm:$0xff]
      %v435 = vld [vmem:[%s4 + $0x8] sm:$0xff]
      %v436 = vld [vmem:[%s4 + $0x10] sm:$0xff]
      %v437 = vld [vmem:[%s4 + $0x18] sm:$0xff]
      %v438 = vld [vmem:[%s4 + $0x20] sm:$0xff]
      %v439 = vld [vmem:[%s4 + $0x28] sm:$0xff]
      %vm440 = vcmask 392192
      %v442 = vsel %vm440, %v426, 0
      %v445 = vsel %vm440, %v427, 0
      %v448 = vsel %vm440, %v428, 0
      %v451 = vsel %vm440, %v429, 0
      %v454 = vsel %vm440, %v430, 0
      %v457 = vsel %vm440, %v431, 0
      %v460 = vsel %vm440, %v432, 0
      %v463 = vsel %vm440, %v433, 0
      %465 = vmatpush.msra.mxu0 0.0
      %466 = vmatpush.msra.mxu0 0.0
      %467 = vmatpush.msra.mxu0 0.0
      %468 = vmatpush.msra.mxu0 0.0
      %469 = vmatpush.msra.mxu0 0.0
      %470 = vmatpush.msra.mxu0 0.0
      %471 = vmatpush.msra.mxu0 0.0
      %472 = vmatpush.msra.mxu0 0.0
      %473 = vmatpush.msra.mxu0 0.0
      %474 = vmatpush.msra.mxu0 0.0
      %475 = vmatpush.msra.mxu0 %v439
      %476 = vmatpush.msra.mxu0 %v438
      %477 = vmatpush.msra.mxu0 %v437
      %478 = vmatpush.msra.mxu0 %v436
      %479 = vmatpush.msra.mxu0 %v435
      %480 = vmatpush.msra.mxu0 %v434
      %481 = vmatmul.f32.gmra.mxu0 %v442
      %v482 = vpop.f32.mrf.mxu0
      %v483 = vadd.f32 0.0, %v482
      %484 = vmatmul.f32.gmra.mxu0 %v445
      %v485 = vpop.f32.mrf.mxu0
      %v486 = vadd.f32 0.0, %v485
      %487 = vmatmul.f32.gmra.mxu0 %v448
      %v488 = vpop.f32.mrf.mxu0
      %v489 = vadd.f32 0.0, %v488
      %490 = vmatmul.f32.gmra.mxu0 %v451
      %v491 = vpop.f32.mrf.mxu0
      %v492 = vadd.f32 0.0, %v491
      %493 = vmatmul.f32.gmra.mxu0 %v454
      %v494 = vpop.f32.mrf.mxu0
      %v495 = vadd.f32 0.0, %v494
      %496 = vmatmul.f32.gmra.mxu0 %v457
      %v497 = vpop.f32.mrf.mxu0
      %v498 = vadd.f32 0.0, %v497
      %499 = vmatmul.f32.gmra.mxu0 %v460
      %v500 = vpop.f32.mrf.mxu0
      %v501 = vadd.f32 0.0, %v500
      %502 = vmatmul.f32.gmra.mxu0 %v463
      %v503 = vpop.f32.mrf.mxu0
      %v504 = vadd.f32 0.0, %v503
      %505 = vdwg.mxu0
      %v506 = vsel %vm440, %v483, -inf
      %v507 = vrot.slane %v506, 4
      %v508 = vmax.f32 %v506, %v507
      %v509 = vrot.slane %v508, 2
      %v510 = vmax.f32 %v508, %v509
      %v511 = vrot.slane %v510, 1
      %v512 = vmax.f32 %v510, %v511
      %v513 = vsel %vm440, %v486, -inf
      %v514 = vrot.slane %v513, 4
      %v515 = vmax.f32 %v513, %v514
      %v516 = vrot.slane %v515, 2
      %v517 = vmax.f32 %v515, %v516
      %v518 = vrot.slane %v517, 1
      %v519 = vmax.f32 %v517, %v518
      %v520 = vsel %vm440, %v489, -inf
      %v521 = vrot.slane %v520, 4
      %v522 = vmax.f32 %v520, %v521
      %v523 = vrot.slane %v522, 2
      %v524 = vmax.f32 %v522, %v523
      %v525 = vrot.slane %v524, 1
      %v526 = vmax.f32 %v524, %v525
      %v527 = vsel %vm440, %v492, -inf
      %v528 = vrot.slane %v527, 4
      %v529 = vmax.f32 %v527, %v528
      %v530 = vrot.slane %v529, 2
      %v531 = vmax.f32 %v529, %v530
      %v532 = vrot.slane %v531, 1
      %v533 = vmax.f32 %v531, %v532
      %v534 = vsel %vm440, %v495, -inf
      %v535 = vrot.slane %v534, 4
      %v536 = vmax.f32 %v534, %v535
      %v537 = vrot.slane %v536, 2
      %v538 = vmax.f32 %v536, %v537
      %v539 = vrot.slane %v538, 1
      %v540 = vmax.f32 %v538, %v539
      %v541 = vsel %vm440, %v498, -inf
      %v542 = vrot.slane %v541, 4
      %v543 = vmax.f32 %v541, %v542
      %v544 = vrot.slane %v543, 2
      %v545 = vmax.f32 %v543, %v544
      %v546 = vrot.slane %v545, 1
      %v547 = vmax.f32 %v545, %v546
      %v548 = vsel %vm440, %v501, -inf
      %v549 = vrot.slane %v548, 4
      %v550 = vmax.f32 %v548, %v549
      %v551 = vrot.slane %v550, 2
      %v552 = vmax.f32 %v550, %v551
      %v553 = vrot.slane %v552, 1
      %v554 = vmax.f32 %v552, %v553
      %v555 = vsel %vm440, %v504, -inf
      %v556 = vrot.slane %v555, 4
      %v557 = vmax.f32 %v555, %v556
      %v558 = vrot.slane %v557, 2
      %v559 = vmax.f32 %v557, %v558
      %v560 = vrot.slane %v559, 1
      %v561 = vmax.f32 %v559, %v560
      %v562 = vsub.f32 %v483, %v512
      %v563 = vsub.f32 %v486, %v519
      %v564 = vsub.f32 %v489, %v526
      %v565 = vsub.f32 %v492, %v533
      %v566 = vsub.f32 %v495, %v540
      %v567 = vsub.f32 %v498, %v547
      %v568 = vsub.f32 %v501, %v554
      %v569 = vsub.f32 %v504, %v561
      %v570 = vmul.f32 %v562, 1.442695
      %v571 = vpow.pop %v570
      %v572 = vmul.f32 %v563, 1.442695
      %v573 = vpow.pop %v572
      %v574 = vmul.f32 %v564, 1.442695
      %v575 = vpow.pop %v574
      %v576 = vmul.f32 %v565, 1.442695
      %v577 = vpow.pop %v576
      %v578 = vmul.f32 %v566, 1.442695
      %v579 = vpow.pop %v578
      %v580 = vmul.f32 %v567, 1.442695
      %v581 = vpow.pop %v580
      %v582 = vmul.f32 %v568, 1.442695
      %v583 = vpow.pop %v582
      %v584 = vmul.f32 %v569, 1.442695
      %v585 = vpow.pop %v584
      %v586 = vsel %vm440, %v571, 0.0
      %v587 = vrot.slane %v586, 4
      %v588 = vadd.f32 %v586, %v587
      %v589 = vrot.slane %v588, 2
      %v590 = vadd.f32 %v588, %v589
      %v591 = vrot.slane %v590, 1
      %v592 = vadd.f32 %v590, %v591
      %v593 = vsel %vm440, %v573, 0.0
      %v594 = vrot.slane %v593, 4
      %v595 = vadd.f32 %v593, %v594
      %v596 = vrot.slane %v595, 2
      %v597 = vadd.f32 %v595, %v596
      %v598 = vrot.slane %v597, 1
      %v599 = vadd.f32 %v597, %v598
      %v600 = vsel %vm440, %v575, 0.0
      %v601 = vrot.slane %v600, 4
      %v602 = vadd.f32 %v600, %v601
      %v603 = vrot.slane %v602, 2
      %v604 = vadd.f32 %v602, %v603
      %v605 = vrot.slane %v604, 1
      %v606 = vadd.f32 %v604, %v605
      %v607 = vsel %vm440, %v577, 0.0
      %v608 = vrot.slane %v607, 4
      %v609 = vadd.f32 %v607, %v608
      %v610 = vrot.slane %v609, 2
      %v611 = vadd.f32 %v609, %v610
      %v612 = vrot.slane %v611, 1
      %v613 = vadd.f32 %v611, %v612
      %v614 = vsel %vm440, %v579, 0.0
      %v615 = vrot.slane %v614, 4
      %v616 = vadd.f32 %v614, %v615
      %v617 = vrot.slane %v616, 2
      %v618 = vadd.f32 %v616, %v617
      %v619 = vrot.slane %v618, 1
      %v620 = vadd.f32 %v618, %v619
      %v621 = vsel %vm440, %v581, 0.0
      %v622 = vrot.slane %v621, 4
      %v623 = vadd.f32 %v621, %v622
      %v624 = vrot.slane %v623, 2
      %v625 = vadd.f32 %v623, %v624
      %v626 = vrot.slane %v625, 1
      %v627 = vadd.f32 %v625, %v626
      %v628 = vsel %vm440, %v583, 0.0
      %v629 = vrot.slane %v628, 4
      %v630 = vadd.f32 %v628, %v629
      %v631 = vrot.slane %v630, 2
      %v632 = vadd.f32 %v630, %v631
      %v633 = vrot.slane %v632, 1
      %v634 = vadd.f32 %v632, %v633
      %v635 = vsel %vm440, %v585, 0.0
      %v636 = vrot.slane %v635, 4
      %v637 = vadd.f32 %v635, %v636
      %v638 = vrot.slane %v637, 2
      %v639 = vadd.f32 %v637, %v638
      %v640 = vrot.slane %v639, 1
      %v641 = vadd.f32 %v639, %v640
      %v642 = vrcp.pop %v592
      %v643 = vmul.f32 %v592, %v642
      %v644 = vsub.f32 1.0, %v643
      %v645 = vmul.f32 %v642, %v644
      %v646 = vadd.f32 %v642, %v645
      %vm647 = vweird.f32 %v592
      %vm648 = vweird.f32 %v642
      %vm649 = vmor %vm647, %vm648
      %v650 = vsel %vm649, %v642, %v646
      %v651 = vand.u32 2147483647, %v592
      %vm652 = vcmp.eq.f32.partialorder %v651, 8.507059e+37
      %v653 = vand.u32 %v592, 2147483648
      %v654 = vor.u32 1.1754944e-38, %v653
      %v655 = vsel %vm652, %v654, %v650
      %v656 = vmul.f32 %v571, %v655
      %v657 = vrcp.pop %v599
      %v658 = vmul.f32 %v599, %v657
      %v659 = vsub.f32 1.0, %v658
      %v660 = vmul.f32 %v657, %v659
      %v661 = vadd.f32 %v657, %v660
      %vm662 = vweird.f32 %v599
      %vm663 = vweird.f32 %v657
      %vm664 = vmor %vm662, %vm663
      %v665 = vsel %vm664, %v657, %v661
      %v666 = vand.u32 2147483647, %v599
      %vm667 = vcmp.eq.f32.partialorder %v666, 8.507059e+37
      %v668 = vand.u32 %v599, 2147483648
      %v669 = vor.u32 1.1754944e-38, %v668
      %v670 = vsel %vm667, %v669, %v665
      %v671 = vmul.f32 %v573, %v670
      %v672 = vrcp.pop %v606
      %v673 = vmul.f32 %v606, %v672
      %v674 = vsub.f32 1.0, %v673
      %v675 = vmul.f32 %v672, %v674
      %v676 = vadd.f32 %v672, %v675
      %vm677 = vweird.f32 %v606
      %vm678 = vweird.f32 %v672
      %vm679 = vmor %vm677, %vm678
      %v680 = vsel %vm679, %v672, %v676
      %v681 = vand.u32 2147483647, %v606
      %vm682 = vcmp.eq.f32.partialorder %v681, 8.507059e+37
      %v683 = vand.u32 %v606, 2147483648
      %v684 = vor.u32 1.1754944e-38, %v683
      %v685 = vsel %vm682, %v684, %v680
      %v686 = vmul.f32 %v575, %v685
      %v687 = vrcp.pop %v613
      %v688 = vmul.f32 %v613, %v687
      %v689 = vsub.f32 1.0, %v688
      %v690 = vmul.f32 %v687, %v689
      %v691 = vadd.f32 %v687, %v690
      %vm692 = vweird.f32 %v613
      %vm693 = vweird.f32 %v687
      %vm694 = vmor %vm692, %vm693
      %v695 = vsel %vm694, %v687, %v691
      %v696 = vand.u32 2147483647, %v613
      %vm697 = vcmp.eq.f32.partialorder %v696, 8.507059e+37
      %v698 = vand.u32 %v613, 2147483648
      %v699 = vor.u32 1.1754944e-38, %v698
      %v700 = vsel %vm697, %v699, %v695
      %v701 = vmul.f32 %v577, %v700
      %v702 = vrcp.pop %v620
      %v703 = vmul.f32 %v620, %v702
      %v704 = vsub.f32 1.0, %v703
      %v705 = vmul.f32 %v702, %v704
      %v706 = vadd.f32 %v702, %v705
      %vm707 = vweird.f32 %v620
      %vm708 = vweird.f32 %v702
      %vm709 = vmor %vm707, %vm708
      %v710 = vsel %vm709, %v702, %v706
      %v711 = vand.u32 2147483647, %v620
      %vm712 = vcmp.eq.f32.partialorder %v711, 8.507059e+37
      %v713 = vand.u32 %v620, 2147483648
      %v714 = vor.u32 1.1754944e-38, %v713
      %v715 = vsel %vm712, %v714, %v710
      %v716 = vmul.f32 %v579, %v715
      %v717 = vrcp.pop %v627
      %v718 = vmul.f32 %v627, %v717
      %v719 = vsub.f32 1.0, %v718
      %v720 = vmul.f32 %v717, %v719
      %v721 = vadd.f32 %v717, %v720
      %vm722 = vweird.f32 %v627
      %vm723 = vweird.f32 %v717
      %vm724 = vmor %vm722, %vm723
      %v725 = vsel %vm724, %v717, %v721
      %v726 = vand.u32 2147483647, %v627
      %vm727 = vcmp.eq.f32.partialorder %v726, 8.507059e+37
      %v728 = vand.u32 %v627, 2147483648
      %v729 = vor.u32 1.1754944e-38, %v728
      %v730 = vsel %vm727, %v729, %v725
      %v731 = vmul.f32 %v581, %v730
      %v732 = vrcp.pop %v634
      %v733 = vmul.f32 %v634, %v732
      %v734 = vsub.f32 1.0, %v733
      %v735 = vmul.f32 %v732, %v734
      %v736 = vadd.f32 %v732, %v735
      %vm737 = vweird.f32 %v634
      %vm738 = vweird.f32 %v732
      %vm739 = vmor %vm737, %vm738
      %v740 = vsel %vm739, %v732, %v736
      %v741 = vand.u32 2147483647, %v634
      %vm742 = vcmp.eq.f32.partialorder %v741, 8.507059e+37
      %v743 = vand.u32 %v634, 2147483648
      %v744 = vor.u32 1.1754944e-38, %v743
      %v745 = vsel %vm742, %v744, %v740
      %v746 = vmul.f32 %v583, %v745
      %v747 = vrcp.pop %v641
      %v748 = vmul.f32 %v641, %v747
      %v749 = vsub.f32 1.0, %v748
      %v750 = vmul.f32 %v747, %v749
      %v751 = vadd.f32 %v747, %v750
      %vm752 = vweird.f32 %v641
      %vm753 = vweird.f32 %v747
      %vm754 = vmor %vm752, %vm753
      %v755 = vsel %vm754, %v747, %v751
      %v756 = vand.u32 2147483647, %v641
      %vm757 = vcmp.eq.f32.partialorder %v756, 8.507059e+37
      %v758 = vand.u32 %v641, 2147483648
      %v759 = vor.u32 1.1754944e-38, %v758
      %v760 = vsel %vm757, %v759, %v755
      %v761 = vmul.f32 %v585, %v760
      %v762 = vmul.f32 %v426, %v656
      %v763 = vmul.f32 %v427, %v671
      %v764 = vmul.f32 %v428, %v686
      %v765 = vmul.f32 %v429, %v701
      %v766 = vmul.f32 %v430, %v716
      %v767 = vmul.f32 %v431, %v731
      %v768 = vmul.f32 %v432, %v746
      %v769 = vmul.f32 %v433, %v761
      %v770 = vsel %vm440, %v762, 0.0
      %v771 = vrot.slane %v770, 4
      %v772 = vadd.f32 %v770, %v771
      %v773 = vrot.slane %v772, 2
      %v774 = vadd.f32 %v772, %v773
      %v775 = vrot.slane %v774, 1
      %v776 = vadd.f32 %v774, %v775
      %v777 = vsel %vm440, %v763, 0.0
      %v778 = vrot.slane %v777, 4
      %v779 = vadd.f32 %v777, %v778
      %v780 = vrot.slane %v779, 2
      %v781 = vadd.f32 %v779, %v780
      %v782 = vrot.slane %v781, 1
      %v783 = vadd.f32 %v781, %v782
      %v784 = vsel %vm440, %v764, 0.0
      %v785 = vrot.slane %v784, 4
      %v786 = vadd.f32 %v784, %v785
      %v787 = vrot.slane %v786, 2
      %v788 = vadd.f32 %v786, %v787
      %v789 = vrot.slane %v788, 1
      %v790 = vadd.f32 %v788, %v789
      %v791 = vsel %vm440, %v765, 0.0
      %v792 = vrot.slane %v791, 4
      %v793 = vadd.f32 %v791, %v792
      %v794 = vrot.slane %v793, 2
      %v795 = vadd.f32 %v793, %v794
      %v796 = vrot.slane %v795, 1
      %v797 = vadd.f32 %v795, %v796
      %v798 = vsel %vm440, %v766, 0.0
      %v799 = vrot.slane %v798, 4
      %v800 = vadd.f32 %v798, %v799
      %v801 = vrot.slane %v800, 2
      %v802 = vadd.f32 %v800, %v801
      %v803 = vrot.slane %v802, 1
      %v804 = vadd.f32 %v802, %v803
      %v805 = vsel %vm440, %v767, 0.0
      %v806 = vrot.slane %v805, 4
      %v807 = vadd.f32 %v805, %v806
      %v808 = vrot.slane %v807, 2
      %v809 = vadd.f32 %v807, %v808
      %v810 = vrot.slane %v809, 1
      %v811 = vadd.f32 %v809, %v810
      %v812 = vsel %vm440, %v768, 0.0
      %v813 = vrot.slane %v812, 4
      %v814 = vadd.f32 %v812, %v813
      %v815 = vrot.slane %v814, 2
      %v816 = vadd.f32 %v814, %v815
      %v817 = vrot.slane %v816, 1
      %v818 = vadd.f32 %v816, %v817
      %v819 = vsel %vm440, %v769, 0.0
      %v820 = vrot.slane %v819, 4
      %v821 = vadd.f32 %v819, %v820
      %v822 = vrot.slane %v821, 2
      %v823 = vadd.f32 %v821, %v822
      %v824 = vrot.slane %v823, 1
      %v825 = vadd.f32 %v823, %v824
      %vm834 = vcmask 1041409
      %v835 = vsel %vm834, %v783, %v776
      %vm836 = vcmask 1042434
      %v837 = vsel %vm836, %v790, %v835
      %vm838 = vcmask 1043459
      %v839 = vsel %vm838, %v797, %v837
      %vm840 = vcmask 1044484
      %v841 = vsel %vm840, %v804, %v839
      %vm842 = vcmask 1045509
      %v843 = vsel %vm842, %v811, %v841
      %vm844 = vcmask 1046534
      %v845 = vsel %vm844, %v818, %v843
      %vm846 = vcmask 1047559
      %v847 = vsel %vm846, %v825, %v845
      %849 = vst.msk [vmem:[%s287] sm:$0xff] %vm440, %v847
      %p850 = scmp.lt.s32.totalorder %s16, 3
      %s851 = scalar_select %p850, %s16, 3
      %s852 = smul.addr %s851, 8
      %s853 = scalar_lea.vmem %s5, %s852
      // Predicated region
      $region41: #{building_block_forward.10} parent=39 // pred_check
        %p854 = pneg %p159
      $region42: #{building_block_forward.10} parent=39 // pred_check_branch
        %856 = sbr.rel (%p854) target = $region44
      $region43: #{building_block_forward.10} parent=39 // pred_region
        _
      $region44: #{building_block_forward.10} parent=39 // pred_fallthru
        _
    $region40: #{building_block_forward.10} parent=5 // pred_fallthru
      _
    %p857 = scmp.le.s32.totalorder 2, %s11
    // Predicated region
    $region45: #{building_block_forward.10} parent=5 // pred_check
      %p858 = pneg %p857
    $region46: #{building_block_forward.10} parent=5 // pred_check_branch
      %860 = sbr.rel (%p858) target = $region48
    $region47: #{building_block_forward.10} parent=5 // pred_region
      %s861 = ssub.s32 %s11, 2
      // Predicated region
      $region49: #{building_block_forward.10} parent=47 // pred_check
        %p862 = pneg %p165
      $region50: #{building_block_forward.10} parent=47 // pred_check_branch
        %864 = sbr.rel (%p862) target = $region52
      $region51: #{building_block_forward.10} parent=47 // pred_region
        %p865 = scmp.lt.s32.totalorder %s17, 3
        %s866 = scalar_select %p865, %s17, 3
        %s867 = smul.addr %s866, 8
        %s868 = scalar_lea.vmem %s5, %s867
      $region52: #{building_block_forward.10} parent=47 // pred_fallthru
        _
    $region48: #{building_block_forward.10} parent=5 // pred_fallthru
      _
  $region6: #{building_block_forward.10} parent=0 // loop_footer
    %s15 = sadd.s32 1, %s11
  $region7: #{building_block_forward.10} parent=0 // loop_footer_branch
    %10 = sbr.rel target = $region3
  $region8: #{building_block_forward.10} parent=0 // loop_exit
    _

// kernel: building_block_forward.9
$region0: #{building_block_forward.9}
  #allocation0 [shape = 'u32[]', space=smem, size = 0x4, offset = 0x4, fixed_abs, tag = 'smem constant byte address 0x4 - core index']
  #allocation1 [shape = 'u32[72,128]{1,0:T(1,128)}', space=vmem, size = 0x9000, scoped, tag = 'internal scratch']
  %s0 = inlined_call_operand.vmem [shape: f32[32,8,16], index: 0, kind: input, shape index: {}]
  %s1 = inlined_call_operand.vmem [shape: f32[32,1,16], index: 1, kind: input, shape index: {}]
  %s2 = inlined_call_operand.vmem [shape: f32[16,48], index: 2, kind: input, shape index: {}]
  %s3 = inlined_call_operand.vmem [shape: f32[1,48], index: 3, kind: input, shape index: {}]
  %s4 = inlined_call_operand.vmem [shape: f32[16,16], index: 4, kind: input, shape index: {}]
  %s5 = inlined_call_operand.vmem [shape: f32[1,16], index: 5, kind: input, shape index: {}]
  %s6 = inlined_call_operand.vmem [shape: f32[32,8,16], index: 6, kind: output, shape index: {}]
  %s7 = sld [smem:[#allocation0]]
  $region57: #{building_block_forward.9} parent=0
    _
  %s9 = ssub.s32 1, %s7
  %s10 = scalar_select 0, %s9, %s7
  loop: start=0, step=1, limit=6
  $region2: #{building_block_forward.9} parent=0 // loop_pre_header
    _
  $region3: #{building_block_forward.9} parent=0 // loop_header
    %s12 = sphi 0, %s16
    %p13 = scmp.ge.s32.totalorder %s12, 6
    %s22 = sphi 0, %s24
    %s25 = sphi 0, %s22
    %s26 = sphi 0, %s25
    %s42 = sphi 0, %s26
    %s48 = sphi 0, %s50
    %s51 = sphi 0, %s48
    %s52 = sphi 0, %s51
    %s68 = sphi 0, %s52
    %s72 = sphi 0, %s72
    %s74 = sphi 0, %s72
    %s75 = sphi 0, %s74
    %s89 = sphi 0, %s75
    %s93 = sphi 0, %s93
    %s95 = sphi 0, %s93
    %s96 = sphi 0, %s95
    %s110 = sphi 0, %s96
    %s114 = sphi 0, %s114
    %s116 = sphi 0, %s114
    %s117 = sphi 0, %s116
    %s131 = sphi 0, %s117
    %s135 = sphi 0, %s135
    %s137 = sphi 0, %s135
    %s138 = sphi 0, %s137
    %s152 = sphi 0, %s138
    %s158 = sphi 0, %s160
    %s161 = sphi 0, %s158
    %s162 = sphi 0, %s161
    %s178 = sphi 0, %s162
  $region4: #{building_block_forward.9} parent=0 // loop_header_branch
    %15 = sbr.rel (%p13) target = $region8
  $region5: #{building_block_forward.9} parent=0 // loop_body
    %s17 = ssub.s32 %s12, 1
    %s18 = ssub.s32 %s12, 2
    %s19 = sadd.s32 %s12, 1
    %s20 = ssub.s32 %s12, %s19
    %p21 = scmp.eq.s32.totalorder %s20, 0
    %s23 = sadd.s32 %s22, 1
    %s24 = scalar_select %p21, %s22, %s23
    %p27 = pneg %p21
    %p28 = scmp.eq.s32.totalorder %s12, 3
    %p29 = por %p27, %p28
    %p30 = scmp.ne.s32.totalorder %s22, %s25
    %p31 = scmp.eq.s32.totalorder %s12, 0
    %p32 = por %p30, %p31
    %p33 = scmp.ne.s32.totalorder %s22, %s25
    %p34 = scmp.eq.s32.totalorder %s17, 3
    %p35 = por %p33, %p34
    %p36 = scmp.ne.s32.totalorder %s25, %s26
    %p37 = scmp.eq.s32.totalorder %s17, 0
    %p38 = por %p36, %p37
    %p39 = scmp.ne.s32.totalorder %s25, %s26
    %p40 = scmp.eq.s32.totalorder %s18, 3
    %p41 = por %p39, %p40
    %p43 = scmp.ne.s32.totalorder %s26, %s42
    %p44 = scmp.eq.s32.totalorder %s18, 0
    %p45 = por %p43, %p44
    %s46 = ssub.s32 %s12, %s19
    %p47 = scmp.eq.s32.totalorder %s46, 0
    %s49 = sadd.s32 %s48, 1
    %s50 = scalar_select %p47, %s48, %s49
    %p53 = pneg %p47
    %p54 = scmp.eq.s32.totalorder %s12, 3
    %p55 = por %p53, %p54
    %p56 = scmp.ne.s32.totalorder %s48, %s51
    %p57 = scmp.eq.s32.totalorder %s12, 0
    %p58 = por %p56, %p57
    %p59 = scmp.ne.s32.totalorder %s48, %s51
    %p60 = scmp.eq.s32.totalorder %s17, 3
    %p61 = por %p59, %p60
    %p62 = scmp.ne.s32.totalorder %s51, %s52
    %p63 = scmp.eq.s32.totalorder %s17, 0
    %p64 = por %p62, %p63
    %p65 = scmp.ne.s32.totalorder %s51, %s52
    %p66 = scmp.eq.s32.totalorder %s18, 3
    %p67 = por %p65, %p66
    %p69 = scmp.ne.s32.totalorder %s52, %s68
    %p70 = scmp.eq.s32.totalorder %s18, 0
    %p71 = por %p69, %p70
    %s73 = sadd.s32 %s72, 1
    %p76 = scmp.eq.s32.totalorder %s12, 3
    %p77 = scmp.ne.s32.totalorder %s72, %s74
    %p78 = scmp.eq.s32.totalorder %s12, 0
    %p79 = por %p77, %p78
    %p80 = scmp.ne.s32.totalorder %s72, %s74
    %p81 = scmp.eq.s32.totalorder %s17, 3
    %p82 = por %p80, %p81
    %p83 = scmp.ne.s32.totalorder %s74, %s75
    %p84 = scmp.eq.s32.totalorder %s17, 0
    %p85 = por %p83, %p84
    %p86 = scmp.ne.s32.totalorder %s74, %s75
    %p87 = scmp.eq.s32.totalorder %s18, 3
    %p88 = por %p86, %p87
    %p90 = scmp.ne.s32.totalorder %s75, %s89
    %p91 = scmp.eq.s32.totalorder %s18, 0
    %p92 = por %p90, %p91
    %s94 = sadd.s32 %s93, 1
    %p97 = scmp.eq.s32.totalorder %s12, 3
    %p98 = scmp.ne.s32.totalorder %s93, %s95
    %p99 = scmp.eq.s32.totalorder %s12, 0
    %p100 = por %p98, %p99
    %p101 = scmp.ne.s32.totalorder %s93, %s95
    %p102 = scmp.eq.s32.totalorder %s17, 3
    %p103 = por %p101, %p102
    %p104 = scmp.ne.s32.totalorder %s95, %s96
    %p105 = scmp.eq.s32.totalorder %s17, 0
    %p106 = por %p104, %p105
    %p107 = scmp.ne.s32.totalorder %s95, %s96
    %p108 = scmp.eq.s32.totalorder %s18, 3
    %p109 = por %p107, %p108
    %p111 = scmp.ne.s32.totalorder %s96, %s110
    %p112 = scmp.eq.s32.totalorder %s18, 0
    %p113 = por %p111, %p112
    %s115 = sadd.s32 %s114, 1
    %p118 = scmp.eq.s32.totalorder %s12, 3
    %p119 = scmp.ne.s32.totalorder %s114, %s116
    %p120 = scmp.eq.s32.totalorder %s12, 0
    %p121 = por %p119, %p120
    %p122 = scmp.ne.s32.totalorder %s114, %s116
    %p123 = scmp.eq.s32.totalorder %s17, 3
    %p124 = por %p122, %p123
    %p125 = scmp.ne.s32.totalorder %s116, %s117
    %p126 = scmp.eq.s32.totalorder %s17, 0
    %p127 = por %p125, %p126
    %p128 = scmp.ne.s32.totalorder %s116, %s117
    %p129 = scmp.eq.s32.totalorder %s18, 3
    %p130 = por %p128, %p129
    %p132 = scmp.ne.s32.totalorder %s117, %s131
    %p133 = scmp.eq.s32.totalorder %s18, 0
    %p134 = por %p132, %p133
    %s136 = sadd.s32 %s135, 1
    %p139 = scmp.eq.s32.totalorder %s12, 3
    %p140 = scmp.ne.s32.totalorder %s135, %s137
    %p141 = scmp.eq.s32.totalorder %s12, 0
    %p142 = por %p140, %p141
    %p143 = scmp.ne.s32.totalorder %s135, %s137
    %p144 = scmp.eq.s32.totalorder %s17, 3
    %p145 = por %p143, %p144
    %p146 = scmp.ne.s32.totalorder %s137, %s138
    %p147 = scmp.eq.s32.totalorder %s17, 0
    %p148 = por %p146, %p147
    %p149 = scmp.ne.s32.totalorder %s137, %s138
    %p150 = scmp.eq.s32.totalorder %s18, 3
    %p151 = por %p149, %p150
    %p153 = scmp.ne.s32.totalorder %s138, %s152
    %p154 = scmp.eq.s32.totalorder %s18, 0
    %p155 = por %p153, %p154
    %s156 = ssub.s32 %s12, %s19
    %p157 = scmp.eq.s32.totalorder %s156, 0
    %s159 = sadd.s32 %s158, 1
    %s160 = scalar_select %p157, %s158, %s159
    %p163 = pneg %p157
    %p164 = scmp.eq.s32.totalorder %s12, 3
    %p165 = por %p163, %p164
    %p166 = scmp.ne.s32.totalorder %s158, %s161
    %p167 = scmp.eq.s32.totalorder %s12, 0
    %p168 = por %p166, %p167
    %p169 = scmp.ne.s32.totalorder %s158, %s161
    %p170 = scmp.eq.s32.totalorder %s17, 3
    %p171 = por %p169, %p170
    %p172 = scmp.ne.s32.totalorder %s161, %s162
    %p173 = scmp.eq.s32.totalorder %s17, 0
    %p174 = por %p172, %p173
    %p175 = scmp.ne.s32.totalorder %s161, %s162
    %p176 = scmp.eq.s32.totalorder %s18, 3
    %p177 = por %p175, %p176
    %p179 = scmp.ne.s32.totalorder %s162, %s178
    %p180 = scmp.eq.s32.totalorder %s18, 0
    %p181 = por %p179, %p180
    %p182 = scmp.le.s32.totalorder 1, %s12
    %p183 = scmp.lt.s32.totalorder %s12, 5
    %p184 = pnand %p182, %p183
    %p185 = pneg %p184
    // Predicated region
    $region9: #{building_block_forward.9} parent=5 // pred_check
      _
    $region10: #{building_block_forward.9} parent=5 // pred_check_branch
      %187 = sbr.rel (%p184) target = $region12
    $region11: #{building_block_forward.9} parent=5 // pred_region
      %s188 = ssub.s32 %s12, 1
      // Predicated region
      $region13: #{building_block_forward.9} parent=11 // pred_check
        %p189 = pneg %p85
      $region14: #{building_block_forward.9} parent=11 // pred_check_branch
        %191 = sbr.rel (%p189) target = $region16
      $region15: #{building_block_forward.9} parent=11 // pred_region
        _
      $region16: #{building_block_forward.9} parent=11 // pred_fallthru
        _
      // Predicated region
      $region17: #{building_block_forward.9} parent=11 // pred_check
        %p192 = pneg %p106
      $region18: #{building_block_forward.9} parent=11 // pred_check_branch
        %194 = sbr.rel (%p192) target = $region20
      $region19: #{building_block_forward.9} parent=11 // pred_region
        _
      $region20: #{building_block_forward.9} parent=11 // pred_fallthru
        _
      // Predicated region
      $region21: #{building_block_forward.9} parent=11 // pred_check
        %p195 = pneg %p127
      $region22: #{building_block_forward.9} parent=11 // pred_check_branch
        %197 = sbr.rel (%p195) target = $region24
      $region23: #{building_block_forward.9} parent=11 // pred_region
        _
      $region24: #{building_block_forward.9} parent=11 // pred_fallthru
        _
      // Predicated region
      $region25: #{building_block_forward.9} parent=11 // pred_check
        %p198 = pneg %p148
      $region26: #{building_block_forward.9} parent=11 // pred_check_branch
        %200 = sbr.rel (%p198) target = $region28
      $region27: #{building_block_forward.9} parent=11 // pred_region
        _
      $region28: #{building_block_forward.9} parent=11 // pred_fallthru
        _
    $region12: #{building_block_forward.9} parent=5 // pred_fallthru
      _
    %p201 = scmp.lt.s32.totalorder %s12, 4
    // Predicated region
    $region29: #{building_block_forward.9} parent=5 // pred_check
      %p202 = pneg %p201
    $region30: #{building_block_forward.9} parent=5 // pred_check_branch
      %204 = sbr.rel (%p202) target = $region32
    $region31: #{building_block_forward.9} parent=5 // pred_region
      // Predicated region
      $region33: #{building_block_forward.9} parent=31 // pred_check
        %p205 = pneg %p32
      $region34: #{building_block_forward.9} parent=31 // pred_check_branch
        %207 = sbr.rel (%p205) target = $region36
      $region35: #{building_block_forward.9} parent=31 // pred_region
        %s208 = smul.u32 8, %s12
        %p209 = scmp.lt.s32.totalorder %s208, 31
        %s210 = scalar_select %p209, %s208, 31
        %s211 = smul.addr %s210, 8
        %s212 = scalar_lea.vmem %s0, %s211
        %s213 = smul.u32 8, %s12
      $region36: #{building_block_forward.9} parent=31 // pred_fallthru
        _
      // Predicated region
      $region37: #{building_block_forward.9} parent=31 // pred_check
        %p214 = pneg %p58
      $region38: #{building_block_forward.9} parent=31 // pred_check_branch
        %216 = sbr.rel (%p214) target = $region40
      $region39: #{building_block_forward.9} parent=31 // pred_region
        %s217 = smul.u32 8, %s12
        %p218 = scmp.lt.s32.totalorder %s217, 31
        %s219 = scalar_select %p218, %s217, 31
        %s220 = scalar_lea.vmem %s1, %s219
        %s221 = smul.u32 8, %s12
      $region40: #{building_block_forward.9} parent=31 // pred_fallthru
        _
    $region32: #{building_block_forward.9} parent=5 // pred_fallthru
      _
    %p222 = scmp.le.s32.totalorder 1, %s12
    %p223 = scmp.lt.s32.totalorder %s12, 5
    %p224 = pnand %p222, %p223
    %p225 = pneg %p224
    // Predicated region
    $region41: #{building_block_forward.9} parent=5 // pred_check
      _
    $region42: #{building_block_forward.9} parent=5 // pred_check_branch
      %227 = sbr.rel (%p224) target = $region44
    $region43: #{building_block_forward.9} parent=5 // pred_region
      %s228 = ssub.s32 %s12, 1
      %s229 = smul.u32 8, %s17
      %p230 = scmp.lt.s32.totalorder %s229, 31
      %s231 = scalar_select %p230, %s229, 31
      %s232 = smul.addr %s231, 8
      %s233 = scalar_lea.vmem %s0, %s232
      %p234 = pneg %p38
      %p235 = pneg %p35
      %s236 = smul.u32 8, %s17
      %p237 = scmp.lt.s32.totalorder %s236, 31
      %s238 = scalar_select %p237, %s236, 31
      %s239 = scalar_lea.vmem %s1, %s238
      %p240 = pneg %p64
      %p241 = pneg %p61
      %p242 = pneg %p85
      %p243 = pneg %p82
      %p244 = pneg %p106
      %p245 = pneg %p103
      %p246 = pneg %p127
      %p247 = pneg %p124
      %p248 = pneg %p148
      %p249 = pneg %p145
      %p250 = pneg %p174
      %p251 = pneg %p171
      %s252 = smul.u32 8, %s17
      %p253 = scmp.lt.s32.totalorder %s252, 31
      %s254 = scalar_select %p253, %s252, 31
      %s255 = smul.addr %s254, 8
      %s256 = scalar_lea.vmem %s6, %s255
      %s257 = smul.u32 8, %s17
      %p258 = scmp.lt.s32.totalorder %s257, 31
      %s259 = scalar_select %p258, %s257, 31
      %s260 = smul.addr %s259, 8
      %s261 = scalar_lea.vmem %s0, %s260
      %s262 = smul.u32 8, %s17
      %s263 = smul.u32 8, %s17
      %p264 = scmp.lt.s32.totalorder %s263, 31
      %s265 = scalar_select %p264, %s263, 31
      %s266 = scalar_lea.vmem %s1, %s265
      %s267 = smul.u32 8, %s17
      %s268 = smul.u32 8, %s17
      %p269 = scmp.lt.s32.totalorder %s268, 31
      %s270 = scalar_select %p269, %s268, 31
      %s271 = smul.addr %s270, 8
      %s272 = scalar_lea.vmem %s6, %s271
      %s273 = smul.u32 8, %s17
      %v274 = vld [vmem:[%s261] sm:$0xff]
      %v275 = vld [vmem:[%s261 + $0x8] sm:$0xff]
      %v276 = vld [vmem:[%s261 + $0x10] sm:$0xff]
      %v277 = vld [vmem:[%s261 + $0x18] sm:$0xff]
      %v278 = vld [vmem:[%s261 + $0x20] sm:$0xff]
      %v279 = vld [vmem:[%s261 + $0x28] sm:$0xff]
      %v280 = vld [vmem:[%s261 + $0x30] sm:$0xff]
      %v281 = vld [vmem:[%s261 + $0x38] sm:$0xff]
      %v282 = vld [vmem:[%s266] sm:$0x1]
      %v283 = vld [vmem:[%s266 + $0x1] sm:$0x1]
      %v284 = vld [vmem:[%s266 + $0x2] sm:$0x1]
      %v285 = vld [vmem:[%s266 + $0x3] sm:$0x1]
      %v286 = vld [vmem:[%s266 + $0x4] sm:$0x1]
      %v287 = vld [vmem:[%s266 + $0x5] sm:$0x1]
      %v288 = vld [vmem:[%s266 + $0x6] sm:$0x1]
      %v289 = vld [vmem:[%s266 + $0x7] sm:$0x1]
      %v298 = vperm.slane %v282, 0
      %v299 = vperm.slane %v283, 0
      %v300 = vperm.slane %v284, 0
      %v301 = vperm.slane %v285, 0
      %v302 = vperm.slane %v286, 0
      %v303 = vperm.slane %v287, 0
      %v304 = vperm.slane %v288, 0
      %v305 = vperm.slane %v289, 0
      %v314 = vmul.f32 %v274, %v298
      %v315 = vmul.f32 %v275, %v299
      %v316 = vmul.f32 %v276, %v300
      %v317 = vmul.f32 %v277, %v301
      %v318 = vmul.f32 %v278, %v302
      %v319 = vmul.f32 %v279, %v303
      %v320 = vmul.f32 %v280, %v304
      %v321 = vmul.f32 %v281, %v305
      %v322 = vld [vmem:[%s2] sm:$0xff]
      %v323 = vld [vmem:[%s2 + $0x8] sm:$0xff]
      %v324 = vld [vmem:[%s3] sm:$0x1]
      %v326 = vperm.slane %v324, 0
      %vm328 = vcmask 130048
      %v330 = vsel %vm328, %v314, 0
      %v333 = vsel %vm328, %v315, 0
      %v336 = vsel %vm328, %v316, 0
      %v339 = vsel %vm328, %v317, 0
      %v342 = vsel %vm328, %v318, 0
      %v345 = vsel %vm328, %v319, 0
      %v348 = vsel %vm328, %v320, 0
      %v351 = vsel %vm328, %v321, 0
      %353 = vmatpush.msra.mxu0 0.0
      %354 = vmatpush.msra.mxu0 0.0
      %355 = vmatpush.msra.mxu0 0.0
      %356 = vmatpush.msra.mxu0 0.0
      %357 = vmatpush.msra.mxu0 0.0
      %358 = vmatpush.msra.mxu0 0.0
      %359 = vmatpush.msra.mxu0 0.0
      %360 = vmatpush.msra.mxu0 0.0
      %361 = vmatpush.msra.mxu0 0.0
      %362 = vmatpush.msra.mxu0 0.0
      %363 = vmatpush.msra.mxu0 0.0
      %364 = vmatpush.msra.mxu0 0.0
      %365 = vmatpush.msra.mxu0 0.0
      %366 = vmatpush.msra.mxu0 0.0
      %367 = vmatpush.msra.mxu0 %v323
      %368 = vmatpush.msra.mxu0 %v322
      %369 = vmatmul.f32.gmra.mxu0 %v330
      %v370 = vpop.f32.mrf.mxu0
      %v371 = vadd.f32 %v326, %v370
      %372 = vmatmul.f32.gmra.mxu0 %v333
      %v373 = vpop.f32.mrf.mxu0
      %v374 = vadd.f32 %v326, %v373
      %375 = vmatmul.f32.gmra.mxu0 %v336
      %v376 = vpop.f32.mrf.mxu0
      %v377 = vadd.f32 %v326, %v376
      %378 = vmatmul.f32.gmra.mxu0 %v339
      %v379 = vpop.f32.mrf.mxu0
      %v380 = vadd.f32 %v326, %v379
      %381 = vmatmul.f32.gmra.mxu0 %v342
      %v382 = vpop.f32.mrf.mxu0
      %v383 = vadd.f32 %v326, %v382
      %384 = vmatmul.f32.gmra.mxu0 %v345
      %v385 = vpop.f32.mrf.mxu0
      %v386 = vadd.f32 %v326, %v385
      %387 = vmatmul.f32.gmra.mxu0 %v348
      %v388 = vpop.f32.mrf.mxu0
      %v389 = vadd.f32 %v326, %v388
      %390 = vmatmul.f32.gmra.mxu0 %v351
      %v391 = vpop.f32.mrf.mxu0
      %v392 = vadd.f32 %v326, %v391
      %393 = vdwg.mxu0
      %v394 = vmul.f32 %v371, 0.5
      %v395 = vmul.f32 %v374, 0.5
      %v396 = vmul.f32 %v377, 0.5
      %v397 = vmul.f32 %v380, 0.5
      %v398 = vmul.f32 %v383, 0.5
      %v399 = vmul.f32 %v386, 0.5
      %v400 = vmul.f32 %v389, 0.5
      %v401 = vmul.f32 %v392, 0.5
      %403 = vrot.lane.b32.xlu0 %v371, 112
      %v404 = vpop.permute.xlu0 %403
      %vm405 = vcmask 31744
      %v407 = vsel %vm405, %v394, 0
      %v409 = vsel %vm405, %v404, 0
      %411 = vmatpush.xpose.msra.mxu0 0.0
      %412 = vmatpush.xpose.msra.mxu0 0.0
      %413 = vmatpush.xpose.msra.mxu0 0.0
      %414 = vmatpush.xpose.msra.mxu0 0.0
      %415 = vmatpush.xpose.msra.mxu0 0.0
      %416 = vmatpush.xpose.msra.mxu0 0.0
      %417 = vmatpush.xpose.msra.mxu0 0.0
      %418 = vmatpush.xpose.msra.mxu0 0.0
      %419 = vmatpush.xpose.msra.mxu0 0.0
      %420 = vmatpush.xpose.msra.mxu0 0.0
      %421 = vmatpush.xpose.msra.mxu0 0.0
      %422 = vmatpush.xpose.msra.mxu0 0.0
      %423 = vmatpush.xpose.msra.mxu0 0.0
      %424 = vmatpush.xpose.msra.mxu0 0.0
      %425 = vmatpush.xpose.msra.mxu0 0.0
      %426 = vmatpush.xpose.msra.mxu0 %v409
      %427 = vmatmul.f32.gmra.mxu0 %v407
      %v428 = vpop.f32.mrf.mxu0
      %v429 = vadd.f32 0.0, %v428
      %430 = vdwg.mxu0
      %432 = vrot.lane.b32.xlu0 %v374, 112
      %v433 = vpop.permute.xlu0 %432
      %v435 = vsel %vm405, %v395, 0
      %v437 = vsel %vm405, %v433, 0
      %439 = vmatpush.xpose.msra.mxu0 0.0
      %440 = vmatpush.xpose.msra.mxu0 0.0
      %441 = vmatpush.xpose.msra.mxu0 0.0
      %442 = vmatpush.xpose.msra.mxu0 0.0
      %443 = vmatpush.xpose.msra.mxu0 0.0
      %444 = vmatpush.xpose.msra.mxu0 0.0
      %445 = vmatpush.xpose.msra.mxu0 0.0
      %446 = vmatpush.xpose.msra.mxu0 0.0
      %447 = vmatpush.xpose.msra.mxu0 0.0
      %448 = vmatpush.xpose.msra.mxu0 0.0
      %449 = vmatpush.xpose.msra.mxu0 0.0
      %450 = vmatpush.xpose.msra.mxu0 0.0
      %451 = vmatpush.xpose.msra.mxu0 0.0
      %452 = vmatpush.xpose.msra.mxu0 0.0
      %453 = vmatpush.xpose.msra.mxu0 0.0
      %454 = vmatpush.xpose.msra.mxu0 %v437
      %455 = vmatmul.f32.gmra.mxu0 %v435
      %v456 = vpop.f32.mrf.mxu0
      %v457 = vadd.f32 0.0, %v456
      %458 = vdwg.mxu0
      %460 = vrot.lane.b32.xlu0 %v377, 112
      %v461 = vpop.permute.xlu0 %460
      %v463 = vsel %vm405, %v396, 0
      %v465 = vsel %vm405, %v461, 0
      %467 = vmatpush.xpose.msra.mxu0 0.0
      %468 = vmatpush.xpose.msra.mxu0 0.0
      %469 = vmatpush.xpose.msra.mxu0 0.0
      %470 = vmatpush.xpose.msra.mxu0 0.0
      %471 = vmatpush.xpose.msra.mxu0 0.0
      %472 = vmatpush.xpose.msra.mxu0 0.0
      %473 = vmatpush.xpose.msra.mxu0 0.0
      %474 = vmatpush.xpose.msra.mxu0 0.0
      %475 = vmatpush.xpose.msra.mxu0 0.0
      %476 = vmatpush.xpose.msra.mxu0 0.0
      %477 = vmatpush.xpose.msra.mxu0 0.0
      %478 = vmatpush.xpose.msra.mxu0 0.0
      %479 = vmatpush.xpose.msra.mxu0 0.0
      %480 = vmatpush.xpose.msra.mxu0 0.0
      %481 = vmatpush.xpose.msra.mxu0 0.0
      %482 = vmatpush.xpose.msra.mxu0 %v465
      %483 = vmatmul.f32.gmra.mxu0 %v463
      %v484 = vpop.f32.mrf.mxu0
      %v485 = vadd.f32 0.0, %v484
      %486 = vdwg.mxu0
      %488 = vrot.lane.b32.xlu0 %v380, 112
      %v489 = vpop.permute.xlu0 %488
      %v491 = vsel %vm405, %v397, 0
      %v493 = vsel %vm405, %v489, 0
      %495 = vmatpush.xpose.msra.mxu0 0.0
      %496 = vmatpush.xpose.msra.mxu0 0.0
      %497 = vmatpush.xpose.msra.mxu0 0.0
      %498 = vmatpush.xpose.msra.mxu0 0.0
      %499 = vmatpush.xpose.msra.mxu0 0.0
      %500 = vmatpush.xpose.msra.mxu0 0.0
      %501 = vmatpush.xpose.msra.mxu0 0.0
      %502 = vmatpush.xpose.msra.mxu0 0.0
      %503 = vmatpush.xpose.msra.mxu0 0.0
      %504 = vmatpush.xpose.msra.mxu0 0.0
      %505 = vmatpush.xpose.msra.mxu0 0.0
      %506 = vmatpush.xpose.msra.mxu0 0.0
      %507 = vmatpush.xpose.msra.mxu0 0.0
      %508 = vmatpush.xpose.msra.mxu0 0.0
      %509 = vmatpush.xpose.msra.mxu0 0.0
      %510 = vmatpush.xpose.msra.mxu0 %v493
      %511 = vmatmul.f32.gmra.mxu0 %v491
      %v512 = vpop.f32.mrf.mxu0
      %v513 = vadd.f32 0.0, %v512
      %514 = vdwg.mxu0
      %516 = vrot.lane.b32.xlu0 %v383, 112
      %v517 = vpop.permute.xlu0 %516
      %v519 = vsel %vm405, %v398, 0
      %v521 = vsel %vm405, %v517, 0
      %523 = vmatpush.xpose.msra.mxu0 0.0
      %524 = vmatpush.xpose.msra.mxu0 0.0
      %525 = vmatpush.xpose.msra.mxu0 0.0
      %526 = vmatpush.xpose.msra.mxu0 0.0
      %527 = vmatpush.xpose.msra.mxu0 0.0
      %528 = vmatpush.xpose.msra.mxu0 0.0
      %529 = vmatpush.xpose.msra.mxu0 0.0
      %530 = vmatpush.xpose.msra.mxu0 0.0
      %531 = vmatpush.xpose.msra.mxu0 0.0
      %532 = vmatpush.xpose.msra.mxu0 0.0
      %533 = vmatpush.xpose.msra.mxu0 0.0
      %534 = vmatpush.xpose.msra.mxu0 0.0
      %535 = vmatpush.xpose.msra.mxu0 0.0
      %536 = vmatpush.xpose.msra.mxu0 0.0
      %537 = vmatpush.xpose.msra.mxu0 0.0
      %538 = vmatpush.xpose.msra.mxu0 %v521
      %539 = vmatmul.f32.gmra.mxu0 %v519
      %v540 = vpop.f32.mrf.mxu0
      %v541 = vadd.f32 0.0, %v540
      %542 = vdwg.mxu0
      %544 = vrot.lane.b32.xlu0 %v386, 112
      %v545 = vpop.permute.xlu0 %544
      %v547 = vsel %vm405, %v399, 0
      %v549 = vsel %vm405, %v545, 0
      %551 = vmatpush.xpose.msra.mxu0 0.0
      %552 = vmatpush.xpose.msra.mxu0 0.0
      %553 = vmatpush.xpose.msra.mxu0 0.0
      %554 = vmatpush.xpose.msra.mxu0 0.0
      %555 = vmatpush.xpose.msra.mxu0 0.0
      %556 = vmatpush.xpose.msra.mxu0 0.0
      %557 = vmatpush.xpose.msra.mxu0 0.0
      %558 = vmatpush.xpose.msra.mxu0 0.0
      %559 = vmatpush.xpose.msra.mxu0 0.0
      %560 = vmatpush.xpose.msra.mxu0 0.0
      %561 = vmatpush.xpose.msra.mxu0 0.0
      %562 = vmatpush.xpose.msra.mxu0 0.0
      %563 = vmatpush.xpose.msra.mxu0 0.0
      %564 = vmatpush.xpose.msra.mxu0 0.0
      %565 = vmatpush.xpose.msra.mxu0 0.0
      %566 = vmatpush.xpose.msra.mxu0 %v549
      %567 = vmatmul.f32.gmra.mxu0 %v547
      %v568 = vpop.f32.mrf.mxu0
      %v569 = vadd.f32 0.0, %v568
      %570 = vdwg.mxu0
      %572 = vrot.lane.b32.xlu0 %v389, 112
      %v573 = vpop.permute.xlu0 %572
      %v575 = vsel %vm405, %v400, 0
      %v577 = vsel %vm405, %v573, 0
      %579 = vmatpush.xpose.msra.mxu0 0.0
      %580 = vmatpush.xpose.msra.mxu0 0.0
      %581 = vmatpush.xpose.msra.mxu0 0.0
      %582 = vmatpush.xpose.msra.mxu0 0.0
      %583 = vmatpush.xpose.msra.mxu0 0.0
      %584 = vmatpush.xpose.msra.mxu0 0.0
      %585 = vmatpush.xpose.msra.mxu0 0.0
      %586 = vmatpush.xpose.msra.mxu0 0.0
      %587 = vmatpush.xpose.msra.mxu0 0.0
      %588 = vmatpush.xpose.msra.mxu0 0.0
      %589 = vmatpush.xpose.msra.mxu0 0.0
      %590 = vmatpush.xpose.msra.mxu0 0.0
      %591 = vmatpush.xpose.msra.mxu0 0.0
      %592 = vmatpush.xpose.msra.mxu0 0.0
      %593 = vmatpush.xpose.msra.mxu0 0.0
      %594 = vmatpush.xpose.msra.mxu0 %v577
      %595 = vmatmul.f32.gmra.mxu0 %v575
      %v596 = vpop.f32.mrf.mxu0
      %v597 = vadd.f32 0.0, %v596
      %598 = vdwg.mxu0
      %600 = vrot.lane.b32.xlu0 %v392, 112
      %v601 = vpop.permute.xlu0 %600
      %v603 = vsel %vm405, %v401, 0
      %v605 = vsel %vm405, %v601, 0
      %607 = vmatpush.xpose.msra.mxu0 0.0
      %608 = vmatpush.xpose.msra.mxu0 0.0
      %609 = vmatpush.xpose.msra.mxu0 0.0
      %610 = vmatpush.xpose.msra.mxu0 0.0
      %611 = vmatpush.xpose.msra.mxu0 0.0
      %612 = vmatpush.xpose.msra.mxu0 0.0
      %613 = vmatpush.xpose.msra.mxu0 0.0
      %614 = vmatpush.xpose.msra.mxu0 0.0
      %615 = vmatpush.xpose.msra.mxu0 0.0
      %616 = vmatpush.xpose.msra.mxu0 0.0
      %617 = vmatpush.xpose.msra.mxu0 0.0
      %618 = vmatpush.xpose.msra.mxu0 0.0
      %619 = vmatpush.xpose.msra.mxu0 0.0
      %620 = vmatpush.xpose.msra.mxu0 0.0
      %621 = vmatpush.xpose.msra.mxu0 0.0
      %622 = vmatpush.xpose.msra.mxu0 %v605
      %623 = vmatmul.f32.gmra.mxu0 %v603
      %v624 = vpop.f32.mrf.mxu0
      %v625 = vadd.f32 0.0, %v624
      %626 = vdwg.mxu0
      %vm627 = vcmask 64512
      %v628 = vsel %vm627, %v429, -inf
      %629 = vmax.xlane.f32.xlu0 %v628
      %v630 = vpop.xlane.xlu0 %629
      %v631 = vsel %vm627, %v457, -inf
      %632 = vmax.xlane.f32.xlu0 %v631
      %v633 = vpop.xlane.xlu0 %632
      %v634 = vsel %vm627, %v485, -inf
      %635 = vmax.xlane.f32.xlu0 %v634
      %v636 = vpop.xlane.xlu0 %635
      %v637 = vsel %vm627, %v513, -inf
      %638 = vmax.xlane.f32.xlu0 %v637
      %v639 = vpop.xlane.xlu0 %638
      %v640 = vsel %vm627, %v541, -inf
      %641 = vmax.xlane.f32.xlu0 %v640
      %v642 = vpop.xlane.xlu0 %641
      %v643 = vsel %vm627, %v569, -inf
      %644 = vmax.xlane.f32.xlu0 %v643
      %v645 = vpop.xlane.xlu0 %644
      %v646 = vsel %vm627, %v597, -inf
      %647 = vmax.xlane.f32.xlu0 %v646
      %v648 = vpop.xlane.xlu0 %647
      %v649 = vsel %vm627, %v625, -inf
      %650 = vmax.xlane.f32.xlu0 %v649
      %v651 = vpop.xlane.xlu0 %650
      %v652 = vsub.f32 %v429, %v630
      %v653 = vsub.f32 %v457, %v633
      %v654 = vsub.f32 %v485, %v636
      %v655 = vsub.f32 %v513, %v639
      %v656 = vsub.f32 %v541, %v642
      %v657 = vsub.f32 %v569, %v645
      %v658 = vsub.f32 %v597, %v648
      %v659 = vsub.f32 %v625, %v651
      %v660 = vmul.f32 %v652, 1.442695
      %v661 = vpow.pop %v660
      %v662 = vmul.f32 %v653, 1.442695
      %v663 = vpow.pop %v662
      %v664 = vmul.f32 %v654, 1.442695
      %v665 = vpow.pop %v664
      %v666 = vmul.f32 %v655, 1.442695
      %v667 = vpow.pop %v666
      %v668 = vmul.f32 %v656, 1.442695
      %v669 = vpow.pop %v668
      %v670 = vmul.f32 %v657, 1.442695
      %v671 = vpow.pop %v670
      %v672 = vmul.f32 %v658, 1.442695
      %v673 = vpow.pop %v672
      %v674 = vmul.f32 %v659, 1.442695
      %v675 = vpow.pop %v674
      %v676 = vsel %vm627, %v661, 0.0
      %677 = vadd.xlane.f32.xlu0 %v676
      %v678 = vpop.xlane.xlu0 %677
      %v679 = vsel %vm627, %v663, 0.0
      %680 = vadd.xlane.f32.xlu0 %v679
      %v681 = vpop.xlane.xlu0 %680
      %v682 = vsel %vm627, %v665, 0.0
      %683 = vadd.xlane.f32.xlu0 %v682
      %v684 = vpop.xlane.xlu0 %683
      %v685 = vsel %vm627, %v667, 0.0
      %686 = vadd.xlane.f32.xlu0 %v685
      %v687 = vpop.xlane.xlu0 %686
      %v688 = vsel %vm627, %v669, 0.0
      %689 = vadd.xlane.f32.xlu0 %v688
      %v690 = vpop.xlane.xlu0 %689
      %v691 = vsel %vm627, %v671, 0.0
      %692 = vadd.xlane.f32.xlu0 %v691
      %v693 = vpop.xlane.xlu0 %692
      %v694 = vsel %vm627, %v673, 0.0
      %695 = vadd.xlane.f32.xlu0 %v694
      %v696 = vpop.xlane.xlu0 %695
      %v697 = vsel %vm627, %v675, 0.0
      %698 = vadd.xlane.f32.xlu0 %v697
      %v699 = vpop.xlane.xlu0 %698
      %v700 = vrcp.pop %v678
      %v701 = vmul.f32 %v678, %v700
      %v702 = vsub.f32 1.0, %v701
      %v703 = vmul.f32 %v700, %v702
      %v704 = vadd.f32 %v700, %v703
      %vm705 = vweird.f32 %v678
      %vm706 = vweird.f32 %v700
      %vm707 = vmor %vm705, %vm706
      %v708 = vsel %vm707, %v700, %v704
      %v709 = vand.u32 2147483647, %v678
      %vm710 = vcmp.eq.f32.partialorder %v709, 8.507059e+37
      %v711 = vand.u32 %v678, 2147483648
      %v712 = vor.u32 1.1754944e-38, %v711
      %v713 = vsel %vm710, %v712, %v708
      %v714 = vmul.f32 %v661, %v713
      %v715 = vrcp.pop %v681
      %v716 = vmul.f32 %v681, %v715
      %v717 = vsub.f32 1.0, %v716
      %v718 = vmul.f32 %v715, %v717
      %v719 = vadd.f32 %v715, %v718
      %vm720 = vweird.f32 %v681
      %vm721 = vweird.f32 %v715
      %vm722 = vmor %vm720, %vm721
      %v723 = vsel %vm722, %v715, %v719
      %v724 = vand.u32 2147483647, %v681
      %vm725 = vcmp.eq.f32.partialorder %v724, 8.507059e+37
      %v726 = vand.u32 %v681, 2147483648
      %v727 = vor.u32 1.1754944e-38, %v726
      %v728 = vsel %vm725, %v727, %v723
      %v729 = vmul.f32 %v663, %v728
      %v730 = vrcp.pop %v684
      %v731 = vmul.f32 %v684, %v730
      %v732 = vsub.f32 1.0, %v731
      %v733 = vmul.f32 %v730, %v732
      %v734 = vadd.f32 %v730, %v733
      %vm735 = vweird.f32 %v684
      %vm736 = vweird.f32 %v730
      %vm737 = vmor %vm735, %vm736
      %v738 = vsel %vm737, %v730, %v734
      %v739 = vand.u32 2147483647, %v684
      %vm740 = vcmp.eq.f32.partialorder %v739, 8.507059e+37
      %v741 = vand.u32 %v684, 2147483648
      %v742 = vor.u32 1.1754944e-38, %v741
      %v743 = vsel %vm740, %v742, %v738
      %v744 = vmul.f32 %v665, %v743
      %v745 = vrcp.pop %v687
      %v746 = vmul.f32 %v687, %v745
      %v747 = vsub.f32 1.0, %v746
      %v748 = vmul.f32 %v745, %v747
      %v749 = vadd.f32 %v745, %v748
      %vm750 = vweird.f32 %v687
      %vm751 = vweird.f32 %v745
      %vm752 = vmor %vm750, %vm751
      %v753 = vsel %vm752, %v745, %v749
      %v754 = vand.u32 2147483647, %v687
      %vm755 = vcmp.eq.f32.partialorder %v754, 8.507059e+37
      %v756 = vand.u32 %v687, 2147483648
      %v757 = vor.u32 1.1754944e-38, %v756
      %v758 = vsel %vm755, %v757, %v753
      %v759 = vmul.f32 %v667, %v758
      %v760 = vrcp.pop %v690
      %v761 = vmul.f32 %v690, %v760
      %v762 = vsub.f32 1.0, %v761
      %v763 = vmul.f32 %v760, %v762
      %v764 = vadd.f32 %v760, %v763
      %vm765 = vweird.f32 %v690
      %vm766 = vweird.f32 %v760
      %vm767 = vmor %vm765, %vm766
      %v768 = vsel %vm767, %v760, %v764
      %v769 = vand.u32 2147483647, %v690
      %vm770 = vcmp.eq.f32.partialorder %v769, 8.507059e+37
      %v771 = vand.u32 %v690, 2147483648
      %v772 = vor.u32 1.1754944e-38, %v771
      %v773 = vsel %vm770, %v772, %v768
      %v774 = vmul.f32 %v669, %v773
      %v775 = vrcp.pop %v693
      %v776 = vmul.f32 %v693, %v775
      %v777 = vsub.f32 1.0, %v776
      %v778 = vmul.f32 %v775, %v777
      %v779 = vadd.f32 %v775, %v778
      %vm780 = vweird.f32 %v693
      %vm781 = vweird.f32 %v775
      %vm782 = vmor %vm780, %vm781
      %v783 = vsel %vm782, %v775, %v779
      %v784 = vand.u32 2147483647, %v693
      %vm785 = vcmp.eq.f32.partialorder %v784, 8.507059e+37
      %v786 = vand.u32 %v693, 2147483648
      %v787 = vor.u32 1.1754944e-38, %v786
      %v788 = vsel %vm785, %v787, %v783
      %v789 = vmul.f32 %v671, %v788
      %v790 = vrcp.pop %v696
      %v791 = vmul.f32 %v696, %v790
      %v792 = vsub.f32 1.0, %v791
      %v793 = vmul.f32 %v790, %v792
      %v794 = vadd.f32 %v790, %v793
      %vm795 = vweird.f32 %v696
      %vm796 = vweird.f32 %v790
      %vm797 = vmor %vm795, %vm796
      %v798 = vsel %vm797, %v790, %v794
      %v799 = vand.u32 2147483647, %v696
      %vm800 = vcmp.eq.f32.partialorder %v799, 8.507059e+37
      %v801 = vand.u32 %v696, 2147483648
      %v802 = vor.u32 1.1754944e-38, %v801
      %v803 = vsel %vm800, %v802, %v798
      %v804 = vmul.f32 %v673, %v803
      %v805 = vrcp.pop %v699
      %v806 = vmul.f32 %v699, %v805
      %v807 = vsub.f32 1.0, %v806
      %v808 = vmul.f32 %v805, %v807
      %v809 = vadd.f32 %v805, %v808
      %vm810 = vweird.f32 %v699
      %vm811 = vweird.f32 %v805
      %vm812 = vmor %vm810, %vm811
      %v813 = vsel %vm812, %v805, %v809
      %v814 = vand.u32 2147483647, %v699
      %vm815 = vcmp.eq.f32.partialorder %v814, 8.507059e+37
      %v816 = vand.u32 %v699, 2147483648
      %v817 = vor.u32 1.1754944e-38, %v816
      %v818 = vsel %vm815, %v817, %v813
      %v819 = vmul.f32 %v675, %v818
      %820 = vrot.lane.b32.xlu0 %v371, 96
      %v821 = vpop.permute.xlu0 %820
      %v824 = vsel %vm627, %v714, 0
      %826 = vmatpush.msra.mxu0 0.0
      %827 = vmatpush.msra.mxu0 0.0
      %828 = vmatpush.msra.mxu0 0.0
      %829 = vmatpush.msra.mxu0 0.0
      %830 = vmatpush.msra.mxu0 0.0
      %831 = vmatpush.msra.mxu0 0.0
      %832 = vmatpush.msra.mxu0 0.0
      %833 = vmatpush.msra.mxu0 0.0
      %834 = vmatpush.msra.mxu0 0.0
      %835 = vmatpush.msra.mxu0 0.0
      %836 = vmatpush.msra.mxu0 0.0
      %837 = vmatpush.msra.mxu0 0.0
      %838 = vmatpush.msra.mxu0 0.0
      %839 = vmatpush.msra.mxu0 0.0
      %840 = vmatpush.msra.mxu0 0.0
      %841 = vmatpush.msra.mxu0 %v821
      %842 = vmatmul.f32.gmra.mxu0 %v824
      %v843 = vpop.f32.mrf.mxu0
      %v844 = vadd.f32 0.0, %v843
      %845 = vdwg.mxu0
      %846 = vrot.lane.b32.xlu0 %v374, 96
      %v847 = vpop.permute.xlu0 %846
      %v850 = vsel %vm627, %v729, 0
      %852 = vmatpush.msra.mxu0 0.0
      %853 = vmatpush.msra.mxu0 0.0
      %854 = vmatpush.msra.mxu0 0.0
      %855 = vmatpush.msra.mxu0 0.0
      %856 = vmatpush.msra.mxu0 0.0
      %857 = vmatpush.msra.mxu0 0.0
      %858 = vmatpush.msra.mxu0 0.0
      %859 = vmatpush.msra.mxu0 0.0
      %860 = vmatpush.msra.mxu0 0.0
      %861 = vmatpush.msra.mxu0 0.0
      %862 = vmatpush.msra.mxu0 0.0
      %863 = vmatpush.msra.mxu0 0.0
      %864 = vmatpush.msra.mxu0 0.0
      %865 = vmatpush.msra.mxu0 0.0
      %866 = vmatpush.msra.mxu0 0.0
      %867 = vmatpush.msra.mxu0 %v847
      %868 = vmatmul.f32.gmra.mxu0 %v850
      %v869 = vpop.f32.mrf.mxu0
      %v870 = vadd.f32 0.0, %v869
      %871 = vdwg.mxu0
      %872 = vrot.lane.b32.xlu0 %v377, 96
      %v873 = vpop.permute.xlu0 %872
      %v876 = vsel %vm627, %v744, 0
      %878 = vmatpush.msra.mxu0 0.0
      %879 = vmatpush.msra.mxu0 0.0
      %880 = vmatpush.msra.mxu0 0.0
      %881 = vmatpush.msra.mxu0 0.0
      %882 = vmatpush.msra.mxu0 0.0
      %883 = vmatpush.msra.mxu0 0.0
      %884 = vmatpush.msra.mxu0 0.0
      %885 = vmatpush.msra.mxu0 0.0
      %886 = vmatpush.msra.mxu0 0.0
      %887 = vmatpush.msra.mxu0 0.0
      %888 = vmatpush.msra.mxu0 0.0
      %889 = vmatpush.msra.mxu0 0.0
      %890 = vmatpush.msra.mxu0 0.0
      %891 = vmatpush.msra.mxu0 0.0
      %892 = vmatpush.msra.mxu0 0.0
      %893 = vmatpush.msra.mxu0 %v873
      %894 = vmatmul.f32.gmra.mxu0 %v876
      %v895 = vpop.f32.mrf.mxu0
      %v896 = vadd.f32 0.0, %v895
      %897 = vdwg.mxu0
      %898 = vrot.lane.b32.xlu0 %v380, 96
      %v899 = vpop.permute.xlu0 %898
      %v902 = vsel %vm627, %v759, 0
      %904 = vmatpush.msra.mxu0 0.0
      %905 = vmatpush.msra.mxu0 0.0
      %906 = vmatpush.msra.mxu0 0.0
      %907 = vmatpush.msra.mxu0 0.0
      %908 = vmatpush.msra.mxu0 0.0
      %909 = vmatpush.msra.mxu0 0.0
      %910 = vmatpush.msra.mxu0 0.0
      %911 = vmatpush.msra.mxu0 0.0
      %912 = vmatpush.msra.mxu0 0.0
      %913 = vmatpush.msra.mxu0 0.0
      %914 = vmatpush.msra.mxu0 0.0
      %915 = vmatpush.msra.mxu0 0.0
      %916 = vmatpush.msra.mxu0 0.0
      %917 = vmatpush.msra.mxu0 0.0
      %918 = vmatpush.msra.mxu0 0.0
      %919 = vmatpush.msra.mxu0 %v899
      %920 = vmatmul.f32.gmra.mxu0 %v902
      %v921 = vpop.f32.mrf.mxu0
      %v922 = vadd.f32 0.0, %v921
      %923 = vdwg.mxu0
      %924 = vrot.lane.b32.xlu0 %v383, 96
      %v925 = vpop.permute.xlu0 %924
      %v928 = vsel %vm627, %v774, 0
      %930 = vmatpush.msra.mxu0 0.0
      %931 = vmatpush.msra.mxu0 0.0
      %932 = vmatpush.msra.mxu0 0.0
      %933 = vmatpush.msra.mxu0 0.0
      %934 = vmatpush.msra.mxu0 0.0
      %935 = vmatpush.msra.mxu0 0.0
      %936 = vmatpush.msra.mxu0 0.0
      %937 = vmatpush.msra.mxu0 0.0
      %938 = vmatpush.msra.mxu0 0.0
      %939 = vmatpush.msra.mxu0 0.0
      %940 = vmatpush.msra.mxu0 0.0
      %941 = vmatpush.msra.mxu0 0.0
      %942 = vmatpush.msra.mxu0 0.0
      %943 = vmatpush.msra.mxu0 0.0
      %944 = vmatpush.msra.mxu0 0.0
      %945 = vmatpush.msra.mxu0 %v925
      %946 = vmatmul.f32.gmra.mxu0 %v928
      %v947 = vpop.f32.mrf.mxu0
      %v948 = vadd.f32 0.0, %v947
      %949 = vdwg.mxu0
      %950 = vrot.lane.b32.xlu0 %v386, 96
      %v951 = vpop.permute.xlu0 %950
      %v954 = vsel %vm627, %v789, 0
      %956 = vmatpush.msra.mxu0 0.0
      %957 = vmatpush.msra.mxu0 0.0
      %958 = vmatpush.msra.mxu0 0.0
      %959 = vmatpush.msra.mxu0 0.0
      %960 = vmatpush.msra.mxu0 0.0
      %961 = vmatpush.msra.mxu0 0.0
      %962 = vmatpush.msra.mxu0 0.0
      %963 = vmatpush.msra.mxu0 0.0
      %964 = vmatpush.msra.mxu0 0.0
      %965 = vmatpush.msra.mxu0 0.0
      %966 = vmatpush.msra.mxu0 0.0
      %967 = vmatpush.msra.mxu0 0.0
      %968 = vmatpush.msra.mxu0 0.0
      %969 = vmatpush.msra.mxu0 0.0
      %970 = vmatpush.msra.mxu0 0.0
      %971 = vmatpush.msra.mxu0 %v951
      %972 = vmatmul.f32.gmra.mxu0 %v954
      %v973 = vpop.f32.mrf.mxu0
      %v974 = vadd.f32 0.0, %v973
      %975 = vdwg.mxu0
      %976 = vrot.lane.b32.xlu0 %v389, 96
      %v977 = vpop.permute.xlu0 %976
      %v980 = vsel %vm627, %v804, 0
      %982 = vmatpush.msra.mxu0 0.0
      %983 = vmatpush.msra.mxu0 0.0
      %984 = vmatpush.msra.mxu0 0.0
      %985 = vmatpush.msra.mxu0 0.0
      %986 = vmatpush.msra.mxu0 0.0
      %987 = vmatpush.msra.mxu0 0.0
      %988 = vmatpush.msra.mxu0 0.0
      %989 = vmatpush.msra.mxu0 0.0
      %990 = vmatpush.msra.mxu0 0.0
      %991 = vmatpush.msra.mxu0 0.0
      %992 = vmatpush.msra.mxu0 0.0
      %993 = vmatpush.msra.mxu0 0.0
      %994 = vmatpush.msra.mxu0 0.0
      %995 = vmatpush.msra.mxu0 0.0
      %996 = vmatpush.msra.mxu0 0.0
      %997 = vmatpush.msra.mxu0 %v977
      %998 = vmatmul.f32.gmra.mxu0 %v980
      %v999 = vpop.f32.mrf.mxu0
      %v1000 = vadd.f32 0.0, %v999
      %1001 = vdwg.mxu0
      %1002 = vrot.lane.b32.xlu0 %v392, 96
      %v1003 = vpop.permute.xlu0 %1002
      %v1006 = vsel %vm627, %v819, 0
      %1008 = vmatpush.msra.mxu0 0.0
      %1009 = vmatpush.msra.mxu0 0.0
      %1010 = vmatpush.msra.mxu0 0.0
      %1011 = vmatpush.msra.mxu0 0.0
      %1012 = vmatpush.msra.mxu0 0.0
      %1013 = vmatpush.msra.mxu0 0.0
      %1014 = vmatpush.msra.mxu0 0.0
      %1015 = vmatpush.msra.mxu0 0.0
      %1016 = vmatpush.msra.mxu0 0.0
      %1017 = vmatpush.msra.mxu0 0.0
      %1018 = vmatpush.msra.mxu0 0.0
      %1019 = vmatpush.msra.mxu0 0.0
      %1020 = vmatpush.msra.mxu0 0.0
      %1021 = vmatpush.msra.mxu0 0.0
      %1022 = vmatpush.msra.mxu0 0.0
      %1023 = vmatpush.msra.mxu0 %v1003
      %1024 = vmatmul.f32.gmra.mxu0 %v1006
      %v1025 = vpop.f32.mrf.mxu0
      %v1026 = vadd.f32 0.0, %v1025
      %1027 = vdwg.mxu0
      %1028 = vrot.lane.b32.xlu0 %v394, 124
      %v1029 = vpop.permute.xlu0 %1028
      %1030 = vrot.lane.b32.xlu0 %v371, 108
      %v1031 = vpop.permute.xlu0 %1030
      %v1032 = vsel %vm405, %v1029, 0
      %v1034 = vsel %vm405, %v1031, 0
      %1036 = vmatpush.xpose.msra.mxu0 0.0
      %1037 = vmatpush.xpose.msra.mxu0 0.0
      %1038 = vmatpush.xpose.msra.mxu0 0.0
      %1039 = vmatpush.xpose.msra.mxu0 0.0
      %1040 = vmatpush.xpose.msra.mxu0 0.0
      %1041 = vmatpush.xpose.msra.mxu0 0.0
      %1042 = vmatpush.xpose.msra.mxu0 0.0
      %1043 = vmatpush.xpose.msra.mxu0 0.0
      %1044 = vmatpush.xpose.msra.mxu0 0.0
      %1045 = vmatpush.xpose.msra.mxu0 0.0
      %1046 = vmatpush.xpose.msra.mxu0 0.0
      %1047 = vmatpush.xpose.msra.mxu0 0.0
      %1048 = vmatpush.xpose.msra.mxu0 0.0
      %1049 = vmatpush.xpose.msra.mxu0 0.0
      %1050 = vmatpush.xpose.msra.mxu0 0.0
      %1051 = vmatpush.xpose.msra.mxu0 %v1034
      %1052 = vmatmul.f32.gmra.mxu0 %v1032
      %v1053 = vpop.f32.mrf.mxu0
      %v1054 = vadd.f32 0.0, %v1053
      %1055 = vdwg.mxu0
      %1056 = vrot.lane.b32.xlu0 %v395, 124
      %v1057 = vpop.permute.xlu0 %1056
      %1058 = vrot.lane.b32.xlu0 %v374, 108
      %v1059 = vpop.permute.xlu0 %1058
      %v1060 = vsel %vm405, %v1057, 0
      %v1062 = vsel %vm405, %v1059, 0
      %1064 = vmatpush.xpose.msra.mxu0 0.0
      %1065 = vmatpush.xpose.msra.mxu0 0.0
      %1066 = vmatpush.xpose.msra.mxu0 0.0
      %1067 = vmatpush.xpose.msra.mxu0 0.0
      %1068 = vmatpush.xpose.msra.mxu0 0.0
      %1069 = vmatpush.xpose.msra.mxu0 0.0
      %1070 = vmatpush.xpose.msra.mxu0 0.0
      %1071 = vmatpush.xpose.msra.mxu0 0.0
      %1072 = vmatpush.xpose.msra.mxu0 0.0
      %1073 = vmatpush.xpose.msra.mxu0 0.0
      %1074 = vmatpush.xpose.msra.mxu0 0.0
      %1075 = vmatpush.xpose.msra.mxu0 0.0
      %1076 = vmatpush.xpose.msra.mxu0 0.0
      %1077 = vmatpush.xpose.msra.mxu0 0.0
      %1078 = vmatpush.xpose.msra.mxu0 0.0
      %1079 = vmatpush.xpose.msra.mxu0 %v1062
      %1080 = vmatmul.f32.gmra.mxu0 %v1060
      %v1081 = vpop.f32.mrf.mxu0
      %v1082 = vadd.f32 0.0, %v1081
      %1083 = vdwg.mxu0
      %1084 = vrot.lane.b32.xlu0 %v396, 124
      %v1085 = vpop.permute.xlu0 %1084
      %1086 = vrot.lane.b32.xlu0 %v377, 108
      %v1087 = vpop.permute.xlu0 %1086
      %v1088 = vsel %vm405, %v1085, 0
      %v1090 = vsel %vm405, %v1087, 0
      %1092 = vmatpush.xpose.msra.mxu0 0.0
      %1093 = vmatpush.xpose.msra.mxu0 0.0
      %1094 = vmatpush.xpose.msra.mxu0 0.0
      %1095 = vmatpush.xpose.msra.mxu0 0.0
      %1096 = vmatpush.xpose.msra.mxu0 0.0
      %1097 = vmatpush.xpose.msra.mxu0 0.0
      %1098 = vmatpush.xpose.msra.mxu0 0.0
      %1099 = vmatpush.xpose.msra.mxu0 0.0
      %1100 = vmatpush.xpose.msra.mxu0 0.0
      %1101 = vmatpush.xpose.msra.mxu0 0.0
      %1102 = vmatpush.xpose.msra.mxu0 0.0
      %1103 = vmatpush.xpose.msra.mxu0 0.0
      %1104 = vmatpush.xpose.msra.mxu0 0.0
      %1105 = vmatpush.xpose.msra.mxu0 0.0
      %1106 = vmatpush.xpose.msra.mxu0 0.0
      %1107 = vmatpush.xpose.msra.mxu0 %v1090
      %1108 = vmatmul.f32.gmra.mxu0 %v1088
      %v1109 = vpop.f32.mrf.mxu0
      %v1110 = vadd.f32 0.0, %v1109
      %1111 = vdwg.mxu0
      %1112 = vrot.lane.b32.xlu0 %v397, 124
      %v1113 = vpop.permute.xlu0 %1112
      %1114 = vrot.lane.b32.xlu0 %v380, 108
      %v1115 = vpop.permute.xlu0 %1114
      %v1116 = vsel %vm405, %v1113, 0
      %v1118 = vsel %vm405, %v1115, 0
      %1120 = vmatpush.xpose.msra.mxu0 0.0
      %1121 = vmatpush.xpose.msra.mxu0 0.0
      %1122 = vmatpush.xpose.msra.mxu0 0.0
      %1123 = vmatpush.xpose.msra.mxu0 0.0
      %1124 = vmatpush.xpose.msra.mxu0 0.0
      %1125 = vmatpush.xpose.msra.mxu0 0.0
      %1126 = vmatpush.xpose.msra.mxu0 0.0
      %1127 = vmatpush.xpose.msra.mxu0 0.0
      %1128 = vmatpush.xpose.msra.mxu0 0.0
      %1129 = vmatpush.xpose.msra.mxu0 0.0
      %1130 = vmatpush.xpose.msra.mxu0 0.0
      %1131 = vmatpush.xpose.msra.mxu0 0.0
      %1132 = vmatpush.xpose.msra.mxu0 0.0
      %1133 = vmatpush.xpose.msra.mxu0 0.0
      %1134 = vmatpush.xpose.msra.mxu0 0.0
      %1135 = vmatpush.xpose.msra.mxu0 %v1118
      %1136 = vmatmul.f32.gmra.mxu0 %v1116
      %v1137 = vpop.f32.mrf.mxu0
      %v1138 = vadd.f32 0.0, %v1137
      %1139 = vdwg.mxu0
      %1140 = vrot.lane.b32.xlu0 %v398, 124
      %v1141 = vpop.permute.xlu0 %1140
      %1142 = vrot.lane.b32.xlu0 %v383, 108
      %v1143 = vpop.permute.xlu0 %1142
      %v1144 = vsel %vm405, %v1141, 0
      %v1146 = vsel %vm405, %v1143, 0
      %1148 = vmatpush.xpose.msra.mxu0 0.0
      %1149 = vmatpush.xpose.msra.mxu0 0.0
      %1150 = vmatpush.xpose.msra.mxu0 0.0
      %1151 = vmatpush.xpose.msra.mxu0 0.0
      %1152 = vmatpush.xpose.msra.mxu0 0.0
      %1153 = vmatpush.xpose.msra.mxu0 0.0
      %1154 = vmatpush.xpose.msra.mxu0 0.0
      %1155 = vmatpush.xpose.msra.mxu0 0.0
      %1156 = vmatpush.xpose.msra.mxu0 0.0
      %1157 = vmatpush.xpose.msra.mxu0 0.0
      %1158 = vmatpush.xpose.msra.mxu0 0.0
      %1159 = vmatpush.xpose.msra.mxu0 0.0
      %1160 = vmatpush.xpose.msra.mxu0 0.0
      %1161 = vmatpush.xpose.msra.mxu0 0.0
      %1162 = vmatpush.xpose.msra.mxu0 0.0
      %1163 = vmatpush.xpose.msra.mxu0 %v1146
      %1164 = vmatmul.f32.gmra.mxu0 %v1144
      %v1165 = vpop.f32.mrf.mxu0
      %v1166 = vadd.f32 0.0, %v1165
      %1167 = vdwg.mxu0
      %1168 = vrot.lane.b32.xlu0 %v399, 124
      %v1169 = vpop.permute.xlu0 %1168
      %1170 = vrot.lane.b32.xlu0 %v386, 108
      %v1171 = vpop.permute.xlu0 %1170
      %v1172 = vsel %vm405, %v1169, 0
      %v1174 = vsel %vm405, %v1171, 0
      %1176 = vmatpush.xpose.msra.mxu0 0.0
      %1177 = vmatpush.xpose.msra.mxu0 0.0
      %1178 = vmatpush.xpose.msra.mxu0 0.0
      %1179 = vmatpush.xpose.msra.mxu0 0.0
      %1180 = vmatpush.xpose.msra.mxu0 0.0
      %1181 = vmatpush.xpose.msra.mxu0 0.0
      %1182 = vmatpush.xpose.msra.mxu0 0.0
      %1183 = vmatpush.xpose.msra.mxu0 0.0
      %1184 = vmatpush.xpose.msra.mxu0 0.0
      %1185 = vmatpush.xpose.msra.mxu0 0.0
      %1186 = vmatpush.xpose.msra.mxu0 0.0
      %1187 = vmatpush.xpose.msra.mxu0 0.0
      %1188 = vmatpush.xpose.msra.mxu0 0.0
      %1189 = vmatpush.xpose.msra.mxu0 0.0
      %1190 = vmatpush.xpose.msra.mxu0 0.0
      %1191 = vmatpush.xpose.msra.mxu0 %v1174
      %1192 = vmatmul.f32.gmra.mxu0 %v1172
      %v1193 = vpop.f32.mrf.mxu0
      %v1194 = vadd.f32 0.0, %v1193
      %1195 = vdwg.mxu0
      %1196 = vrot.lane.b32.xlu0 %v400, 124
      %v1197 = vpop.permute.xlu0 %1196
      %1198 = vrot.lane.b32.xlu0 %v389, 108
      %v1199 = vpop.permute.xlu0 %1198
      %v1200 = vsel %vm405, %v1197, 0
      %v1202 = vsel %vm405, %v1199, 0
      %1204 = vmatpush.xpose.msra.mxu0 0.0
      %1205 = vmatpush.xpose.msra.mxu0 0.0
      %1206 = vmatpush.xpose.msra.mxu0 0.0
      %1207 = vmatpush.xpose.msra.mxu0 0.0
      %1208 = vmatpush.xpose.msra.mxu0 0.0
      %1209 = vmatpush.xpose.msra.mxu0 0.0
      %1210 = vmatpush.xpose.msra.mxu0 0.0
      %1211 = vmatpush.xpose.msra.mxu0 0.0
      %1212 = vmatpush.xpose.msra.mxu0 0.0
      %1213 = vmatpush.xpose.msra.mxu0 0.0
      %1214 = vmatpush.xpose.msra.mxu0 0.0
      %1215 = vmatpush.xpose.msra.mxu0 0.0
      %1216 = vmatpush.xpose.msra.mxu0 0.0
      %1217 = vmatpush.xpose.msra.mxu0 0.0
      %1218 = vmatpush.xpose.msra.mxu0 0.0
      %1219 = vmatpush.xpose.msra.mxu0 %v1202
      %1220 = vmatmul.f32.gmra.mxu0 %v1200
      %v1221 = vpop.f32.mrf.mxu0
      %v1222 = vadd.f32 0.0, %v1221
      %1223 = vdwg.mxu0
      %1224 = vrot.lane.b32.xlu0 %v401, 124
      %v1225 = vpop.permute.xlu0 %1224
      %1226 = vrot.lane.b32.xlu0 %v392, 108
      %v1227 = vpop.permute.xlu0 %1226
      %v1228 = vsel %vm405, %v1225, 0
      %v1230 = vsel %vm405, %v1227, 0
      %1232 = vmatpush.xpose.msra.mxu0 0.0
      %1233 = vmatpush.xpose.msra.mxu0 0.0
      %1234 = vmatpush.xpose.msra.mxu0 0.0
      %1235 = vmatpush.xpose.msra.mxu0 0.0
      %1236 = vmatpush.xpose.msra.mxu0 0.0
      %1237 = vmatpush.xpose.msra.mxu0 0.0
      %1238 = vmatpush.xpose.msra.mxu0 0.0
      %1239 = vmatpush.xpose.msra.mxu0 0.0
      %1240 = vmatpush.xpose.msra.mxu0 0.0
      %1241 = vmatpush.xpose.msra.mxu0 0.0
      %1242 = vmatpush.xpose.msra.mxu0 0.0
      %1243 = vmatpush.xpose.msra.mxu0 0.0
      %1244 = vmatpush.xpose.msra.mxu0 0.0
      %1245 = vmatpush.xpose.msra.mxu0 0.0
      %1246 = vmatpush.xpose.msra.mxu0 0.0
      %1247 = vmatpush.xpose.msra.mxu0 %v1230
      %1248 = vmatmul.f32.gmra.mxu0 %v1228
      %v1249 = vpop.f32.mrf.mxu0
      %v1250 = vadd.f32 0.0, %v1249
      %1251 = vdwg.mxu0
      %v1252 = vsel %vm627, %v1054, -inf
      %1253 = vmax.xlane.f32.xlu0 %v1252
      %v1254 = vpop.xlane.xlu0 %1253
      %v1255 = vsel %vm627, %v1082, -inf
      %1256 = vmax.xlane.f32.xlu0 %v1255
      %v1257 = vpop.xlane.xlu0 %1256
      %v1258 = vsel %vm627, %v1110, -inf
      %1259 = vmax.xlane.f32.xlu0 %v1258
      %v1260 = vpop.xlane.xlu0 %1259
      %v1261 = vsel %vm627, %v1138, -inf
      %1262 = vmax.xlane.f32.xlu0 %v1261
      %v1263 = vpop.xlane.xlu0 %1262
      %v1264 = vsel %vm627, %v1166, -inf
      %1265 = vmax.xlane.f32.xlu0 %v1264
      %v1266 = vpop.xlane.xlu0 %1265
      %v1267 = vsel %vm627, %v1194, -inf
      %1268 = vmax.xlane.f32.xlu0 %v1267
      %v1269 = vpop.xlane.xlu0 %1268
      %v1270 = vsel %vm627, %v1222, -inf
      %1271 = vmax.xlane.f32.xlu0 %v1270
      %v1272 = vpop.xlane.xlu0 %1271
      %v1273 = vsel %vm627, %v1250, -inf
      %1274 = vmax.xlane.f32.xlu0 %v1273
      %v1275 = vpop.xlane.xlu0 %1274
      %v1276 = vsub.f32 %v1054, %v1254
      %v1277 = vsub.f32 %v1082, %v1257
      %v1278 = vsub.f32 %v1110, %v1260
      %v1279 = vsub.f32 %v1138, %v1263
      %v1280 = vsub.f32 %v1166, %v1266
      %v1281 = vsub.f32 %v1194, %v1269
      %v1282 = vsub.f32 %v1222, %v1272
      %v1283 = vsub.f32 %v1250, %v1275
      %v1284 = vmul.f32 %v1276, 1.442695
      %v1285 = vpow.pop %v1284
      %v1286 = vmul.f32 %v1277, 1.442695
      %v1287 = vpow.pop %v1286
      %v1288 = vmul.f32 %v1278, 1.442695
      %v1289 = vpow.pop %v1288
      %v1290 = vmul.f32 %v1279, 1.442695
      %v1291 = vpow.pop %v1290
      %v1292 = vmul.f32 %v1280, 1.442695
      %v1293 = vpow.pop %v1292
      %v1294 = vmul.f32 %v1281, 1.442695
      %v1295 = vpow.pop %v1294
      %v1296 = vmul.f32 %v1282, 1.442695
      %v1297 = vpow.pop %v1296
      %v1298 = vmul.f32 %v1283, 1.442695
      %v1299 = vpow.pop %v1298
      %v1300 = vsel %vm627, %v1285, 0.0
      %1301 = vadd.xlane.f32.xlu0 %v1300
      %v1302 = vpop.xlane.xlu0 %1301
      %v1303 = vsel %vm627, %v1287, 0.0
      %1304 = vadd.xlane.f32.xlu0 %v1303
      %v1305 = vpop.xlane.xlu0 %1304
      %v1306 = vsel %vm627, %v1289, 0.0
      %1307 = vadd.xlane.f32.xlu0 %v1306
      %v1308 = vpop.xlane.xlu0 %1307
      %v1309 = vsel %vm627, %v1291, 0.0
      %1310 = vadd.xlane.f32.xlu0 %v1309
      %v1311 = vpop.xlane.xlu0 %1310
      %v1312 = vsel %vm627, %v1293, 0.0
      %1313 = vadd.xlane.f32.xlu0 %v1312
      %v1314 = vpop.xlane.xlu0 %1313
      %v1315 = vsel %vm627, %v1295, 0.0
      %1316 = vadd.xlane.f32.xlu0 %v1315
      %v1317 = vpop.xlane.xlu0 %1316
      %v1318 = vsel %vm627, %v1297, 0.0
      %1319 = vadd.xlane.f32.xlu0 %v1318
      %v1320 = vpop.xlane.xlu0 %1319
      %v1321 = vsel %vm627, %v1299, 0.0
      %1322 = vadd.xlane.f32.xlu0 %v1321
      %v1323 = vpop.xlane.xlu0 %1322
      %v1324 = vrcp.pop %v1302
      %v1325 = vmul.f32 %v1302, %v1324
      %v1326 = vsub.f32 1.0, %v1325
      %v1327 = vmul.f32 %v1324, %v1326
      %v1328 = vadd.f32 %v1324, %v1327
      %vm1329 = vweird.f32 %v1302
      %vm1330 = vweird.f32 %v1324
      %vm1331 = vmor %vm1329, %vm1330
      %v1332 = vsel %vm1331, %v1324, %v1328
      %v1333 = vand.u32 2147483647, %v1302
      %vm1334 = vcmp.eq.f32.partialorder %v1333, 8.507059e+37
      %v1335 = vand.u32 %v1302, 2147483648
      %v1336 = vor.u32 1.1754944e-38, %v1335
      %v1337 = vsel %vm1334, %v1336, %v1332
      %v1338 = vmul.f32 %v1285, %v1337
      %v1339 = vrcp.pop %v1305
      %v1340 = vmul.f32 %v1305, %v1339
      %v1341 = vsub.f32 1.0, %v1340
      %v1342 = vmul.f32 %v1339, %v1341
      %v1343 = vadd.f32 %v1339, %v1342
      %vm1344 = vweird.f32 %v1305
      %vm1345 = vweird.f32 %v1339
      %vm1346 = vmor %vm1344, %vm1345
      %v1347 = vsel %vm1346, %v1339, %v1343
      %v1348 = vand.u32 2147483647, %v1305
      %vm1349 = vcmp.eq.f32.partialorder %v1348, 8.507059e+37
      %v1350 = vand.u32 %v1305, 2147483648
      %v1351 = vor.u32 1.1754944e-38, %v1350
      %v1352 = vsel %vm1349, %v1351, %v1347
      %v1353 = vmul.f32 %v1287, %v1352
      %v1354 = vrcp.pop %v1308
      %v1355 = vmul.f32 %v1308, %v1354
      %v1356 = vsub.f32 1.0, %v1355
      %v1357 = vmul.f32 %v1354, %v1356
      %v1358 = vadd.f32 %v1354, %v1357
      %vm1359 = vweird.f32 %v1308
      %vm1360 = vweird.f32 %v1354
      %vm1361 = vmor %vm1359, %vm1360
      %v1362 = vsel %vm1361, %v1354, %v1358
      %v1363 = vand.u32 2147483647, %v1308
      %vm1364 = vcmp.eq.f32.partialorder %v1363, 8.507059e+37
      %v1365 = vand.u32 %v1308, 2147483648
      %v1366 = vor.u32 1.1754944e-38, %v1365
      %v1367 = vsel %vm1364, %v1366, %v1362
      %v1368 = vmul.f32 %v1289, %v1367
      %v1369 = vrcp.pop %v1311
      %v1370 = vmul.f32 %v1311, %v1369
      %v1371 = vsub.f32 1.0, %v1370
      %v1372 = vmul.f32 %v1369, %v1371
      %v1373 = vadd.f32 %v1369, %v1372
      %vm1374 = vweird.f32 %v1311
      %vm1375 = vweird.f32 %v1369
      %vm1376 = vmor %vm1374, %vm1375
      %v1377 = vsel %vm1376, %v1369, %v1373
      %v1378 = vand.u32 2147483647, %v1311
      %vm1379 = vcmp.eq.f32.partialorder %v1378, 8.507059e+37
      %v1380 = vand.u32 %v1311, 2147483648
      %v1381 = vor.u32 1.1754944e-38, %v1380
      %v1382 = vsel %vm1379, %v1381, %v1377
      %v1383 = vmul.f32 %v1291, %v1382
      %v1384 = vrcp.pop %v1314
      %v1385 = vmul.f32 %v1314, %v1384
      %v1386 = vsub.f32 1.0, %v1385
      %v1387 = vmul.f32 %v1384, %v1386
      %v1388 = vadd.f32 %v1384, %v1387
      %vm1389 = vweird.f32 %v1314
      %vm1390 = vweird.f32 %v1384
      %vm1391 = vmor %vm1389, %vm1390
      %v1392 = vsel %vm1391, %v1384, %v1388
      %v1393 = vand.u32 2147483647, %v1314
      %vm1394 = vcmp.eq.f32.partialorder %v1393, 8.507059e+37
      %v1395 = vand.u32 %v1314, 2147483648
      %v1396 = vor.u32 1.1754944e-38, %v1395
      %v1397 = vsel %vm1394, %v1396, %v1392
      %v1398 = vmul.f32 %v1293, %v1397
      %v1399 = vrcp.pop %v1317
      %v1400 = vmul.f32 %v1317, %v1399
      %v1401 = vsub.f32 1.0, %v1400
      %v1402 = vmul.f32 %v1399, %v1401
      %v1403 = vadd.f32 %v1399, %v1402
      %vm1404 = vweird.f32 %v1317
      %vm1405 = vweird.f32 %v1399
      %vm1406 = vmor %vm1404, %vm1405
      %v1407 = vsel %vm1406, %v1399, %v1403
      %v1408 = vand.u32 2147483647, %v1317
      %vm1409 = vcmp.eq.f32.partialorder %v1408, 8.507059e+37
      %v1410 = vand.u32 %v1317, 2147483648
      %v1411 = vor.u32 1.1754944e-38, %v1410
      %v1412 = vsel %vm1409, %v1411, %v1407
      %v1413 = vmul.f32 %v1295, %v1412
      %v1414 = vrcp.pop %v1320
      %v1415 = vmul.f32 %v1320, %v1414
      %v1416 = vsub.f32 1.0, %v1415
      %v1417 = vmul.f32 %v1414, %v1416
      %v1418 = vadd.f32 %v1414, %v1417
      %vm1419 = vweird.f32 %v1320
      %vm1420 = vweird.f32 %v1414
      %vm1421 = vmor %vm1419, %vm1420
      %v1422 = vsel %vm1421, %v1414, %v1418
      %v1423 = vand.u32 2147483647, %v1320
      %vm1424 = vcmp.eq.f32.partialorder %v1423, 8.507059e+37
      %v1425 = vand.u32 %v1320, 2147483648
      %v1426 = vor.u32 1.1754944e-38, %v1425
      %v1427 = vsel %vm1424, %v1426, %v1422
      %v1428 = vmul.f32 %v1297, %v1427
      %v1429 = vrcp.pop %v1323
      %v1430 = vmul.f32 %v1323, %v1429
      %v1431 = vsub.f32 1.0, %v1430
      %v1432 = vmul.f32 %v1429, %v1431
      %v1433 = vadd.f32 %v1429, %v1432
      %vm1434 = vweird.f32 %v1323
      %vm1435 = vweird.f32 %v1429
      %vm1436 = vmor %vm1434, %vm1435
      %v1437 = vsel %vm1436, %v1429, %v1433
      %v1438 = vand.u32 2147483647, %v1323
      %vm1439 = vcmp.eq.f32.partialorder %v1438, 8.507059e+37
      %v1440 = vand.u32 %v1323, 2147483648
      %v1441 = vor.u32 1.1754944e-38, %v1440
      %v1442 = vsel %vm1439, %v1441, %v1437
      %v1443 = vmul.f32 %v1299, %v1442
      %1444 = vrot.lane.b32.xlu0 %v371, 92
      %v1445 = vpop.permute.xlu0 %1444
      %v1448 = vsel %vm627, %v1338, 0
      %1450 = vmatpush.msra.mxu0 0.0
      %1451 = vmatpush.msra.mxu0 0.0
      %1452 = vmatpush.msra.mxu0 0.0
      %1453 = vmatpush.msra.mxu0 0.0
      %1454 = vmatpush.msra.mxu0 0.0
      %1455 = vmatpush.msra.mxu0 0.0
      %1456 = vmatpush.msra.mxu0 0.0
      %1457 = vmatpush.msra.mxu0 0.0
      %1458 = vmatpush.msra.mxu0 0.0
      %1459 = vmatpush.msra.mxu0 0.0
      %1460 = vmatpush.msra.mxu0 0.0
      %1461 = vmatpush.msra.mxu0 0.0
      %1462 = vmatpush.msra.mxu0 0.0
      %1463 = vmatpush.msra.mxu0 0.0
      %1464 = vmatpush.msra.mxu0 0.0
      %1465 = vmatpush.msra.mxu0 %v1445
      %1466 = vmatmul.f32.gmra.mxu0 %v1448
      %v1467 = vpop.f32.mrf.mxu0
      %v1468 = vadd.f32 0.0, %v1467
      %1469 = vdwg.mxu0
      %1470 = vrot.lane.b32.xlu0 %v374, 92
      %v1471 = vpop.permute.xlu0 %1470
      %v1474 = vsel %vm627, %v1353, 0
      %1476 = vmatpush.msra.mxu0 0.0
      %1477 = vmatpush.msra.mxu0 0.0
      %1478 = vmatpush.msra.mxu0 0.0
      %1479 = vmatpush.msra.mxu0 0.0
      %1480 = vmatpush.msra.mxu0 0.0
      %1481 = vmatpush.msra.mxu0 0.0
      %1482 = vmatpush.msra.mxu0 0.0
      %1483 = vmatpush.msra.mxu0 0.0
      %1484 = vmatpush.msra.mxu0 0.0
      %1485 = vmatpush.msra.mxu0 0.0
      %1486 = vmatpush.msra.mxu0 0.0
      %1487 = vmatpush.msra.mxu0 0.0
      %1488 = vmatpush.msra.mxu0 0.0
      %1489 = vmatpush.msra.mxu0 0.0
      %1490 = vmatpush.msra.mxu0 0.0
      %1491 = vmatpush.msra.mxu0 %v1471
      %1492 = vmatmul.f32.gmra.mxu0 %v1474
      %v1493 = vpop.f32.mrf.mxu0
      %v1494 = vadd.f32 0.0, %v1493
      %1495 = vdwg.mxu0
      %1496 = vrot.lane.b32.xlu0 %v377, 92
      %v1497 = vpop.permute.xlu0 %1496
      %v1500 = vsel %vm627, %v1368, 0
      %1502 = vmatpush.msra.mxu0 0.0
      %1503 = vmatpush.msra.mxu0 0.0
      %1504 = vmatpush.msra.mxu0 0.0
      %1505 = vmatpush.msra.mxu0 0.0
      %1506 = vmatpush.msra.mxu0 0.0
      %1507 = vmatpush.msra.mxu0 0.0
      %1508 = vmatpush.msra.mxu0 0.0
      %1509 = vmatpush.msra.mxu0 0.0
      %1510 = vmatpush.msra.mxu0 0.0
      %1511 = vmatpush.msra.mxu0 0.0
      %1512 = vmatpush.msra.mxu0 0.0
      %1513 = vmatpush.msra.mxu0 0.0
      %1514 = vmatpush.msra.mxu0 0.0
      %1515 = vmatpush.msra.mxu0 0.0
      %1516 = vmatpush.msra.mxu0 0.0
      %1517 = vmatpush.msra.mxu0 %v1497
      %1518 = vmatmul.f32.gmra.mxu0 %v1500
      %v1519 = vpop.f32.mrf.mxu0
      %v1520 = vadd.f32 0.0, %v1519
      %1521 = vdwg.mxu0
      %1522 = vrot.lane.b32.xlu0 %v380, 92
      %v1523 = vpop.permute.xlu0 %1522
      %v1526 = vsel %vm627, %v1383, 0
      %1528 = vmatpush.msra.mxu0 0.0
      %1529 = vmatpush.msra.mxu0 0.0
      %1530 = vmatpush.msra.mxu0 0.0
      %1531 = vmatpush.msra.mxu0 0.0
      %1532 = vmatpush.msra.mxu0 0.0
      %1533 = vmatpush.msra.mxu0 0.0
      %1534 = vmatpush.msra.mxu0 0.0
      %1535 = vmatpush.msra.mxu0 0.0
      %1536 = vmatpush.msra.mxu0 0.0
      %1537 = vmatpush.msra.mxu0 0.0
      %1538 = vmatpush.msra.mxu0 0.0
      %1539 = vmatpush.msra.mxu0 0.0
      %1540 = vmatpush.msra.mxu0 0.0
      %1541 = vmatpush.msra.mxu0 0.0
      %1542 = vmatpush.msra.mxu0 0.0
      %1543 = vmatpush.msra.mxu0 %v1523
      %1544 = vmatmul.f32.gmra.mxu0 %v1526
      %v1545 = vpop.f32.mrf.mxu0
      %v1546 = vadd.f32 0.0, %v1545
      %1547 = vdwg.mxu0
      %1548 = vrot.lane.b32.xlu0 %v383, 92
      %v1549 = vpop.permute.xlu0 %1548
      %v1552 = vsel %vm627, %v1398, 0
      %1554 = vmatpush.msra.mxu0 0.0
      %1555 = vmatpush.msra.mxu0 0.0
      %1556 = vmatpush.msra.mxu0 0.0
      %1557 = vmatpush.msra.mxu0 0.0
      %1558 = vmatpush.msra.mxu0 0.0
      %1559 = vmatpush.msra.mxu0 0.0
      %1560 = vmatpush.msra.mxu0 0.0
      %1561 = vmatpush.msra.mxu0 0.0
      %1562 = vmatpush.msra.mxu0 0.0
      %1563 = vmatpush.msra.mxu0 0.0
      %1564 = vmatpush.msra.mxu0 0.0
      %1565 = vmatpush.msra.mxu0 0.0
      %1566 = vmatpush.msra.mxu0 0.0
      %1567 = vmatpush.msra.mxu0 0.0
      %1568 = vmatpush.msra.mxu0 0.0
      %1569 = vmatpush.msra.mxu0 %v1549
      %1570 = vmatmul.f32.gmra.mxu0 %v1552
      %v1571 = vpop.f32.mrf.mxu0
      %v1572 = vadd.f32 0.0, %v1571
      %1573 = vdwg.mxu0
      %1574 = vrot.lane.b32.xlu0 %v386, 92
      %v1575 = vpop.permute.xlu0 %1574
      %v1578 = vsel %vm627, %v1413, 0
      %1580 = vmatpush.msra.mxu0 0.0
      %1581 = vmatpush.msra.mxu0 0.0
      %1582 = vmatpush.msra.mxu0 0.0
      %1583 = vmatpush.msra.mxu0 0.0
      %1584 = vmatpush.msra.mxu0 0.0
      %1585 = vmatpush.msra.mxu0 0.0
      %1586 = vmatpush.msra.mxu0 0.0
      %1587 = vmatpush.msra.mxu0 0.0
      %1588 = vmatpush.msra.mxu0 0.0
      %1589 = vmatpush.msra.mxu0 0.0
      %1590 = vmatpush.msra.mxu0 0.0
      %1591 = vmatpush.msra.mxu0 0.0
      %1592 = vmatpush.msra.mxu0 0.0
      %1593 = vmatpush.msra.mxu0 0.0
      %1594 = vmatpush.msra.mxu0 0.0
      %1595 = vmatpush.msra.mxu0 %v1575
      %1596 = vmatmul.f32.gmra.mxu0 %v1578
      %v1597 = vpop.f32.mrf.mxu0
      %v1598 = vadd.f32 0.0, %v1597
      %1599 = vdwg.mxu0
      %1600 = vrot.lane.b32.xlu0 %v389, 92
      %v1601 = vpop.permute.xlu0 %1600
      %v1604 = vsel %vm627, %v1428, 0
      %1606 = vmatpush.msra.mxu0 0.0
      %1607 = vmatpush.msra.mxu0 0.0
      %1608 = vmatpush.msra.mxu0 0.0
      %1609 = vmatpush.msra.mxu0 0.0
      %1610 = vmatpush.msra.mxu0 0.0
      %1611 = vmatpush.msra.mxu0 0.0
      %1612 = vmatpush.msra.mxu0 0.0
      %1613 = vmatpush.msra.mxu0 0.0
      %1614 = vmatpush.msra.mxu0 0.0
      %1615 = vmatpush.msra.mxu0 0.0
      %1616 = vmatpush.msra.mxu0 0.0
      %1617 = vmatpush.msra.mxu0 0.0
      %1618 = vmatpush.msra.mxu0 0.0
      %1619 = vmatpush.msra.mxu0 0.0
      %1620 = vmatpush.msra.mxu0 0.0
      %1621 = vmatpush.msra.mxu0 %v1601
      %1622 = vmatmul.f32.gmra.mxu0 %v1604
      %v1623 = vpop.f32.mrf.mxu0
      %v1624 = vadd.f32 0.0, %v1623
      %1625 = vdwg.mxu0
      %1626 = vrot.lane.b32.xlu0 %v392, 92
      %v1627 = vpop.permute.xlu0 %1626
      %v1630 = vsel %vm627, %v1443, 0
      %1632 = vmatpush.msra.mxu0 0.0
      %1633 = vmatpush.msra.mxu0 0.0
      %1634 = vmatpush.msra.mxu0 0.0
      %1635 = vmatpush.msra.mxu0 0.0
      %1636 = vmatpush.msra.mxu0 0.0
      %1637 = vmatpush.msra.mxu0 0.0
      %1638 = vmatpush.msra.mxu0 0.0
      %1639 = vmatpush.msra.mxu0 0.0
      %1640 = vmatpush.msra.mxu0 0.0
      %1641 = vmatpush.msra.mxu0 0.0
      %1642 = vmatpush.msra.mxu0 0.0
      %1643 = vmatpush.msra.mxu0 0.0
      %1644 = vmatpush.msra.mxu0 0.0
      %1645 = vmatpush.msra.mxu0 0.0
      %1646 = vmatpush.msra.mxu0 0.0
      %1647 = vmatpush.msra.mxu0 %v1627
      %1648 = vmatmul.f32.gmra.mxu0 %v1630
      %v1649 = vpop.f32.mrf.mxu0
      %v1650 = vadd.f32 0.0, %v1649
      %1651 = vdwg.mxu0
      %1652 = vrot.lane.b32.xlu0 %v394, 120
      %v1653 = vpop.permute.xlu0 %1652
      %1654 = vrot.lane.b32.xlu0 %v371, 104
      %v1655 = vpop.permute.xlu0 %1654
      %v1656 = vsel %vm405, %v1653, 0
      %v1658 = vsel %vm405, %v1655, 0
      %1660 = vmatpush.xpose.msra.mxu0 0.0
      %1661 = vmatpush.xpose.msra.mxu0 0.0
      %1662 = vmatpush.xpose.msra.mxu0 0.0
      %1663 = vmatpush.xpose.msra.mxu0 0.0
      %1664 = vmatpush.xpose.msra.mxu0 0.0
      %1665 = vmatpush.xpose.msra.mxu0 0.0
      %1666 = vmatpush.xpose.msra.mxu0 0.0
      %1667 = vmatpush.xpose.msra.mxu0 0.0
      %1668 = vmatpush.xpose.msra.mxu0 0.0
      %1669 = vmatpush.xpose.msra.mxu0 0.0
      %1670 = vmatpush.xpose.msra.mxu0 0.0
      %1671 = vmatpush.xpose.msra.mxu0 0.0
      %1672 = vmatpush.xpose.msra.mxu0 0.0
      %1673 = vmatpush.xpose.msra.mxu0 0.0
      %1674 = vmatpush.xpose.msra.mxu0 0.0
      %1675 = vmatpush.xpose.msra.mxu0 %v1658
      %1676 = vmatmul.f32.gmra.mxu0 %v1656
      %v1677 = vpop.f32.mrf.mxu0
      %v1678 = vadd.f32 0.0, %v1677
      %1679 = vdwg.mxu0
      %1680 = vrot.lane.b32.xlu0 %v395, 120
      %v1681 = vpop.permute.xlu0 %1680
      %1682 = vrot.lane.b32.xlu0 %v374, 104
      %v1683 = vpop.permute.xlu0 %1682
      %v1684 = vsel %vm405, %v1681, 0
      %v1686 = vsel %vm405, %v1683, 0
      %1688 = vmatpush.xpose.msra.mxu0 0.0
      %1689 = vmatpush.xpose.msra.mxu0 0.0
      %1690 = vmatpush.xpose.msra.mxu0 0.0
      %1691 = vmatpush.xpose.msra.mxu0 0.0
      %1692 = vmatpush.xpose.msra.mxu0 0.0
      %1693 = vmatpush.xpose.msra.mxu0 0.0
      %1694 = vmatpush.xpose.msra.mxu0 0.0
      %1695 = vmatpush.xpose.msra.mxu0 0.0
      %1696 = vmatpush.xpose.msra.mxu0 0.0
      %1697 = vmatpush.xpose.msra.mxu0 0.0
      %1698 = vmatpush.xpose.msra.mxu0 0.0
      %1699 = vmatpush.xpose.msra.mxu0 0.0
      %1700 = vmatpush.xpose.msra.mxu0 0.0
      %1701 = vmatpush.xpose.msra.mxu0 0.0
      %1702 = vmatpush.xpose.msra.mxu0 0.0
      %1703 = vmatpush.xpose.msra.mxu0 %v1686
      %1704 = vmatmul.f32.gmra.mxu0 %v1684
      %v1705 = vpop.f32.mrf.mxu0
      %v1706 = vadd.f32 0.0, %v1705
      %1707 = vdwg.mxu0
      %1708 = vrot.lane.b32.xlu0 %v396, 120
      %v1709 = vpop.permute.xlu0 %1708
      %1710 = vrot.lane.b32.xlu0 %v377, 104
      %v1711 = vpop.permute.xlu0 %1710
      %v1712 = vsel %vm405, %v1709, 0
      %v1714 = vsel %vm405, %v1711, 0
      %1716 = vmatpush.xpose.msra.mxu0 0.0
      %1717 = vmatpush.xpose.msra.mxu0 0.0
      %1718 = vmatpush.xpose.msra.mxu0 0.0
      %1719 = vmatpush.xpose.msra.mxu0 0.0
      %1720 = vmatpush.xpose.msra.mxu0 0.0
      %1721 = vmatpush.xpose.msra.mxu0 0.0
      %1722 = vmatpush.xpose.msra.mxu0 0.0
      %1723 = vmatpush.xpose.msra.mxu0 0.0
      %1724 = vmatpush.xpose.msra.mxu0 0.0
      %1725 = vmatpush.xpose.msra.mxu0 0.0
      %1726 = vmatpush.xpose.msra.mxu0 0.0
      %1727 = vmatpush.xpose.msra.mxu0 0.0
      %1728 = vmatpush.xpose.msra.mxu0 0.0
      %1729 = vmatpush.xpose.msra.mxu0 0.0
      %1730 = vmatpush.xpose.msra.mxu0 0.0
      %1731 = vmatpush.xpose.msra.mxu0 %v1714
      %1732 = vmatmul.f32.gmra.mxu0 %v1712
      %v1733 = vpop.f32.mrf.mxu0
      %v1734 = vadd.f32 0.0, %v1733
      %1735 = vdwg.mxu0
      %1736 = vrot.lane.b32.xlu0 %v397, 120
      %v1737 = vpop.permute.xlu0 %1736
      %1738 = vrot.lane.b32.xlu0 %v380, 104
      %v1739 = vpop.permute.xlu0 %1738
      %v1740 = vsel %vm405, %v1737, 0
      %v1742 = vsel %vm405, %v1739, 0
      %1744 = vmatpush.xpose.msra.mxu0 0.0
      %1745 = vmatpush.xpose.msra.mxu0 0.0
      %1746 = vmatpush.xpose.msra.mxu0 0.0
      %1747 = vmatpush.xpose.msra.mxu0 0.0
      %1748 = vmatpush.xpose.msra.mxu0 0.0
      %1749 = vmatpush.xpose.msra.mxu0 0.0
      %1750 = vmatpush.xpose.msra.mxu0 0.0
      %1751 = vmatpush.xpose.msra.mxu0 0.0
      %1752 = vmatpush.xpose.msra.mxu0 0.0
      %1753 = vmatpush.xpose.msra.mxu0 0.0
      %1754 = vmatpush.xpose.msra.mxu0 0.0
      %1755 = vmatpush.xpose.msra.mxu0 0.0
      %1756 = vmatpush.xpose.msra.mxu0 0.0
      %1757 = vmatpush.xpose.msra.mxu0 0.0
      %1758 = vmatpush.xpose.msra.mxu0 0.0
      %1759 = vmatpush.xpose.msra.mxu0 %v1742
      %1760 = vmatmul.f32.gmra.mxu0 %v1740
      %v1761 = vpop.f32.mrf.mxu0
      %v1762 = vadd.f32 0.0, %v1761
      %1763 = vdwg.mxu0
      %1764 = vrot.lane.b32.xlu0 %v398, 120
      %v1765 = vpop.permute.xlu0 %1764
      %1766 = vrot.lane.b32.xlu0 %v383, 104
      %v1767 = vpop.permute.xlu0 %1766
      %v1768 = vsel %vm405, %v1765, 0
      %v1770 = vsel %vm405, %v1767, 0
      %1772 = vmatpush.xpose.msra.mxu0 0.0
      %1773 = vmatpush.xpose.msra.mxu0 0.0
      %1774 = vmatpush.xpose.msra.mxu0 0.0
      %1775 = vmatpush.xpose.msra.mxu0 0.0
      %1776 = vmatpush.xpose.msra.mxu0 0.0
      %1777 = vmatpush.xpose.msra.mxu0 0.0
      %1778 = vmatpush.xpose.msra.mxu0 0.0
      %1779 = vmatpush.xpose.msra.mxu0 0.0
      %1780 = vmatpush.xpose.msra.mxu0 0.0
      %1781 = vmatpush.xpose.msra.mxu0 0.0
      %1782 = vmatpush.xpose.msra.mxu0 0.0
      %1783 = vmatpush.xpose.msra.mxu0 0.0
      %1784 = vmatpush.xpose.msra.mxu0 0.0
      %1785 = vmatpush.xpose.msra.mxu0 0.0
      %1786 = vmatpush.xpose.msra.mxu0 0.0
      %1787 = vmatpush.xpose.msra.mxu0 %v1770
      %1788 = vmatmul.f32.gmra.mxu0 %v1768
      %v1789 = vpop.f32.mrf.mxu0
      %v1790 = vadd.f32 0.0, %v1789
      %1791 = vdwg.mxu0
      %1792 = vrot.lane.b32.xlu0 %v399, 120
      %v1793 = vpop.permute.xlu0 %1792
      %1794 = vrot.lane.b32.xlu0 %v386, 104
      %v1795 = vpop.permute.xlu0 %1794
      %v1796 = vsel %vm405, %v1793, 0
      %v1798 = vsel %vm405, %v1795, 0
      %1800 = vmatpush.xpose.msra.mxu0 0.0
      %1801 = vmatpush.xpose.msra.mxu0 0.0
      %1802 = vmatpush.xpose.msra.mxu0 0.0
      %1803 = vmatpush.xpose.msra.mxu0 0.0
      %1804 = vmatpush.xpose.msra.mxu0 0.0
      %1805 = vmatpush.xpose.msra.mxu0 0.0
      %1806 = vmatpush.xpose.msra.mxu0 0.0
      %1807 = vmatpush.xpose.msra.mxu0 0.0
      %1808 = vmatpush.xpose.msra.mxu0 0.0
      %1809 = vmatpush.xpose.msra.mxu0 0.0
      %1810 = vmatpush.xpose.msra.mxu0 0.0
      %1811 = vmatpush.xpose.msra.mxu0 0.0
      %1812 = vmatpush.xpose.msra.mxu0 0.0
      %1813 = vmatpush.xpose.msra.mxu0 0.0
      %1814 = vmatpush.xpose.msra.mxu0 0.0
      %1815 = vmatpush.xpose.msra.mxu0 %v1798
      %1816 = vmatmul.f32.gmra.mxu0 %v1796
      %v1817 = vpop.f32.mrf.mxu0
      %v1818 = vadd.f32 0.0, %v1817
      %1819 = vdwg.mxu0
      %1820 = vrot.lane.b32.xlu0 %v400, 120
      %v1821 = vpop.permute.xlu0 %1820
      %1822 = vrot.lane.b32.xlu0 %v389, 104
      %v1823 = vpop.permute.xlu0 %1822
      %v1824 = vsel %vm405, %v1821, 0
      %v1826 = vsel %vm405, %v1823, 0
      %1828 = vmatpush.xpose.msra.mxu0 0.0
      %1829 = vmatpush.xpose.msra.mxu0 0.0
      %1830 = vmatpush.xpose.msra.mxu0 0.0
      %1831 = vmatpush.xpose.msra.mxu0 0.0
      %1832 = vmatpush.xpose.msra.mxu0 0.0
      %1833 = vmatpush.xpose.msra.mxu0 0.0
      %1834 = vmatpush.xpose.msra.mxu0 0.0
      %1835 = vmatpush.xpose.msra.mxu0 0.0
      %1836 = vmatpush.xpose.msra.mxu0 0.0
      %1837 = vmatpush.xpose.msra.mxu0 0.0
      %1838 = vmatpush.xpose.msra.mxu0 0.0
      %1839 = vmatpush.xpose.msra.mxu0 0.0
      %1840 = vmatpush.xpose.msra.mxu0 0.0
      %1841 = vmatpush.xpose.msra.mxu0 0.0
      %1842 = vmatpush.xpose.msra.mxu0 0.0
      %1843 = vmatpush.xpose.msra.mxu0 %v1826
      %1844 = vmatmul.f32.gmra.mxu0 %v1824
      %v1845 = vpop.f32.mrf.mxu0
      %v1846 = vadd.f32 0.0, %v1845
      %1847 = vdwg.mxu0
      %1848 = vrot.lane.b32.xlu0 %v401, 120
      %v1849 = vpop.permute.xlu0 %1848
      %1850 = vrot.lane.b32.xlu0 %v392, 104
      %v1851 = vpop.permute.xlu0 %1850
      %v1852 = vsel %vm405, %v1849, 0
      %v1854 = vsel %vm405, %v1851, 0
      %1856 = vmatpush.xpose.msra.mxu0 0.0
      %1857 = vmatpush.xpose.msra.mxu0 0.0
      %1858 = vmatpush.xpose.msra.mxu0 0.0
      %1859 = vmatpush.xpose.msra.mxu0 0.0
      %1860 = vmatpush.xpose.msra.mxu0 0.0
      %1861 = vmatpush.xpose.msra.mxu0 0.0
      %1862 = vmatpush.xpose.msra.mxu0 0.0
      %1863 = vmatpush.xpose.msra.mxu0 0.0
      %1864 = vmatpush.xpose.msra.mxu0 0.0
      %1865 = vmatpush.xpose.msra.mxu0 0.0
      %1866 = vmatpush.xpose.msra.mxu0 0.0
      %1867 = vmatpush.xpose.msra.mxu0 0.0
      %1868 = vmatpush.xpose.msra.mxu0 0.0
      %1869 = vmatpush.xpose.msra.mxu0 0.0
      %1870 = vmatpush.xpose.msra.mxu0 0.0
      %1871 = vmatpush.xpose.msra.mxu0 %v1854
      %1872 = vmatmul.f32.gmra.mxu0 %v1852
      %v1873 = vpop.f32.mrf.mxu0
      %v1874 = vadd.f32 0.0, %v1873
      %1875 = vdwg.mxu0
      %v1876 = vsel %vm627, %v1678, -inf
      %1877 = vmax.xlane.f32.xlu0 %v1876
      %v1878 = vpop.xlane.xlu0 %1877
      %v1879 = vsel %vm627, %v1706, -inf
      %1880 = vmax.xlane.f32.xlu0 %v1879
      %v1881 = vpop.xlane.xlu0 %1880
      %v1882 = vsel %vm627, %v1734, -inf
      %1883 = vmax.xlane.f32.xlu0 %v1882
      %v1884 = vpop.xlane.xlu0 %1883
      %v1885 = vsel %vm627, %v1762, -inf
      %1886 = vmax.xlane.f32.xlu0 %v1885
      %v1887 = vpop.xlane.xlu0 %1886
      %v1888 = vsel %vm627, %v1790, -inf
      %1889 = vmax.xlane.f32.xlu0 %v1888
      %v1890 = vpop.xlane.xlu0 %1889
      %v1891 = vsel %vm627, %v1818, -inf
      %1892 = vmax.xlane.f32.xlu0 %v1891
      %v1893 = vpop.xlane.xlu0 %1892
      %v1894 = vsel %vm627, %v1846, -inf
      %1895 = vmax.xlane.f32.xlu0 %v1894
      %v1896 = vpop.xlane.xlu0 %1895
      %v1897 = vsel %vm627, %v1874, -inf
      %1898 = vmax.xlane.f32.xlu0 %v1897
      %v1899 = vpop.xlane.xlu0 %1898
      %v1900 = vsub.f32 %v1678, %v1878
      %v1901 = vsub.f32 %v1706, %v1881
      %v1902 = vsub.f32 %v1734, %v1884
      %v1903 = vsub.f32 %v1762, %v1887
      %v1904 = vsub.f32 %v1790, %v1890
      %v1905 = vsub.f32 %v1818, %v1893
      %v1906 = vsub.f32 %v1846, %v1896
      %v1907 = vsub.f32 %v1874, %v1899
      %v1908 = vmul.f32 %v1900, 1.442695
      %v1909 = vpow.pop %v1908
      %v1910 = vmul.f32 %v1901, 1.442695
      %v1911 = vpow.pop %v1910
      %v1912 = vmul.f32 %v1902, 1.442695
      %v1913 = vpow.pop %v1912
      %v1914 = vmul.f32 %v1903, 1.442695
      %v1915 = vpow.pop %v1914
      %v1916 = vmul.f32 %v1904, 1.442695
      %v1917 = vpow.pop %v1916
      %v1918 = vmul.f32 %v1905, 1.442695
      %v1919 = vpow.pop %v1918
      %v1920 = vmul.f32 %v1906, 1.442695
      %v1921 = vpow.pop %v1920
      %v1922 = vmul.f32 %v1907, 1.442695
      %v1923 = vpow.pop %v1922
      %v1924 = vsel %vm627, %v1909, 0.0
      %1925 = vadd.xlane.f32.xlu0 %v1924
      %v1926 = vpop.xlane.xlu0 %1925
      %v1927 = vsel %vm627, %v1911, 0.0
      %1928 = vadd.xlane.f32.xlu0 %v1927
      %v1929 = vpop.xlane.xlu0 %1928
      %v1930 = vsel %vm627, %v1913, 0.0
      %1931 = vadd.xlane.f32.xlu0 %v1930
      %v1932 = vpop.xlane.xlu0 %1931
      %v1933 = vsel %vm627, %v1915, 0.0
      %1934 = vadd.xlane.f32.xlu0 %v1933
      %v1935 = vpop.xlane.xlu0 %1934
      %v1936 = vsel %vm627, %v1917, 0.0
      %1937 = vadd.xlane.f32.xlu0 %v1936
      %v1938 = vpop.xlane.xlu0 %1937
      %v1939 = vsel %vm627, %v1919, 0.0
      %1940 = vadd.xlane.f32.xlu0 %v1939
      %v1941 = vpop.xlane.xlu0 %1940
      %v1942 = vsel %vm627, %v1921, 0.0
      %1943 = vadd.xlane.f32.xlu0 %v1942
      %v1944 = vpop.xlane.xlu0 %1943
      %v1945 = vsel %vm627, %v1923, 0.0
      %1946 = vadd.xlane.f32.xlu0 %v1945
      %v1947 = vpop.xlane.xlu0 %1946
      %v1948 = vrcp.pop %v1926
      %v1949 = vmul.f32 %v1926, %v1948
      %v1950 = vsub.f32 1.0, %v1949
      %v1951 = vmul.f32 %v1948, %v1950
      %v1952 = vadd.f32 %v1948, %v1951
      %vm1953 = vweird.f32 %v1926
      %vm1954 = vweird.f32 %v1948
      %vm1955 = vmor %vm1953, %vm1954
      %v1956 = vsel %vm1955, %v1948, %v1952
      %v1957 = vand.u32 2147483647, %v1926
      %vm1958 = vcmp.eq.f32.partialorder %v1957, 8.507059e+37
      %v1959 = vand.u32 %v1926, 2147483648
      %v1960 = vor.u32 1.1754944e-38, %v1959
      %v1961 = vsel %vm1958, %v1960, %v1956
      %v1962 = vmul.f32 %v1909, %v1961
      %v1963 = vrcp.pop %v1929
      %v1964 = vmul.f32 %v1929, %v1963
      %v1965 = vsub.f32 1.0, %v1964
      %v1966 = vmul.f32 %v1963, %v1965
      %v1967 = vadd.f32 %v1963, %v1966
      %vm1968 = vweird.f32 %v1929
      %vm1969 = vweird.f32 %v1963
      %vm1970 = vmor %vm1968, %vm1969
      %v1971 = vsel %vm1970, %v1963, %v1967
      %v1972 = vand.u32 2147483647, %v1929
      %vm1973 = vcmp.eq.f32.partialorder %v1972, 8.507059e+37
      %v1974 = vand.u32 %v1929, 2147483648
      %v1975 = vor.u32 1.1754944e-38, %v1974
      %v1976 = vsel %vm1973, %v1975, %v1971
      %v1977 = vmul.f32 %v1911, %v1976
      %v1978 = vrcp.pop %v1932
      %v1979 = vmul.f32 %v1932, %v1978
      %v1980 = vsub.f32 1.0, %v1979
      %v1981 = vmul.f32 %v1978, %v1980
      %v1982 = vadd.f32 %v1978, %v1981
      %vm1983 = vweird.f32 %v1932
      %vm1984 = vweird.f32 %v1978
      %vm1985 = vmor %vm1983, %vm1984
      %v1986 = vsel %vm1985, %v1978, %v1982
      %v1987 = vand.u32 2147483647, %v1932
      %vm1988 = vcmp.eq.f32.partialorder %v1987, 8.507059e+37
      %v1989 = vand.u32 %v1932, 2147483648
      %v1990 = vor.u32 1.1754944e-38, %v1989
      %v1991 = vsel %vm1988, %v1990, %v1986
      %v1992 = vmul.f32 %v1913, %v1991
      %v1993 = vrcp.pop %v1935
      %v1994 = vmul.f32 %v1935, %v1993
      %v1995 = vsub.f32 1.0, %v1994
      %v1996 = vmul.f32 %v1993, %v1995
      %v1997 = vadd.f32 %v1993, %v1996
      %vm1998 = vweird.f32 %v1935
      %vm1999 = vweird.f32 %v1993
      %vm2000 = vmor %vm1998, %vm1999
      %v2001 = vsel %vm2000, %v1993, %v1997
      %v2002 = vand.u32 2147483647, %v1935
      %vm2003 = vcmp.eq.f32.partialorder %v2002, 8.507059e+37
      %v2004 = vand.u32 %v1935, 2147483648
      %v2005 = vor.u32 1.1754944e-38, %v2004
      %v2006 = vsel %vm2003, %v2005, %v2001
      %v2007 = vmul.f32 %v1915, %v2006
      %v2008 = vrcp.pop %v1938
      %v2009 = vmul.f32 %v1938, %v2008
      %v2010 = vsub.f32 1.0, %v2009
      %v2011 = vmul.f32 %v2008, %v2010
      %v2012 = vadd.f32 %v2008, %v2011
      %vm2013 = vweird.f32 %v1938
      %vm2014 = vweird.f32 %v2008
      %vm2015 = vmor %vm2013, %vm2014
      %v2016 = vsel %vm2015, %v2008, %v2012
      %v2017 = vand.u32 2147483647, %v1938
      %vm2018 = vcmp.eq.f32.partialorder %v2017, 8.507059e+37
      %v2019 = vand.u32 %v1938, 2147483648
      %v2020 = vor.u32 1.1754944e-38, %v2019
      %v2021 = vsel %vm2018, %v2020, %v2016
      %v2022 = vmul.f32 %v1917, %v2021
      %v2023 = vrcp.pop %v1941
      %v2024 = vmul.f32 %v1941, %v2023
      %v2025 = vsub.f32 1.0, %v2024
      %v2026 = vmul.f32 %v2023, %v2025
      %v2027 = vadd.f32 %v2023, %v2026
      %vm2028 = vweird.f32 %v1941
      %vm2029 = vweird.f32 %v2023
      %vm2030 = vmor %vm2028, %vm2029
      %v2031 = vsel %vm2030, %v2023, %v2027
      %v2032 = vand.u32 2147483647, %v1941
      %vm2033 = vcmp.eq.f32.partialorder %v2032, 8.507059e+37
      %v2034 = vand.u32 %v1941, 2147483648
      %v2035 = vor.u32 1.1754944e-38, %v2034
      %v2036 = vsel %vm2033, %v2035, %v2031
      %v2037 = vmul.f32 %v1919, %v2036
      %v2038 = vrcp.pop %v1944
      %v2039 = vmul.f32 %v1944, %v2038
      %v2040 = vsub.f32 1.0, %v2039
      %v2041 = vmul.f32 %v2038, %v2040
      %v2042 = vadd.f32 %v2038, %v2041
      %vm2043 = vweird.f32 %v1944
      %vm2044 = vweird.f32 %v2038
      %vm2045 = vmor %vm2043, %vm2044
      %v2046 = vsel %vm2045, %v2038, %v2042
      %v2047 = vand.u32 2147483647, %v1944
      %vm2048 = vcmp.eq.f32.partialorder %v2047, 8.507059e+37
      %v2049 = vand.u32 %v1944, 2147483648
      %v2050 = vor.u32 1.1754944e-38, %v2049
      %v2051 = vsel %vm2048, %v2050, %v2046
      %v2052 = vmul.f32 %v1921, %v2051
      %v2053 = vrcp.pop %v1947
      %v2054 = vmul.f32 %v1947, %v2053
      %v2055 = vsub.f32 1.0, %v2054
      %v2056 = vmul.f32 %v2053, %v2055
      %v2057 = vadd.f32 %v2053, %v2056
      %vm2058 = vweird.f32 %v1947
      %vm2059 = vweird.f32 %v2053
      %vm2060 = vmor %vm2058, %vm2059
      %v2061 = vsel %vm2060, %v2053, %v2057
      %v2062 = vand.u32 2147483647, %v1947
      %vm2063 = vcmp.eq.f32.partialorder %v2062, 8.507059e+37
      %v2064 = vand.u32 %v1947, 2147483648
      %v2065 = vor.u32 1.1754944e-38, %v2064
      %v2066 = vsel %vm2063, %v2065, %v2061
      %v2067 = vmul.f32 %v1923, %v2066
      %2068 = vrot.lane.b32.xlu0 %v371, 88
      %v2069 = vpop.permute.xlu0 %2068
      %v2072 = vsel %vm627, %v1962, 0
      %2074 = vmatpush.msra.mxu0 0.0
      %2075 = vmatpush.msra.mxu0 0.0
      %2076 = vmatpush.msra.mxu0 0.0
      %2077 = vmatpush.msra.mxu0 0.0
      %2078 = vmatpush.msra.mxu0 0.0
      %2079 = vmatpush.msra.mxu0 0.0
      %2080 = vmatpush.msra.mxu0 0.0
      %2081 = vmatpush.msra.mxu0 0.0
      %2082 = vmatpush.msra.mxu0 0.0
      %2083 = vmatpush.msra.mxu0 0.0
      %2084 = vmatpush.msra.mxu0 0.0
      %2085 = vmatpush.msra.mxu0 0.0
      %2086 = vmatpush.msra.mxu0 0.0
      %2087 = vmatpush.msra.mxu0 0.0
      %2088 = vmatpush.msra.mxu0 0.0
      %2089 = vmatpush.msra.mxu0 %v2069
      %2090 = vmatmul.f32.gmra.mxu0 %v2072
      %v2091 = vpop.f32.mrf.mxu0
      %v2092 = vadd.f32 0.0, %v2091
      %2093 = vdwg.mxu0
      %2094 = vrot.lane.b32.xlu0 %v374, 88
      %v2095 = vpop.permute.xlu0 %2094
      %v2098 = vsel %vm627, %v1977, 0
      %2100 = vmatpush.msra.mxu0 0.0
      %2101 = vmatpush.msra.mxu0 0.0
      %2102 = vmatpush.msra.mxu0 0.0
      %2103 = vmatpush.msra.mxu0 0.0
      %2104 = vmatpush.msra.mxu0 0.0
      %2105 = vmatpush.msra.mxu0 0.0
      %2106 = vmatpush.msra.mxu0 0.0
      %2107 = vmatpush.msra.mxu0 0.0
      %2108 = vmatpush.msra.mxu0 0.0
      %2109 = vmatpush.msra.mxu0 0.0
      %2110 = vmatpush.msra.mxu0 0.0
      %2111 = vmatpush.msra.mxu0 0.0
      %2112 = vmatpush.msra.mxu0 0.0
      %2113 = vmatpush.msra.mxu0 0.0
      %2114 = vmatpush.msra.mxu0 0.0
      %2115 = vmatpush.msra.mxu0 %v2095
      %2116 = vmatmul.f32.gmra.mxu0 %v2098
      %v2117 = vpop.f32.mrf.mxu0
      %v2118 = vadd.f32 0.0, %v2117
      %2119 = vdwg.mxu0
      %2120 = vrot.lane.b32.xlu0 %v377, 88
      %v2121 = vpop.permute.xlu0 %2120
      %v2124 = vsel %vm627, %v1992, 0
      %2126 = vmatpush.msra.mxu0 0.0
      %2127 = vmatpush.msra.mxu0 0.0
      %2128 = vmatpush.msra.mxu0 0.0
      %2129 = vmatpush.msra.mxu0 0.0
      %2130 = vmatpush.msra.mxu0 0.0
      %2131 = vmatpush.msra.mxu0 0.0
      %2132 = vmatpush.msra.mxu0 0.0
      %2133 = vmatpush.msra.mxu0 0.0
      %2134 = vmatpush.msra.mxu0 0.0
      %2135 = vmatpush.msra.mxu0 0.0
      %2136 = vmatpush.msra.mxu0 0.0
      %2137 = vmatpush.msra.mxu0 0.0
      %2138 = vmatpush.msra.mxu0 0.0
      %2139 = vmatpush.msra.mxu0 0.0
      %2140 = vmatpush.msra.mxu0 0.0
      %2141 = vmatpush.msra.mxu0 %v2121
      %2142 = vmatmul.f32.gmra.mxu0 %v2124
      %v2143 = vpop.f32.mrf.mxu0
      %v2144 = vadd.f32 0.0, %v2143
      %2145 = vdwg.mxu0
      %2146 = vrot.lane.b32.xlu0 %v380, 88
      %v2147 = vpop.permute.xlu0 %2146
      %v2150 = vsel %vm627, %v2007, 0
      %2152 = vmatpush.msra.mxu0 0.0
      %2153 = vmatpush.msra.mxu0 0.0
      %2154 = vmatpush.msra.mxu0 0.0
      %2155 = vmatpush.msra.mxu0 0.0
      %2156 = vmatpush.msra.mxu0 0.0
      %2157 = vmatpush.msra.mxu0 0.0
      %2158 = vmatpush.msra.mxu0 0.0
      %2159 = vmatpush.msra.mxu0 0.0
      %2160 = vmatpush.msra.mxu0 0.0
      %2161 = vmatpush.msra.mxu0 0.0
      %2162 = vmatpush.msra.mxu0 0.0
      %2163 = vmatpush.msra.mxu0 0.0
      %2164 = vmatpush.msra.mxu0 0.0
      %2165 = vmatpush.msra.mxu0 0.0
      %2166 = vmatpush.msra.mxu0 0.0
      %2167 = vmatpush.msra.mxu0 %v2147
      %2168 = vmatmul.f32.gmra.mxu0 %v2150
      %v2169 = vpop.f32.mrf.mxu0
      %v2170 = vadd.f32 0.0, %v2169
      %2171 = vdwg.mxu0
      %2172 = vrot.lane.b32.xlu0 %v383, 88
      %v2173 = vpop.permute.xlu0 %2172
      %v2176 = vsel %vm627, %v2022, 0
      %2178 = vmatpush.msra.mxu0 0.0
      %2179 = vmatpush.msra.mxu0 0.0
      %2180 = vmatpush.msra.mxu0 0.0
      %2181 = vmatpush.msra.mxu0 0.0
      %2182 = vmatpush.msra.mxu0 0.0
      %2183 = vmatpush.msra.mxu0 0.0
      %2184 = vmatpush.msra.mxu0 0.0
      %2185 = vmatpush.msra.mxu0 0.0
      %2186 = vmatpush.msra.mxu0 0.0
      %2187 = vmatpush.msra.mxu0 0.0
      %2188 = vmatpush.msra.mxu0 0.0
      %2189 = vmatpush.msra.mxu0 0.0
      %2190 = vmatpush.msra.mxu0 0.0
      %2191 = vmatpush.msra.mxu0 0.0
      %2192 = vmatpush.msra.mxu0 0.0
      %2193 = vmatpush.msra.mxu0 %v2173
      %2194 = vmatmul.f32.gmra.mxu0 %v2176
      %v2195 = vpop.f32.mrf.mxu0
      %v2196 = vadd.f32 0.0, %v2195
      %2197 = vdwg.mxu0
      %2198 = vrot.lane.b32.xlu0 %v386, 88
      %v2199 = vpop.permute.xlu0 %2198
      %v2202 = vsel %vm627, %v2037, 0
      %2204 = vmatpush.msra.mxu0 0.0
      %2205 = vmatpush.msra.mxu0 0.0
      %2206 = vmatpush.msra.mxu0 0.0
      %2207 = vmatpush.msra.mxu0 0.0
      %2208 = vmatpush.msra.mxu0 0.0
      %2209 = vmatpush.msra.mxu0 0.0
      %2210 = vmatpush.msra.mxu0 0.0
      %2211 = vmatpush.msra.mxu0 0.0
      %2212 = vmatpush.msra.mxu0 0.0
      %2213 = vmatpush.msra.mxu0 0.0
      %2214 = vmatpush.msra.mxu0 0.0
      %2215 = vmatpush.msra.mxu0 0.0
      %2216 = vmatpush.msra.mxu0 0.0
      %2217 = vmatpush.msra.mxu0 0.0
      %2218 = vmatpush.msra.mxu0 0.0
      %2219 = vmatpush.msra.mxu0 %v2199
      %2220 = vmatmul.f32.gmra.mxu0 %v2202
      %v2221 = vpop.f32.mrf.mxu0
      %v2222 = vadd.f32 0.0, %v2221
      %2223 = vdwg.mxu0
      %2224 = vrot.lane.b32.xlu0 %v389, 88
      %v2225 = vpop.permute.xlu0 %2224
      %v2228 = vsel %vm627, %v2052, 0
      %2230 = vmatpush.msra.mxu0 0.0
      %2231 = vmatpush.msra.mxu0 0.0
      %2232 = vmatpush.msra.mxu0 0.0
      %2233 = vmatpush.msra.mxu0 0.0
      %2234 = vmatpush.msra.mxu0 0.0
      %2235 = vmatpush.msra.mxu0 0.0
      %2236 = vmatpush.msra.mxu0 0.0
      %2237 = vmatpush.msra.mxu0 0.0
      %2238 = vmatpush.msra.mxu0 0.0
      %2239 = vmatpush.msra.mxu0 0.0
      %2240 = vmatpush.msra.mxu0 0.0
      %2241 = vmatpush.msra.mxu0 0.0
      %2242 = vmatpush.msra.mxu0 0.0
      %2243 = vmatpush.msra.mxu0 0.0
      %2244 = vmatpush.msra.mxu0 0.0
      %2245 = vmatpush.msra.mxu0 %v2225
      %2246 = vmatmul.f32.gmra.mxu0 %v2228
      %v2247 = vpop.f32.mrf.mxu0
      %v2248 = vadd.f32 0.0, %v2247
      %2249 = vdwg.mxu0
      %2250 = vrot.lane.b32.xlu0 %v392, 88
      %v2251 = vpop.permute.xlu0 %2250
      %v2254 = vsel %vm627, %v2067, 0
      %2256 = vmatpush.msra.mxu0 0.0
      %2257 = vmatpush.msra.mxu0 0.0
      %2258 = vmatpush.msra.mxu0 0.0
      %2259 = vmatpush.msra.mxu0 0.0
      %2260 = vmatpush.msra.mxu0 0.0
      %2261 = vmatpush.msra.mxu0 0.0
      %2262 = vmatpush.msra.mxu0 0.0
      %2263 = vmatpush.msra.mxu0 0.0
      %2264 = vmatpush.msra.mxu0 0.0
      %2265 = vmatpush.msra.mxu0 0.0
      %2266 = vmatpush.msra.mxu0 0.0
      %2267 = vmatpush.msra.mxu0 0.0
      %2268 = vmatpush.msra.mxu0 0.0
      %2269 = vmatpush.msra.mxu0 0.0
      %2270 = vmatpush.msra.mxu0 0.0
      %2271 = vmatpush.msra.mxu0 %v2251
      %2272 = vmatmul.f32.gmra.mxu0 %v2254
      %v2273 = vpop.f32.mrf.mxu0
      %v2274 = vadd.f32 0.0, %v2273
      %2275 = vdwg.mxu0
      %2276 = vrot.lane.b32.xlu0 %v394, 116
      %v2277 = vpop.permute.xlu0 %2276
      %2278 = vrot.lane.b32.xlu0 %v371, 100
      %v2279 = vpop.permute.xlu0 %2278
      %v2280 = vsel %vm405, %v2277, 0
      %v2282 = vsel %vm405, %v2279, 0
      %2284 = vmatpush.xpose.msra.mxu0 0.0
      %2285 = vmatpush.xpose.msra.mxu0 0.0
      %2286 = vmatpush.xpose.msra.mxu0 0.0
      %2287 = vmatpush.xpose.msra.mxu0 0.0
      %2288 = vmatpush.xpose.msra.mxu0 0.0
      %2289 = vmatpush.xpose.msra.mxu0 0.0
      %2290 = vmatpush.xpose.msra.mxu0 0.0
      %2291 = vmatpush.xpose.msra.mxu0 0.0
      %2292 = vmatpush.xpose.msra.mxu0 0.0
      %2293 = vmatpush.xpose.msra.mxu0 0.0
      %2294 = vmatpush.xpose.msra.mxu0 0.0
      %2295 = vmatpush.xpose.msra.mxu0 0.0
      %2296 = vmatpush.xpose.msra.mxu0 0.0
      %2297 = vmatpush.xpose.msra.mxu0 0.0
      %2298 = vmatpush.xpose.msra.mxu0 0.0
      %2299 = vmatpush.xpose.msra.mxu0 %v2282
      %2300 = vmatmul.f32.gmra.mxu0 %v2280
      %v2301 = vpop.f32.mrf.mxu0
      %v2302 = vadd.f32 0.0, %v2301
      %2303 = vdwg.mxu0
      %2304 = vrot.lane.b32.xlu0 %v395, 116
      %v2305 = vpop.permute.xlu0 %2304
      %2306 = vrot.lane.b32.xlu0 %v374, 100
      %v2307 = vpop.permute.xlu0 %2306
      %v2308 = vsel %vm405, %v2305, 0
      %v2310 = vsel %vm405, %v2307, 0
      %2312 = vmatpush.xpose.msra.mxu0 0.0
      %2313 = vmatpush.xpose.msra.mxu0 0.0
      %2314 = vmatpush.xpose.msra.mxu0 0.0
      %2315 = vmatpush.xpose.msra.mxu0 0.0
      %2316 = vmatpush.xpose.msra.mxu0 0.0
      %2317 = vmatpush.xpose.msra.mxu0 0.0
      %2318 = vmatpush.xpose.msra.mxu0 0.0
      %2319 = vmatpush.xpose.msra.mxu0 0.0
      %2320 = vmatpush.xpose.msra.mxu0 0.0
      %2321 = vmatpush.xpose.msra.mxu0 0.0
      %2322 = vmatpush.xpose.msra.mxu0 0.0
      %2323 = vmatpush.xpose.msra.mxu0 0.0
      %2324 = vmatpush.xpose.msra.mxu0 0.0
      %2325 = vmatpush.xpose.msra.mxu0 0.0
      %2326 = vmatpush.xpose.msra.mxu0 0.0
      %2327 = vmatpush.xpose.msra.mxu0 %v2310
      %2328 = vmatmul.f32.gmra.mxu0 %v2308
      %v2329 = vpop.f32.mrf.mxu0
      %v2330 = vadd.f32 0.0, %v2329
      %2331 = vdwg.mxu0
      %2332 = vrot.lane.b32.xlu0 %v396, 116
      %v2333 = vpop.permute.xlu0 %2332
      %2334 = vrot.lane.b32.xlu0 %v377, 100
      %v2335 = vpop.permute.xlu0 %2334
      %v2336 = vsel %vm405, %v2333, 0
      %v2338 = vsel %vm405, %v2335, 0
      %2340 = vmatpush.xpose.msra.mxu0 0.0
      %2341 = vmatpush.xpose.msra.mxu0 0.0
      %2342 = vmatpush.xpose.msra.mxu0 0.0
      %2343 = vmatpush.xpose.msra.mxu0 0.0
      %2344 = vmatpush.xpose.msra.mxu0 0.0
      %2345 = vmatpush.xpose.msra.mxu0 0.0
      %2346 = vmatpush.xpose.msra.mxu0 0.0
      %2347 = vmatpush.xpose.msra.mxu0 0.0
      %2348 = vmatpush.xpose.msra.mxu0 0.0
      %2349 = vmatpush.xpose.msra.mxu0 0.0
      %2350 = vmatpush.xpose.msra.mxu0 0.0
      %2351 = vmatpush.xpose.msra.mxu0 0.0
      %2352 = vmatpush.xpose.msra.mxu0 0.0
      %2353 = vmatpush.xpose.msra.mxu0 0.0
      %2354 = vmatpush.xpose.msra.mxu0 0.0
      %2355 = vmatpush.xpose.msra.mxu0 %v2338
      %2356 = vmatmul.f32.gmra.mxu0 %v2336
      %v2357 = vpop.f32.mrf.mxu0
      %v2358 = vadd.f32 0.0, %v2357
      %2359 = vdwg.mxu0
      %2360 = vrot.lane.b32.xlu0 %v397, 116
      %v2361 = vpop.permute.xlu0 %2360
      %2362 = vrot.lane.b32.xlu0 %v380, 100
      %v2363 = vpop.permute.xlu0 %2362
      %v2364 = vsel %vm405, %v2361, 0
      %v2366 = vsel %vm405, %v2363, 0
      %2368 = vmatpush.xpose.msra.mxu0 0.0
      %2369 = vmatpush.xpose.msra.mxu0 0.0
      %2370 = vmatpush.xpose.msra.mxu0 0.0
      %2371 = vmatpush.xpose.msra.mxu0 0.0
      %2372 = vmatpush.xpose.msra.mxu0 0.0
      %2373 = vmatpush.xpose.msra.mxu0 0.0
      %2374 = vmatpush.xpose.msra.mxu0 0.0
      %2375 = vmatpush.xpose.msra.mxu0 0.0
      %2376 = vmatpush.xpose.msra.mxu0 0.0
      %2377 = vmatpush.xpose.msra.mxu0 0.0
      %2378 = vmatpush.xpose.msra.mxu0 0.0
      %2379 = vmatpush.xpose.msra.mxu0 0.0
      %2380 = vmatpush.xpose.msra.mxu0 0.0
      %2381 = vmatpush.xpose.msra.mxu0 0.0
      %2382 = vmatpush.xpose.msra.mxu0 0.0
      %2383 = vmatpush.xpose.msra.mxu0 %v2366
      %2384 = vmatmul.f32.gmra.mxu0 %v2364
      %v2385 = vpop.f32.mrf.mxu0
      %v2386 = vadd.f32 0.0, %v2385
      %2387 = vdwg.mxu0
      %2388 = vrot.lane.b32.xlu0 %v398, 116
      %v2389 = vpop.permute.xlu0 %2388
      %2390 = vrot.lane.b32.xlu0 %v383, 100
      %v2391 = vpop.permute.xlu0 %2390
      %v2392 = vsel %vm405, %v2389, 0
      %v2394 = vsel %vm405, %v2391, 0
      %2396 = vmatpush.xpose.msra.mxu0 0.0
      %2397 = vmatpush.xpose.msra.mxu0 0.0
      %2398 = vmatpush.xpose.msra.mxu0 0.0
      %2399 = vmatpush.xpose.msra.mxu0 0.0
      %2400 = vmatpush.xpose.msra.mxu0 0.0
      %2401 = vmatpush.xpose.msra.mxu0 0.0
      %2402 = vmatpush.xpose.msra.mxu0 0.0
      %2403 = vmatpush.xpose.msra.mxu0 0.0
      %2404 = vmatpush.xpose.msra.mxu0 0.0
      %2405 = vmatpush.xpose.msra.mxu0 0.0
      %2406 = vmatpush.xpose.msra.mxu0 0.0
      %2407 = vmatpush.xpose.msra.mxu0 0.0
      %2408 = vmatpush.xpose.msra.mxu0 0.0
      %2409 = vmatpush.xpose.msra.mxu0 0.0
      %2410 = vmatpush.xpose.msra.mxu0 0.0
      %2411 = vmatpush.xpose.msra.mxu0 %v2394
      %2412 = vmatmul.f32.gmra.mxu0 %v2392
      %v2413 = vpop.f32.mrf.mxu0
      %v2414 = vadd.f32 0.0, %v2413
      %2415 = vdwg.mxu0
      %2416 = vrot.lane.b32.xlu0 %v399, 116
      %v2417 = vpop.permute.xlu0 %2416
      %2418 = vrot.lane.b32.xlu0 %v386, 100
      %v2419 = vpop.permute.xlu0 %2418
      %v2420 = vsel %vm405, %v2417, 0
      %v2422 = vsel %vm405, %v2419, 0
      %2424 = vmatpush.xpose.msra.mxu0 0.0
      %2425 = vmatpush.xpose.msra.mxu0 0.0
      %2426 = vmatpush.xpose.msra.mxu0 0.0
      %2427 = vmatpush.xpose.msra.mxu0 0.0
      %2428 = vmatpush.xpose.msra.mxu0 0.0
      %2429 = vmatpush.xpose.msra.mxu0 0.0
      %2430 = vmatpush.xpose.msra.mxu0 0.0
      %2431 = vmatpush.xpose.msra.mxu0 0.0
      %2432 = vmatpush.xpose.msra.mxu0 0.0
      %2433 = vmatpush.xpose.msra.mxu0 0.0
      %2434 = vmatpush.xpose.msra.mxu0 0.0
      %2435 = vmatpush.xpose.msra.mxu0 0.0
      %2436 = vmatpush.xpose.msra.mxu0 0.0
      %2437 = vmatpush.xpose.msra.mxu0 0.0
      %2438 = vmatpush.xpose.msra.mxu0 0.0
      %2439 = vmatpush.xpose.msra.mxu0 %v2422
      %2440 = vmatmul.f32.gmra.mxu0 %v2420
      %v2441 = vpop.f32.mrf.mxu0
      %v2442 = vadd.f32 0.0, %v2441
      %2443 = vdwg.mxu0
      %2444 = vrot.lane.b32.xlu0 %v400, 116
      %v2445 = vpop.permute.xlu0 %2444
      %2446 = vrot.lane.b32.xlu0 %v389, 100
      %v2447 = vpop.permute.xlu0 %2446
      %v2448 = vsel %vm405, %v2445, 0
      %v2450 = vsel %vm405, %v2447, 0
      %2452 = vmatpush.xpose.msra.mxu0 0.0
      %2453 = vmatpush.xpose.msra.mxu0 0.0
      %2454 = vmatpush.xpose.msra.mxu0 0.0
      %2455 = vmatpush.xpose.msra.mxu0 0.0
      %2456 = vmatpush.xpose.msra.mxu0 0.0
      %2457 = vmatpush.xpose.msra.mxu0 0.0
      %2458 = vmatpush.xpose.msra.mxu0 0.0
      %2459 = vmatpush.xpose.msra.mxu0 0.0
      %2460 = vmatpush.xpose.msra.mxu0 0.0
      %2461 = vmatpush.xpose.msra.mxu0 0.0
      %2462 = vmatpush.xpose.msra.mxu0 0.0
      %2463 = vmatpush.xpose.msra.mxu0 0.0
      %2464 = vmatpush.xpose.msra.mxu0 0.0
      %2465 = vmatpush.xpose.msra.mxu0 0.0
      %2466 = vmatpush.xpose.msra.mxu0 0.0
      %2467 = vmatpush.xpose.msra.mxu0 %v2450
      %2468 = vmatmul.f32.gmra.mxu0 %v2448
      %v2469 = vpop.f32.mrf.mxu0
      %v2470 = vadd.f32 0.0, %v2469
      %2471 = vdwg.mxu0
      %2472 = vrot.lane.b32.xlu0 %v401, 116
      %v2473 = vpop.permute.xlu0 %2472
      %2474 = vrot.lane.b32.xlu0 %v392, 100
      %v2475 = vpop.permute.xlu0 %2474
      %v2476 = vsel %vm405, %v2473, 0
      %v2478 = vsel %vm405, %v2475, 0
      %2480 = vmatpush.xpose.msra.mxu0 0.0
      %2481 = vmatpush.xpose.msra.mxu0 0.0
      %2482 = vmatpush.xpose.msra.mxu0 0.0
      %2483 = vmatpush.xpose.msra.mxu0 0.0
      %2484 = vmatpush.xpose.msra.mxu0 0.0
      %2485 = vmatpush.xpose.msra.mxu0 0.0
      %2486 = vmatpush.xpose.msra.mxu0 0.0
      %2487 = vmatpush.xpose.msra.mxu0 0.0
      %2488 = vmatpush.xpose.msra.mxu0 0.0
      %2489 = vmatpush.xpose.msra.mxu0 0.0
      %2490 = vmatpush.xpose.msra.mxu0 0.0
      %2491 = vmatpush.xpose.msra.mxu0 0.0
      %2492 = vmatpush.xpose.msra.mxu0 0.0
      %2493 = vmatpush.xpose.msra.mxu0 0.0
      %2494 = vmatpush.xpose.msra.mxu0 0.0
      %2495 = vmatpush.xpose.msra.mxu0 %v2478
      %2496 = vmatmul.f32.gmra.mxu0 %v2476
      %v2497 = vpop.f32.mrf.mxu0
      %v2498 = vadd.f32 0.0, %v2497
      %2499 = vdwg.mxu0
      %v2500 = vsel %vm627, %v2302, -inf
      %2501 = vmax.xlane.f32.xlu0 %v2500
      %v2502 = vpop.xlane.xlu0 %2501
      %v2503 = vsel %vm627, %v2330, -inf
      %2504 = vmax.xlane.f32.xlu0 %v2503
      %v2505 = vpop.xlane.xlu0 %2504
      %v2506 = vsel %vm627, %v2358, -inf
      %2507 = vmax.xlane.f32.xlu0 %v2506
      %v2508 = vpop.xlane.xlu0 %2507
      %v2509 = vsel %vm627, %v2386, -inf
      %2510 = vmax.xlane.f32.xlu0 %v2509
      %v2511 = vpop.xlane.xlu0 %2510
      %v2512 = vsel %vm627, %v2414, -inf
      %2513 = vmax.xlane.f32.xlu0 %v2512
      %v2514 = vpop.xlane.xlu0 %2513
      %v2515 = vsel %vm627, %v2442, -inf
      %2516 = vmax.xlane.f32.xlu0 %v2515
      %v2517 = vpop.xlane.xlu0 %2516
      %v2518 = vsel %vm627, %v2470, -inf
      %2519 = vmax.xlane.f32.xlu0 %v2518
      %v2520 = vpop.xlane.xlu0 %2519
      %v2521 = vsel %vm627, %v2498, -inf
      %2522 = vmax.xlane.f32.xlu0 %v2521
      %v2523 = vpop.xlane.xlu0 %2522
      %v2524 = vsub.f32 %v2302, %v2502
      %v2525 = vsub.f32 %v2330, %v2505
      %v2526 = vsub.f32 %v2358, %v2508
      %v2527 = vsub.f32 %v2386, %v2511
      %v2528 = vsub.f32 %v2414, %v2514
      %v2529 = vsub.f32 %v2442, %v2517
      %v2530 = vsub.f32 %v2470, %v2520
      %v2531 = vsub.f32 %v2498, %v2523
      %v2532 = vmul.f32 %v2524, 1.442695
      %v2533 = vpow.pop %v2532
      %v2534 = vmul.f32 %v2525, 1.442695
      %v2535 = vpow.pop %v2534
      %v2536 = vmul.f32 %v2526, 1.442695
      %v2537 = vpow.pop %v2536
      %v2538 = vmul.f32 %v2527, 1.442695
      %v2539 = vpow.pop %v2538
      %v2540 = vmul.f32 %v2528, 1.442695
      %v2541 = vpow.pop %v2540
      %v2542 = vmul.f32 %v2529, 1.442695
      %v2543 = vpow.pop %v2542
      %v2544 = vmul.f32 %v2530, 1.442695
      %v2545 = vpow.pop %v2544
      %v2546 = vmul.f32 %v2531, 1.442695
      %v2547 = vpow.pop %v2546
      %v2548 = vsel %vm627, %v2533, 0.0
      %2549 = vadd.xlane.f32.xlu0 %v2548
      %v2550 = vpop.xlane.xlu0 %2549
      %v2551 = vsel %vm627, %v2535, 0.0
      %2552 = vadd.xlane.f32.xlu0 %v2551
      %v2553 = vpop.xlane.xlu0 %2552
      %v2554 = vsel %vm627, %v2537, 0.0
      %2555 = vadd.xlane.f32.xlu0 %v2554
      %v2556 = vpop.xlane.xlu0 %2555
      %v2557 = vsel %vm627, %v2539, 0.0
      %2558 = vadd.xlane.f32.xlu0 %v2557
      %v2559 = vpop.xlane.xlu0 %2558
      %v2560 = vsel %vm627, %v2541, 0.0
      %2561 = vadd.xlane.f32.xlu0 %v2560
      %v2562 = vpop.xlane.xlu0 %2561
      %v2563 = vsel %vm627, %v2543, 0.0
      %2564 = vadd.xlane.f32.xlu0 %v2563
      %v2565 = vpop.xlane.xlu0 %2564
      %v2566 = vsel %vm627, %v2545, 0.0
      %2567 = vadd.xlane.f32.xlu0 %v2566
      %v2568 = vpop.xlane.xlu0 %2567
      %v2569 = vsel %vm627, %v2547, 0.0
      %2570 = vadd.xlane.f32.xlu0 %v2569
      %v2571 = vpop.xlane.xlu0 %2570
      %v2572 = vrcp.pop %v2550
      %v2573 = vmul.f32 %v2550, %v2572
      %v2574 = vsub.f32 1.0, %v2573
      %v2575 = vmul.f32 %v2572, %v2574
      %v2576 = vadd.f32 %v2572, %v2575
      %vm2577 = vweird.f32 %v2550
      %vm2578 = vweird.f32 %v2572
      %vm2579 = vmor %vm2577, %vm2578
      %v2580 = vsel %vm2579, %v2572, %v2576
      %v2581 = vand.u32 2147483647, %v2550
      %vm2582 = vcmp.eq.f32.partialorder %v2581, 8.507059e+37
      %v2583 = vand.u32 %v2550, 2147483648
      %v2584 = vor.u32 1.1754944e-38, %v2583
      %v2585 = vsel %vm2582, %v2584, %v2580
      %v2586 = vmul.f32 %v2533, %v2585
      %v2587 = vrcp.pop %v2553
      %v2588 = vmul.f32 %v2553, %v2587
      %v2589 = vsub.f32 1.0, %v2588
      %v2590 = vmul.f32 %v2587, %v2589
      %v2591 = vadd.f32 %v2587, %v2590
      %vm2592 = vweird.f32 %v2553
      %vm2593 = vweird.f32 %v2587
      %vm2594 = vmor %vm2592, %vm2593
      %v2595 = vsel %vm2594, %v2587, %v2591
      %v2596 = vand.u32 2147483647, %v2553
      %vm2597 = vcmp.eq.f32.partialorder %v2596, 8.507059e+37
      %v2598 = vand.u32 %v2553, 2147483648
      %v2599 = vor.u32 1.1754944e-38, %v2598
      %v2600 = vsel %vm2597, %v2599, %v2595
      %v2601 = vmul.f32 %v2535, %v2600
      %v2602 = vrcp.pop %v2556
      %v2603 = vmul.f32 %v2556, %v2602
      %v2604 = vsub.f32 1.0, %v2603
      %v2605 = vmul.f32 %v2602, %v2604
      %v2606 = vadd.f32 %v2602, %v2605
      %vm2607 = vweird.f32 %v2556
      %vm2608 = vweird.f32 %v2602
      %vm2609 = vmor %vm2607, %vm2608
      %v2610 = vsel %vm2609, %v2602, %v2606
      %v2611 = vand.u32 2147483647, %v2556
      %vm2612 = vcmp.eq.f32.partialorder %v2611, 8.507059e+37
      %v2613 = vand.u32 %v2556, 2147483648
      %v2614 = vor.u32 1.1754944e-38, %v2613
      %v2615 = vsel %vm2612, %v2614, %v2610
      %v2616 = vmul.f32 %v2537, %v2615
      %v2617 = vrcp.pop %v2559
      %v2618 = vmul.f32 %v2559, %v2617
      %v2619 = vsub.f32 1.0, %v2618
      %v2620 = vmul.f32 %v2617, %v2619
      %v2621 = vadd.f32 %v2617, %v2620
      %vm2622 = vweird.f32 %v2559
      %vm2623 = vweird.f32 %v2617
      %vm2624 = vmor %vm2622, %vm2623
      %v2625 = vsel %vm2624, %v2617, %v2621
      %v2626 = vand.u32 2147483647, %v2559
      %vm2627 = vcmp.eq.f32.partialorder %v2626, 8.507059e+37
      %v2628 = vand.u32 %v2559, 2147483648
      %v2629 = vor.u32 1.1754944e-38, %v2628
      %v2630 = vsel %vm2627, %v2629, %v2625
      %v2631 = vmul.f32 %v2539, %v2630
      %v2632 = vrcp.pop %v2562
      %v2633 = vmul.f32 %v2562, %v2632
      %v2634 = vsub.f32 1.0, %v2633
      %v2635 = vmul.f32 %v2632, %v2634
      %v2636 = vadd.f32 %v2632, %v2635
      %vm2637 = vweird.f32 %v2562
      %vm2638 = vweird.f32 %v2632
      %vm2639 = vmor %vm2637, %vm2638
      %v2640 = vsel %vm2639, %v2632, %v2636
      %v2641 = vand.u32 2147483647, %v2562
      %vm2642 = vcmp.eq.f32.partialorder %v2641, 8.507059e+37
      %v2643 = vand.u32 %v2562, 2147483648
      %v2644 = vor.u32 1.1754944e-38, %v2643
      %v2645 = vsel %vm2642, %v2644, %v2640
      %v2646 = vmul.f32 %v2541, %v2645
      %v2647 = vrcp.pop %v2565
      %v2648 = vmul.f32 %v2565, %v2647
      %v2649 = vsub.f32 1.0, %v2648
      %v2650 = vmul.f32 %v2647, %v2649
      %v2651 = vadd.f32 %v2647, %v2650
      %vm2652 = vweird.f32 %v2565
      %vm2653 = vweird.f32 %v2647
      %vm2654 = vmor %vm2652, %vm2653
      %v2655 = vsel %vm2654, %v2647, %v2651
      %v2656 = vand.u32 2147483647, %v2565
      %vm2657 = vcmp.eq.f32.partialorder %v2656, 8.507059e+37
      %v2658 = vand.u32 %v2565, 2147483648
      %v2659 = vor.u32 1.1754944e-38, %v2658
      %v2660 = vsel %vm2657, %v2659, %v2655
      %v2661 = vmul.f32 %v2543, %v2660
      %v2662 = vrcp.pop %v2568
      %v2663 = vmul.f32 %v2568, %v2662
      %v2664 = vsub.f32 1.0, %v2663
      %v2665 = vmul.f32 %v2662, %v2664
      %v2666 = vadd.f32 %v2662, %v2665
      %vm2667 = vweird.f32 %v2568
      %vm2668 = vweird.f32 %v2662
      %vm2669 = vmor %vm2667, %vm2668
      %v2670 = vsel %vm2669, %v2662, %v2666
      %v2671 = vand.u32 2147483647, %v2568
      %vm2672 = vcmp.eq.f32.partialorder %v2671, 8.507059e+37
      %v2673 = vand.u32 %v2568, 2147483648
      %v2674 = vor.u32 1.1754944e-38, %v2673
      %v2675 = vsel %vm2672, %v2674, %v2670
      %v2676 = vmul.f32 %v2545, %v2675
      %v2677 = vrcp.pop %v2571
      %v2678 = vmul.f32 %v2571, %v2677
      %v2679 = vsub.f32 1.0, %v2678
      %v2680 = vmul.f32 %v2677, %v2679
      %v2681 = vadd.f32 %v2677, %v2680
      %vm2682 = vweird.f32 %v2571
      %vm2683 = vweird.f32 %v2677
      %vm2684 = vmor %vm2682, %vm2683
      %v2685 = vsel %vm2684, %v2677, %v2681
      %v2686 = vand.u32 2147483647, %v2571
      %vm2687 = vcmp.eq.f32.partialorder %v2686, 8.507059e+37
      %v2688 = vand.u32 %v2571, 2147483648
      %v2689 = vor.u32 1.1754944e-38, %v2688
      %v2690 = vsel %vm2687, %v2689, %v2685
      %v2691 = vmul.f32 %v2547, %v2690
      %2692 = vrot.lane.b32.xlu0 %v371, 84
      %v2693 = vpop.permute.xlu0 %2692
      %v2696 = vsel %vm627, %v2586, 0
      %2698 = vmatpush.msra.mxu0 0.0
      %2699 = vmatpush.msra.mxu0 0.0
      %2700 = vmatpush.msra.mxu0 0.0
      %2701 = vmatpush.msra.mxu0 0.0
      %2702 = vmatpush.msra.mxu0 0.0
      %2703 = vmatpush.msra.mxu0 0.0
      %2704 = vmatpush.msra.mxu0 0.0
      %2705 = vmatpush.msra.mxu0 0.0
      %2706 = vmatpush.msra.mxu0 0.0
      %2707 = vmatpush.msra.mxu0 0.0
      %2708 = vmatpush.msra.mxu0 0.0
      %2709 = vmatpush.msra.mxu0 0.0
      %2710 = vmatpush.msra.mxu0 0.0
      %2711 = vmatpush.msra.mxu0 0.0
      %2712 = vmatpush.msra.mxu0 0.0
      %2713 = vmatpush.msra.mxu0 %v2693
      %2714 = vmatmul.f32.gmra.mxu0 %v2696
      %v2715 = vpop.f32.mrf.mxu0
      %v2716 = vadd.f32 0.0, %v2715
      %2717 = vdwg.mxu0
      %2718 = vrot.lane.b32.xlu0 %v374, 84
      %v2719 = vpop.permute.xlu0 %2718
      %v2722 = vsel %vm627, %v2601, 0
      %2724 = vmatpush.msra.mxu0 0.0
      %2725 = vmatpush.msra.mxu0 0.0
      %2726 = vmatpush.msra.mxu0 0.0
      %2727 = vmatpush.msra.mxu0 0.0
      %2728 = vmatpush.msra.mxu0 0.0
      %2729 = vmatpush.msra.mxu0 0.0
      %2730 = vmatpush.msra.mxu0 0.0
      %2731 = vmatpush.msra.mxu0 0.0
      %2732 = vmatpush.msra.mxu0 0.0
      %2733 = vmatpush.msra.mxu0 0.0
      %2734 = vmatpush.msra.mxu0 0.0
      %2735 = vmatpush.msra.mxu0 0.0
      %2736 = vmatpush.msra.mxu0 0.0
      %2737 = vmatpush.msra.mxu0 0.0
      %2738 = vmatpush.msra.mxu0 0.0
      %2739 = vmatpush.msra.mxu0 %v2719
      %2740 = vmatmul.f32.gmra.mxu0 %v2722
      %v2741 = vpop.f32.mrf.mxu0
      %v2742 = vadd.f32 0.0, %v2741
      %2743 = vdwg.mxu0
      %2744 = vrot.lane.b32.xlu0 %v377, 84
      %v2745 = vpop.permute.xlu0 %2744
      %v2748 = vsel %vm627, %v2616, 0
      %2750 = vmatpush.msra.mxu0 0.0
      %2751 = vmatpush.msra.mxu0 0.0
      %2752 = vmatpush.msra.mxu0 0.0
      %2753 = vmatpush.msra.mxu0 0.0
      %2754 = vmatpush.msra.mxu0 0.0
      %2755 = vmatpush.msra.mxu0 0.0
      %2756 = vmatpush.msra.mxu0 0.0
      %2757 = vmatpush.msra.mxu0 0.0
      %2758 = vmatpush.msra.mxu0 0.0
      %2759 = vmatpush.msra.mxu0 0.0
      %2760 = vmatpush.msra.mxu0 0.0
      %2761 = vmatpush.msra.mxu0 0.0
      %2762 = vmatpush.msra.mxu0 0.0
      %2763 = vmatpush.msra.mxu0 0.0
      %2764 = vmatpush.msra.mxu0 0.0
      %2765 = vmatpush.msra.mxu0 %v2745
      %2766 = vmatmul.f32.gmra.mxu0 %v2748
      %v2767 = vpop.f32.mrf.mxu0
      %v2768 = vadd.f32 0.0, %v2767
      %2769 = vdwg.mxu0
      %2770 = vrot.lane.b32.xlu0 %v380, 84
      %v2771 = vpop.permute.xlu0 %2770
      %v2774 = vsel %vm627, %v2631, 0
      %2776 = vmatpush.msra.mxu0 0.0
      %2777 = vmatpush.msra.mxu0 0.0
      %2778 = vmatpush.msra.mxu0 0.0
      %2779 = vmatpush.msra.mxu0 0.0
      %2780 = vmatpush.msra.mxu0 0.0
      %2781 = vmatpush.msra.mxu0 0.0
      %2782 = vmatpush.msra.mxu0 0.0
      %2783 = vmatpush.msra.mxu0 0.0
      %2784 = vmatpush.msra.mxu0 0.0
      %2785 = vmatpush.msra.mxu0 0.0
      %2786 = vmatpush.msra.mxu0 0.0
      %2787 = vmatpush.msra.mxu0 0.0
      %2788 = vmatpush.msra.mxu0 0.0
      %2789 = vmatpush.msra.mxu0 0.0
      %2790 = vmatpush.msra.mxu0 0.0
      %2791 = vmatpush.msra.mxu0 %v2771
      %2792 = vmatmul.f32.gmra.mxu0 %v2774
      %v2793 = vpop.f32.mrf.mxu0
      %v2794 = vadd.f32 0.0, %v2793
      %2795 = vdwg.mxu0
      %2796 = vrot.lane.b32.xlu0 %v383, 84
      %v2797 = vpop.permute.xlu0 %2796
      %v2800 = vsel %vm627, %v2646, 0
      %2802 = vmatpush.msra.mxu0 0.0
      %2803 = vmatpush.msra.mxu0 0.0
      %2804 = vmatpush.msra.mxu0 0.0
      %2805 = vmatpush.msra.mxu0 0.0
      %2806 = vmatpush.msra.mxu0 0.0
      %2807 = vmatpush.msra.mxu0 0.0
      %2808 = vmatpush.msra.mxu0 0.0
      %2809 = vmatpush.msra.mxu0 0.0
      %2810 = vmatpush.msra.mxu0 0.0
      %2811 = vmatpush.msra.mxu0 0.0
      %2812 = vmatpush.msra.mxu0 0.0
      %2813 = vmatpush.msra.mxu0 0.0
      %2814 = vmatpush.msra.mxu0 0.0
      %2815 = vmatpush.msra.mxu0 0.0
      %2816 = vmatpush.msra.mxu0 0.0
      %2817 = vmatpush.msra.mxu0 %v2797
      %2818 = vmatmul.f32.gmra.mxu0 %v2800
      %v2819 = vpop.f32.mrf.mxu0
      %v2820 = vadd.f32 0.0, %v2819
      %2821 = vdwg.mxu0
      %2822 = vrot.lane.b32.xlu0 %v386, 84
      %v2823 = vpop.permute.xlu0 %2822
      %v2826 = vsel %vm627, %v2661, 0
      %2828 = vmatpush.msra.mxu0 0.0
      %2829 = vmatpush.msra.mxu0 0.0
      %2830 = vmatpush.msra.mxu0 0.0
      %2831 = vmatpush.msra.mxu0 0.0
      %2832 = vmatpush.msra.mxu0 0.0
      %2833 = vmatpush.msra.mxu0 0.0
      %2834 = vmatpush.msra.mxu0 0.0
      %2835 = vmatpush.msra.mxu0 0.0
      %2836 = vmatpush.msra.mxu0 0.0
      %2837 = vmatpush.msra.mxu0 0.0
      %2838 = vmatpush.msra.mxu0 0.0
      %2839 = vmatpush.msra.mxu0 0.0
      %2840 = vmatpush.msra.mxu0 0.0
      %2841 = vmatpush.msra.mxu0 0.0
      %2842 = vmatpush.msra.mxu0 0.0
      %2843 = vmatpush.msra.mxu0 %v2823
      %2844 = vmatmul.f32.gmra.mxu0 %v2826
      %v2845 = vpop.f32.mrf.mxu0
      %v2846 = vadd.f32 0.0, %v2845
      %2847 = vdwg.mxu0
      %2848 = vrot.lane.b32.xlu0 %v389, 84
      %v2849 = vpop.permute.xlu0 %2848
      %v2852 = vsel %vm627, %v2676, 0
      %2854 = vmatpush.msra.mxu0 0.0
      %2855 = vmatpush.msra.mxu0 0.0
      %2856 = vmatpush.msra.mxu0 0.0
      %2857 = vmatpush.msra.mxu0 0.0
      %2858 = vmatpush.msra.mxu0 0.0
      %2859 = vmatpush.msra.mxu0 0.0
      %2860 = vmatpush.msra.mxu0 0.0
      %2861 = vmatpush.msra.mxu0 0.0
      %2862 = vmatpush.msra.mxu0 0.0
      %2863 = vmatpush.msra.mxu0 0.0
      %2864 = vmatpush.msra.mxu0 0.0
      %2865 = vmatpush.msra.mxu0 0.0
      %2866 = vmatpush.msra.mxu0 0.0
      %2867 = vmatpush.msra.mxu0 0.0
      %2868 = vmatpush.msra.mxu0 0.0
      %2869 = vmatpush.msra.mxu0 %v2849
      %2870 = vmatmul.f32.gmra.mxu0 %v2852
      %v2871 = vpop.f32.mrf.mxu0
      %v2872 = vadd.f32 0.0, %v2871
      %2873 = vdwg.mxu0
      %2874 = vrot.lane.b32.xlu0 %v392, 84
      %v2875 = vpop.permute.xlu0 %2874
      %v2878 = vsel %vm627, %v2691, 0
      %2880 = vmatpush.msra.mxu0 0.0
      %2881 = vmatpush.msra.mxu0 0.0
      %2882 = vmatpush.msra.mxu0 0.0
      %2883 = vmatpush.msra.mxu0 0.0
      %2884 = vmatpush.msra.mxu0 0.0
      %2885 = vmatpush.msra.mxu0 0.0
      %2886 = vmatpush.msra.mxu0 0.0
      %2887 = vmatpush.msra.mxu0 0.0
      %2888 = vmatpush.msra.mxu0 0.0
      %2889 = vmatpush.msra.mxu0 0.0
      %2890 = vmatpush.msra.mxu0 0.0
      %2891 = vmatpush.msra.mxu0 0.0
      %2892 = vmatpush.msra.mxu0 0.0
      %2893 = vmatpush.msra.mxu0 0.0
      %2894 = vmatpush.msra.mxu0 0.0
      %2895 = vmatpush.msra.mxu0 %v2875
      %2896 = vmatmul.f32.gmra.mxu0 %v2878
      %v2897 = vpop.f32.mrf.mxu0
      %v2898 = vadd.f32 0.0, %v2897
      %2899 = vdwg.mxu0
      %2908 = vrot.lane.b32.xlu0 %v1468, 4
      %v2909 = vpop.permute.xlu0 %2908
      %2910 = vrot.lane.b32.xlu0 %v1494, 4
      %v2911 = vpop.permute.xlu0 %2910
      %2912 = vrot.lane.b32.xlu0 %v1520, 4
      %v2913 = vpop.permute.xlu0 %2912
      %2914 = vrot.lane.b32.xlu0 %v1546, 4
      %v2915 = vpop.permute.xlu0 %2914
      %2916 = vrot.lane.b32.xlu0 %v1572, 4
      %v2917 = vpop.permute.xlu0 %2916
      %2918 = vrot.lane.b32.xlu0 %v1598, 4
      %v2919 = vpop.permute.xlu0 %2918
      %2920 = vrot.lane.b32.xlu0 %v1624, 4
      %v2921 = vpop.permute.xlu0 %2920
      %2922 = vrot.lane.b32.xlu0 %v1650, 4
      %v2923 = vpop.permute.xlu0 %2922
      %2940 = vrot.lane.b32.xlu0 %v2092, 8
      %v2941 = vpop.permute.xlu0 %2940
      %2942 = vrot.lane.b32.xlu0 %v2118, 8
      %v2943 = vpop.permute.xlu0 %2942
      %2944 = vrot.lane.b32.xlu0 %v2144, 8
      %v2945 = vpop.permute.xlu0 %2944
      %2946 = vrot.lane.b32.xlu0 %v2170, 8
      %v2947 = vpop.permute.xlu0 %2946
      %2948 = vrot.lane.b32.xlu0 %v2196, 8
      %v2949 = vpop.permute.xlu0 %2948
      %2950 = vrot.lane.b32.xlu0 %v2222, 8
      %v2951 = vpop.permute.xlu0 %2950
      %2952 = vrot.lane.b32.xlu0 %v2248, 8
      %v2953 = vpop.permute.xlu0 %2952
      %2954 = vrot.lane.b32.xlu0 %v2274, 8
      %v2955 = vpop.permute.xlu0 %2954
      %2972 = vrot.lane.b32.xlu0 %v2716, 12
      %v2973 = vpop.permute.xlu0 %2972
      %2974 = vrot.lane.b32.xlu0 %v2742, 12
      %v2975 = vpop.permute.xlu0 %2974
      %2976 = vrot.lane.b32.xlu0 %v2768, 12
      %v2977 = vpop.permute.xlu0 %2976
      %2978 = vrot.lane.b32.xlu0 %v2794, 12
      %v2979 = vpop.permute.xlu0 %2978
      %2980 = vrot.lane.b32.xlu0 %v2820, 12
      %v2981 = vpop.permute.xlu0 %2980
      %2982 = vrot.lane.b32.xlu0 %v2846, 12
      %v2983 = vpop.permute.xlu0 %2982
      %2984 = vrot.lane.b32.xlu0 %v2872, 12
      %v2985 = vpop.permute.xlu0 %2984
      %2986 = vrot.lane.b32.xlu0 %v2898, 12
      %v2987 = vpop.permute.xlu0 %2986
      %v2996 = vsel %vm405, %v844, %v2909
      %v2997 = vsel %vm405, %v870, %v2911
      %v2998 = vsel %vm405, %v896, %v2913
      %v2999 = vsel %vm405, %v922, %v2915
      %v3000 = vsel %vm405, %v948, %v2917
      %v3001 = vsel %vm405, %v974, %v2919
      %v3002 = vsel %vm405, %v1000, %v2921
      %v3003 = vsel %vm405, %v1026, %v2923
      %v3004 = vsel %vm627, %v2996, %v2941
      %v3005 = vsel %vm627, %v2997, %v2943
      %v3006 = vsel %vm627, %v2998, %v2945
      %v3007 = vsel %vm627, %v2999, %v2947
      %v3008 = vsel %vm627, %v3000, %v2949
      %v3009 = vsel %vm627, %v3001, %v2951
      %v3010 = vsel %vm627, %v3002, %v2953
      %v3011 = vsel %vm627, %v3003, %v2955
      %vm3012 = vcmask 97280
      %v3013 = vsel %vm3012, %v3004, %v2973
      %v3014 = vsel %vm3012, %v3005, %v2975
      %v3015 = vsel %vm3012, %v3006, %v2977
      %v3016 = vsel %vm3012, %v3007, %v2979
      %v3017 = vsel %vm3012, %v3008, %v2981
      %v3018 = vsel %vm3012, %v3009, %v2983
      %v3019 = vsel %vm3012, %v3010, %v2985
      %v3020 = vsel %vm3012, %v3011, %v2987
      %v3021 = vld [vmem:[%s4] sm:$0xff]
      %v3022 = vld [vmem:[%s4 + $0x8] sm:$0xff]
      %v3023 = vld [vmem:[%s5] sm:$0x1]
      %v3025 = vperm.slane %v3023, 0
      %v3028 = vsel %vm328, %v3013, 0
      %v3031 = vsel %vm328, %v3014, 0
      %v3034 = vsel %vm328, %v3015, 0
      %v3037 = vsel %vm328, %v3016, 0
      %v3040 = vsel %vm328, %v3017, 0
      %v3043 = vsel %vm328, %v3018, 0
      %v3046 = vsel %vm328, %v3019, 0
      %v3049 = vsel %vm328, %v3020, 0
      %3051 = vmatpush.msra.mxu0 0.0
      %3052 = vmatpush.msra.mxu0 0.0
      %3053 = vmatpush.msra.mxu0 0.0
      %3054 = vmatpush.msra.mxu0 0.0
      %3055 = vmatpush.msra.mxu0 0.0
      %3056 = vmatpush.msra.mxu0 0.0
      %3057 = vmatpush.msra.mxu0 0.0
      %3058 = vmatpush.msra.mxu0 0.0
      %3059 = vmatpush.msra.mxu0 0.0
      %3060 = vmatpush.msra.mxu0 0.0
      %3061 = vmatpush.msra.mxu0 0.0
      %3062 = vmatpush.msra.mxu0 0.0
      %3063 = vmatpush.msra.mxu0 0.0
      %3064 = vmatpush.msra.mxu0 0.0
      %3065 = vmatpush.msra.mxu0 %v3022
      %3066 = vmatpush.msra.mxu0 %v3021
      %3067 = vmatmul.f32.gmra.mxu0 %v3028
      %v3068 = vpop.f32.mrf.mxu0
      %v3069 = vadd.f32 %v3025, %v3068
      %3070 = vmatmul.f32.gmra.mxu0 %v3031
      %v3071 = vpop.f32.mrf.mxu0
      %v3072 = vadd.f32 %v3025, %v3071
      %3073 = vmatmul.f32.gmra.mxu0 %v3034
      %v3074 = vpop.f32.mrf.mxu0
      %v3075 = vadd.f32 %v3025, %v3074
      %3076 = vmatmul.f32.gmra.mxu0 %v3037
      %v3077 = vpop.f32.mrf.mxu0
      %v3078 = vadd.f32 %v3025, %v3077
      %3079 = vmatmul.f32.gmra.mxu0 %v3040
      %v3080 = vpop.f32.mrf.mxu0
      %v3081 = vadd.f32 %v3025, %v3080
      %3082 = vmatmul.f32.gmra.mxu0 %v3043
      %v3083 = vpop.f32.mrf.mxu0
      %v3084 = vadd.f32 %v3025, %v3083
      %3085 = vmatmul.f32.gmra.mxu0 %v3046
      %v3086 = vpop.f32.mrf.mxu0
      %v3087 = vadd.f32 %v3025, %v3086
      %3088 = vmatmul.f32.gmra.mxu0 %v3049
      %v3089 = vpop.f32.mrf.mxu0
      %v3090 = vadd.f32 %v3025, %v3089
      %3091 = vdwg.mxu0
      %3092 = vst.msk [vmem:[%s272] sm:$0xff] %vm328, %v3069
      %3093 = vst.msk [vmem:[%s272 + $0x8] sm:$0xff] %vm328, %v3072
      %3094 = vst.msk [vmem:[%s272 + $0x10] sm:$0xff] %vm328, %v3075
      %3095 = vst.msk [vmem:[%s272 + $0x18] sm:$0xff] %vm328, %v3078
      %3096 = vst.msk [vmem:[%s272 + $0x20] sm:$0xff] %vm328, %v3081
      %3097 = vst.msk [vmem:[%s272 + $0x28] sm:$0xff] %vm328, %v3084
      %3098 = vst.msk [vmem:[%s272 + $0x30] sm:$0xff] %vm328, %v3087
      %3099 = vst.msk [vmem:[%s272 + $0x38] sm:$0xff] %vm328, %v3090
      %s3100 = smul.u32 8, %s17
      %p3101 = scmp.lt.s32.totalorder %s3100, 31
      %s3102 = scalar_select %p3101, %s3100, 31
      %s3103 = smul.addr %s3102, 8
      %s3104 = scalar_lea.vmem %s6, %s3103
      // Predicated region
      $region45: #{building_block_forward.9} parent=43 // pred_check
        %p3105 = pneg %p171
      $region46: #{building_block_forward.9} parent=43 // pred_check_branch
        %3107 = sbr.rel (%p3105) target = $region48
      $region47: #{building_block_forward.9} parent=43 // pred_region
        %s3108 = smul.u32 8, %s17
      $region48: #{building_block_forward.9} parent=43 // pred_fallthru
        _
    $region44: #{building_block_forward.9} parent=5 // pred_fallthru
      _
    %p3109 = scmp.le.s32.totalorder 2, %s12
    // Predicated region
    $region49: #{building_block_forward.9} parent=5 // pred_check
      %p3110 = pneg %p3109
    $region50: #{building_block_forward.9} parent=5 // pred_check_branch
      %3112 = sbr.rel (%p3110) target = $region52
    $region51: #{building_block_forward.9} parent=5 // pred_region
      %s3113 = ssub.s32 %s12, 2
      // Predicated region
      $region53: #{building_block_forward.9} parent=51 // pred_check
        %p3114 = pneg %p177
      $region54: #{building_block_forward.9} parent=51 // pred_check_branch
        %3116 = sbr.rel (%p3114) target = $region56
      $region55: #{building_block_forward.9} parent=51 // pred_region
        %s3117 = smul.u32 8, %s18
        %p3118 = scmp.lt.s32.totalorder %s3117, 31
        %s3119 = scalar_select %p3118, %s3117, 31
        %s3120 = smul.addr %s3119, 8
        %s3121 = scalar_lea.vmem %s6, %s3120
      $region56: #{building_block_forward.9} parent=51 // pred_fallthru
        _
    $region52: #{building_block_forward.9} parent=5 // pred_fallthru
      _
  $region6: #{building_block_forward.9} parent=0 // loop_footer
    %s16 = sadd.s32 1, %s12
  $region7: #{building_block_forward.9} parent=0 // loop_footer_branch
    %11 = sbr.rel target = $region3
  $region8: #{building_block_forward.9} parent=0 // loop_exit
    _

// kernel: building_block_forward.12
$region0: #{building_block_forward.12}
  #allocation0 [shape = 'u32[]', space=smem, size = 0x4, offset = 0x4, fixed_abs, tag = 'smem constant byte address 0x4 - core index']
  #allocation1 [shape = 'u32[72,128]{1,0:T(1,128)}', space=vmem, size = 0x9000, scoped, tag = 'internal scratch']
  %s0 = inlined_call_operand.vmem [shape: f32[32,128], index: 0, kind: input, shape index: {}]
  %s1 = inlined_call_operand.vmem [shape: f32[128,128], index: 1, kind: input, shape index: {}]
  %s2 = inlined_call_operand.vmem [shape: f32[1,128], index: 2, kind: input, shape index: {}]
  %s3 = inlined_call_operand.vmem [shape: f32[32,128], index: 3, kind: output, shape index: {}]
  %s4 = sld [smem:[#allocation0]]
  $region45: #{building_block_forward.12} parent=0
    _
  %s6 = ssub.s32 1, %s4
  %s7 = scalar_select 0, %s6, %s4
  loop: start=0, step=1, limit=6
  $region2: #{building_block_forward.12} parent=0 // loop_pre_header
    _
  $region3: #{building_block_forward.12} parent=0 // loop_header
    %s9 = sphi 0, %s13
    %p10 = scmp.ge.s32.totalorder %s9, 6
    %s19 = sphi 0, %s21
    %s22 = sphi 0, %s19
    %s23 = sphi 0, %s22
    %s39 = sphi 0, %s23
    %s43 = sphi 0, %s43
    %s45 = sphi 0, %s43
    %s46 = sphi 0, %s45
    %s60 = sphi 0, %s46
    %s64 = sphi 0, %s64
    %s66 = sphi 0, %s64
    %s67 = sphi 0, %s66
    %s81 = sphi 0, %s67
    %s87 = sphi 0, %s89
    %s90 = sphi 0, %s87
    %s91 = sphi 0, %s90
    %s107 = sphi 0, %s91
  $region4: #{building_block_forward.12} parent=0 // loop_header_branch
    %12 = sbr.rel (%p10) target = $region8
  $region5: #{building_block_forward.12} parent=0 // loop_body
    %s14 = ssub.s32 %s9, 1
    %s15 = ssub.s32 %s9, 2
    %s16 = sadd.s32 %s9, 1
    %s17 = ssub.s32 %s9, %s16
    %p18 = scmp.eq.s32.totalorder %s17, 0
    %s20 = sadd.s32 %s19, 1
    %s21 = scalar_select %p18, %s19, %s20
    %p24 = pneg %p18
    %p25 = scmp.eq.s32.totalorder %s9, 3
    %p26 = por %p24, %p25
    %p27 = scmp.ne.s32.totalorder %s19, %s22
    %p28 = scmp.eq.s32.totalorder %s9, 0
    %p29 = por %p27, %p28
    %p30 = scmp.ne.s32.totalorder %s19, %s22
    %p31 = scmp.eq.s32.totalorder %s14, 3
    %p32 = por %p30, %p31
    %p33 = scmp.ne.s32.totalorder %s22, %s23
    %p34 = scmp.eq.s32.totalorder %s14, 0
    %p35 = por %p33, %p34
    %p36 = scmp.ne.s32.totalorder %s22, %s23
    %p37 = scmp.eq.s32.totalorder %s15, 3
    %p38 = por %p36, %p37
    %p40 = scmp.ne.s32.totalorder %s23, %s39
    %p41 = scmp.eq.s32.totalorder %s15, 0
    %p42 = por %p40, %p41
    %s44 = sadd.s32 %s43, 1
    %p47 = scmp.eq.s32.totalorder %s9, 3
    %p48 = scmp.ne.s32.totalorder %s43, %s45
    %p49 = scmp.eq.s32.totalorder %s9, 0
    %p50 = por %p48, %p49
    %p51 = scmp.ne.s32.totalorder %s43, %s45
    %p52 = scmp.eq.s32.totalorder %s14, 3
    %p53 = por %p51, %p52
    %p54 = scmp.ne.s32.totalorder %s45, %s46
    %p55 = scmp.eq.s32.totalorder %s14, 0
    %p56 = por %p54, %p55
    %p57 = scmp.ne.s32.totalorder %s45, %s46
    %p58 = scmp.eq.s32.totalorder %s15, 3
    %p59 = por %p57, %p58
    %p61 = scmp.ne.s32.totalorder %s46, %s60
    %p62 = scmp.eq.s32.totalorder %s15, 0
    %p63 = por %p61, %p62
    %s65 = sadd.s32 %s64, 1
    %p68 = scmp.eq.s32.totalorder %s9, 3
    %p69 = scmp.ne.s32.totalorder %s64, %s66
    %p70 = scmp.eq.s32.totalorder %s9, 0
    %p71 = por %p69, %p70
    %p72 = scmp.ne.s32.totalorder %s64, %s66
    %p73 = scmp.eq.s32.totalorder %s14, 3
    %p74 = por %p72, %p73
    %p75 = scmp.ne.s32.totalorder %s66, %s67
    %p76 = scmp.eq.s32.totalorder %s14, 0
    %p77 = por %p75, %p76
    %p78 = scmp.ne.s32.totalorder %s66, %s67
    %p79 = scmp.eq.s32.totalorder %s15, 3
    %p80 = por %p78, %p79
    %p82 = scmp.ne.s32.totalorder %s67, %s81
    %p83 = scmp.eq.s32.totalorder %s15, 0
    %p84 = por %p82, %p83
    %s85 = ssub.s32 %s9, %s16
    %p86 = scmp.eq.s32.totalorder %s85, 0
    %s88 = sadd.s32 %s87, 1
    %s89 = scalar_select %p86, %s87, %s88
    %p92 = pneg %p86
    %p93 = scmp.eq.s32.totalorder %s9, 3
    %p94 = por %p92, %p93
    %p95 = scmp.ne.s32.totalorder %s87, %s90
    %p96 = scmp.eq.s32.totalorder %s9, 0
    %p97 = por %p95, %p96
    %p98 = scmp.ne.s32.totalorder %s87, %s90
    %p99 = scmp.eq.s32.totalorder %s14, 3
    %p100 = por %p98, %p99
    %p101 = scmp.ne.s32.totalorder %s90, %s91
    %p102 = scmp.eq.s32.totalorder %s14, 0
    %p103 = por %p101, %p102
    %p104 = scmp.ne.s32.totalorder %s90, %s91
    %p105 = scmp.eq.s32.totalorder %s15, 3
    %p106 = por %p104, %p105
    %p108 = scmp.ne.s32.totalorder %s91, %s107
    %p109 = scmp.eq.s32.totalorder %s15, 0
    %p110 = por %p108, %p109
    %p111 = scmp.le.s32.totalorder 1, %s9
    %p112 = scmp.lt.s32.totalorder %s9, 5
    %p113 = pnand %p111, %p112
    %p114 = pneg %p113
    // Predicated region
    $region9: #{building_block_forward.12} parent=5 // pred_check
      _
    $region10: #{building_block_forward.12} parent=5 // pred_check_branch
      %116 = sbr.rel (%p113) target = $region12
    $region11: #{building_block_forward.12} parent=5 // pred_region
      %s117 = ssub.s32 %s9, 1
      // Predicated region
      $region13: #{building_block_forward.12} parent=11 // pred_check
        %p118 = pneg %p56
      $region14: #{building_block_forward.12} parent=11 // pred_check_branch
        %120 = sbr.rel (%p118) target = $region16
      $region15: #{building_block_forward.12} parent=11 // pred_region
        _
      $region16: #{building_block_forward.12} parent=11 // pred_fallthru
        _
      // Predicated region
      $region17: #{building_block_forward.12} parent=11 // pred_check
        %p121 = pneg %p77
      $region18: #{building_block_forward.12} parent=11 // pred_check_branch
        %123 = sbr.rel (%p121) target = $region20
      $region19: #{building_block_forward.12} parent=11 // pred_region
        _
      $region20: #{building_block_forward.12} parent=11 // pred_fallthru
        _
    $region12: #{building_block_forward.12} parent=5 // pred_fallthru
      _
    %p124 = scmp.lt.s32.totalorder %s9, 4
    // Predicated region
    $region21: #{building_block_forward.12} parent=5 // pred_check
      %p125 = pneg %p124
    $region22: #{building_block_forward.12} parent=5 // pred_check_branch
      %127 = sbr.rel (%p125) target = $region24
    $region23: #{building_block_forward.12} parent=5 // pred_region
      // Predicated region
      $region25: #{building_block_forward.12} parent=23 // pred_check
        %p128 = pneg %p29
      $region26: #{building_block_forward.12} parent=23 // pred_check_branch
        %130 = sbr.rel (%p128) target = $region28
      $region27: #{building_block_forward.12} parent=23 // pred_region
        %p131 = scmp.lt.s32.totalorder %s9, 3
        %s132 = scalar_select %p131, %s9, 3
        %s133 = smul.addr %s132, 8
        %s134 = scalar_lea.vmem %s0, %s133
      $region28: #{building_block_forward.12} parent=23 // pred_fallthru
        _
    $region24: #{building_block_forward.12} parent=5 // pred_fallthru
      _
    %p135 = scmp.le.s32.totalorder 1, %s9
    %p136 = scmp.lt.s32.totalorder %s9, 5
    %p137 = pnand %p135, %p136
    %p138 = pneg %p137
    // Predicated region
    $region29: #{building_block_forward.12} parent=5 // pred_check
      _
    $region30: #{building_block_forward.12} parent=5 // pred_check_branch
      %140 = sbr.rel (%p137) target = $region32
    $region31: #{building_block_forward.12} parent=5 // pred_region
      %s141 = ssub.s32 %s9, 1
      %p142 = scmp.lt.s32.totalorder %s14, 3
      %s143 = scalar_select %p142, %s14, 3
      %s144 = smul.addr %s143, 8
      %s145 = scalar_lea.vmem %s0, %s144
      %p146 = pneg %p35
      %p147 = pneg %p32
      %p148 = pneg %p56
      %p149 = pneg %p53
      %p150 = pneg %p77
      %p151 = pneg %p74
      %p152 = pneg %p103
      %p153 = pneg %p100
      %p154 = scmp.lt.s32.totalorder %s14, 3
      %s155 = scalar_select %p154, %s14, 3
      %s156 = smul.addr %s155, 8
      %s157 = scalar_lea.vmem %s3, %s156
      %p158 = scmp.lt.s32.totalorder %s14, 3
      %s159 = scalar_select %p158, %s14, 3
      %s160 = smul.addr %s159, 8
      %s161 = scalar_lea.vmem %s0, %s160
      %p162 = scmp.lt.s32.totalorder %s14, 3
      %s163 = scalar_select %p162, %s14, 3
      %s164 = smul.addr %s163, 8
      %s165 = scalar_lea.vmem %s3, %s164
      %v166 = vld [vmem:[%s161] sm:$0xff]
      %v167 = vld [vmem:[%s1] sm:$0xff]
      %v168 = vld [vmem:[%s1 + $0x8] sm:$0xff]
      %v169 = vld [vmem:[%s1 + $0x10] sm:$0xff]
      %v170 = vld [vmem:[%s1 + $0x18] sm:$0xff]
      %v171 = vld [vmem:[%s1 + $0x20] sm:$0xff]
      %v172 = vld [vmem:[%s1 + $0x28] sm:$0xff]
      %v173 = vld [vmem:[%s1 + $0x30] sm:$0xff]
      %v174 = vld [vmem:[%s1 + $0x38] sm:$0xff]
      %v175 = vld [vmem:[%s1 + $0x40] sm:$0xff]
      %v176 = vld [vmem:[%s1 + $0x48] sm:$0xff]
      %v177 = vld [vmem:[%s1 + $0x50] sm:$0xff]
      %v178 = vld [vmem:[%s1 + $0x58] sm:$0xff]
      %v179 = vld [vmem:[%s1 + $0x60] sm:$0xff]
      %v180 = vld [vmem:[%s1 + $0x68] sm:$0xff]
      %v181 = vld [vmem:[%s1 + $0x70] sm:$0xff]
      %v182 = vld [vmem:[%s1 + $0x78] sm:$0xff]
      %v183 = vld [vmem:[%s2] sm:$0x1]
      %v185 = vperm.slane %v183, 0
      %187 = vmatpush.msra.mxu0 %v182
      %188 = vmatpush.msra.mxu0 %v181
      %189 = vmatpush.msra.mxu0 %v180
      %190 = vmatpush.msra.mxu0 %v179
      %191 = vmatpush.msra.mxu0 %v178
      %192 = vmatpush.msra.mxu0 %v177
      %193 = vmatpush.msra.mxu0 %v176
      %194 = vmatpush.msra.mxu0 %v175
      %195 = vmatpush.msra.mxu0 %v174
      %196 = vmatpush.msra.mxu0 %v173
      %197 = vmatpush.msra.mxu0 %v172
      %198 = vmatpush.msra.mxu0 %v171
      %199 = vmatpush.msra.mxu0 %v170
      %200 = vmatpush.msra.mxu0 %v169
      %201 = vmatpush.msra.mxu0 %v168
      %202 = vmatpush.msra.mxu0 %v167
      %203 = vmatmul.f32.gmra.mxu0 %v166
      %v204 = vpop.f32.mrf.mxu0
      %v205 = vadd.f32 %v185, %v204
      %206 = vdwg.mxu0
      %vm207 = vcmp.gt.f32.partialorder %v205, 0.0
      %v208 = vmul.f32 %v205, 0.2
      %v209 = vsel %vm207, %v205, %v208
      %210 = vst [vmem:[%s165] sm:$0xff] %v209
      %p211 = scmp.lt.s32.totalorder %s14, 3
      %s212 = scalar_select %p211, %s14, 3
      %s213 = smul.addr %s212, 8
      %s214 = scalar_lea.vmem %s3, %s213
      // Predicated region
      $region33: #{building_block_forward.12} parent=31 // pred_check
        %p215 = pneg %p100
      $region34: #{building_block_forward.12} parent=31 // pred_check_branch
        %217 = sbr.rel (%p215) target = $region36
      $region35: #{building_block_forward.12} parent=31 // pred_region
        _
      $region36: #{building_block_forward.12} parent=31 // pred_fallthru
        _
    $region32: #{building_block_forward.12} parent=5 // pred_fallthru
      _
    %p218 = scmp.le.s32.totalorder 2, %s9
    // Predicated region
    $region37: #{building_block_forward.12} parent=5 // pred_check
      %p219 = pneg %p218
    $region38: #{building_block_forward.12} parent=5 // pred_check_branch
      %221 = sbr.rel (%p219) target = $region40
    $region39: #{building_block_forward.12} parent=5 // pred_region
      %s222 = ssub.s32 %s9, 2
      // Predicated region
      $region41: #{building_block_forward.12} parent=39 // pred_check
        %p223 = pneg %p106
      $region42: #{building_block_forward.12} parent=39 // pred_check_branch
        %225 = sbr.rel (%p223) target = $region44
      $region43: #{building_block_forward.12} parent=39 // pred_region
        %p226 = scmp.lt.s32.totalorder %s15, 3
        %s227 = scalar_select %p226, %s15, 3
        %s228 = smul.addr %s227, 8
        %s229 = scalar_lea.vmem %s3, %s228
      $region44: #{building_block_forward.12} parent=39 // pred_fallthru
        _
    $region40: #{building_block_forward.12} parent=5 // pred_fallthru
      _
  $region6: #{building_block_forward.12} parent=0 // loop_footer
    %s13 = sadd.s32 1, %s9
  $region7: #{building_block_forward.12} parent=0 // loop_footer_branch
    %8 = sbr.rel target = $region3
  $region8: #{building_block_forward.12} parent=0 // loop_exit
    _

// kernel: building_block_forward.15
$region0: #{building_block_forward.15}
  #allocation0 [shape = 'u32[]', space=smem, size = 0x4, offset = 0x4, fixed_abs, tag = 'smem constant byte address 0x4 - core index']
  #allocation1 [shape = 'u32[72,128]{1,0:T(1,128)}', space=vmem, size = 0x9000, scoped, tag = 'internal scratch']
  %s0 = inlined_call_operand.vmem [shape: f32[32,48], index: 0, kind: input, shape index: {}]
  %s1 = inlined_call_operand.vmem [shape: f32[48,32], index: 1, kind: input, shape index: {}]
  %s2 = inlined_call_operand.vmem [shape: f32[1,32], index: 2, kind: input, shape index: {}]
  %s3 = inlined_call_operand.hbm [shape: f32[32,32], index: 3, kind: output, shape index: {}]
  %s4 = sld [smem:[#allocation0]]
  $region45: #{building_block_forward.15} parent=0
    _
  %s6 = ssub.s32 1, %s4
  %s7 = scalar_select 0, %s6, %s4
  $region1: #{building_block_forward.15} parent=0
    #allocation2 [shape = 'u8[8192]{0}', space=vmem, size = 0x2000, scoped, tag = 'output window, operand 0']
    #allocation3 [shape = 's32[2]{0}', space=sflag, size = 0x8, scoped, tag = 'scoped memory for building_block_forward.15']
    %8 = vsyncpa [#allocation3], 0
    %s9 = scalar_lea.sflag [#allocation3], 1
    %10 = vsyncpa %s9, 0
    loop: start=0, step=1, limit=6
    $region2: #{building_block_forward.15} parent=1 // loop_pre_header
      _
    $region3: #{building_block_forward.15} parent=1 // loop_header
      %s12 = sphi 0, %s16
      %p13 = scmp.ge.s32.totalorder %s12, 6
      %s22 = sphi 0, %s24
      %s25 = sphi 0, %s22
      %s26 = sphi 0, %s25
      %s42 = sphi 0, %s26
      %s46 = sphi 0, %s46
      %s48 = sphi 0, %s46
      %s49 = sphi 0, %s48
      %s63 = sphi 0, %s49
      %s67 = sphi 0, %s67
      %s69 = sphi 0, %s67
      %s70 = sphi 0, %s69
      %s84 = sphi 0, %s70
      %s90 = sphi 0, %s92
      %s93 = sphi 0, %s90
      %s94 = sphi 0, %s93
      %s110 = sphi 0, %s94
    $region4: #{building_block_forward.15} parent=1 // loop_header_branch
      %15 = sbr.rel (%p13) target = $region8
    $region5: #{building_block_forward.15} parent=1 // loop_body
      %s17 = ssub.s32 %s12, 1
      %s18 = ssub.s32 %s12, 2
      %s19 = sadd.s32 %s12, 1
      %s20 = ssub.s32 %s12, %s19
      %p21 = scmp.eq.s32.totalorder %s20, 0
      %s23 = sadd.s32 %s22, 1
      %s24 = scalar_select %p21, %s22, %s23
      %p27 = pneg %p21
      %p28 = scmp.eq.s32.totalorder %s12, 3
      %p29 = por %p27, %p28
      %p30 = scmp.ne.s32.totalorder %s22, %s25
      %p31 = scmp.eq.s32.totalorder %s12, 0
      %p32 = por %p30, %p31
      %p33 = scmp.ne.s32.totalorder %s22, %s25
      %p34 = scmp.eq.s32.totalorder %s17, 3
      %p35 = por %p33, %p34
      %p36 = scmp.ne.s32.totalorder %s25, %s26
      %p37 = scmp.eq.s32.totalorder %s17, 0
      %p38 = por %p36, %p37
      %p39 = scmp.ne.s32.totalorder %s25, %s26
      %p40 = scmp.eq.s32.totalorder %s18, 3
      %p41 = por %p39, %p40
      %p43 = scmp.ne.s32.totalorder %s26, %s42
      %p44 = scmp.eq.s32.totalorder %s18, 0
      %p45 = por %p43, %p44
      %s47 = sadd.s32 %s46, 1
      %p50 = scmp.eq.s32.totalorder %s12, 3
      %p51 = scmp.ne.s32.totalorder %s46, %s48
      %p52 = scmp.eq.s32.totalorder %s12, 0
      %p53 = por %p51, %p52
      %p54 = scmp.ne.s32.totalorder %s46, %s48
      %p55 = scmp.eq.s32.totalorder %s17, 3
      %p56 = por %p54, %p55
      %p57 = scmp.ne.s32.totalorder %s48, %s49
      %p58 = scmp.eq.s32.totalorder %s17, 0
      %p59 = por %p57, %p58
      %p60 = scmp.ne.s32.totalorder %s48, %s49
      %p61 = scmp.eq.s32.totalorder %s18, 3
      %p62 = por %p60, %p61
      %p64 = scmp.ne.s32.totalorder %s49, %s63
      %p65 = scmp.eq.s32.totalorder %s18, 0
      %p66 = por %p64, %p65
      %s68 = sadd.s32 %s67, 1
      %p71 = scmp.eq.s32.totalorder %s12, 3
      %p72 = scmp.ne.s32.totalorder %s67, %s69
      %p73 = scmp.eq.s32.totalorder %s12, 0
      %p74 = por %p72, %p73
      %p75 = scmp.ne.s32.totalorder %s67, %s69
      %p76 = scmp.eq.s32.totalorder %s17, 3
      %p77 = por %p75, %p76
      %p78 = scmp.ne.s32.totalorder %s69, %s70
      %p79 = scmp.eq.s32.totalorder %s17, 0
      %p80 = por %p78, %p79
      %p81 = scmp.ne.s32.totalorder %s69, %s70
      %p82 = scmp.eq.s32.totalorder %s18, 3
      %p83 = por %p81, %p82
      %p85 = scmp.ne.s32.totalorder %s70, %s84
      %p86 = scmp.eq.s32.totalorder %s18, 0
      %p87 = por %p85, %p86
      %s88 = ssub.s32 %s12, %s19
      %p89 = scmp.eq.s32.totalorder %s88, 0
      %s91 = sadd.s32 %s90, 1
      %s92 = scalar_select %p89, %s90, %s91
      %p95 = pneg %p89
      %p96 = scmp.eq.s32.totalorder %s12, 3
      %p97 = por %p95, %p96
      %p98 = scmp.ne.s32.totalorder %s90, %s93
      %p99 = scmp.eq.s32.totalorder %s12, 0
      %p100 = por %p98, %p99
      %p101 = scmp.ne.s32.totalorder %s90, %s93
      %p102 = scmp.eq.s32.totalorder %s17, 3
      %p103 = por %p101, %p102
      %p104 = scmp.ne.s32.totalorder %s93, %s94
      %p105 = scmp.eq.s32.totalorder %s17, 0
      %p106 = por %p104, %p105
      %p107 = scmp.ne.s32.totalorder %s93, %s94
      %p108 = scmp.eq.s32.totalorder %s18, 3
      %p109 = por %p107, %p108
      %p111 = scmp.ne.s32.totalorder %s94, %s110
      %p112 = scmp.eq.s32.totalorder %s18, 0
      %p113 = por %p111, %p112
      %p114 = scmp.le.s32.totalorder 1, %s12
      %p115 = scmp.lt.s32.totalorder %s12, 5
      %p116 = pnand %p114, %p115
      %p117 = pneg %p116
      // Predicated region
      $region9: #{building_block_forward.15} parent=5 // pred_check
        _
      $region10: #{building_block_forward.15} parent=5 // pred_check_branch
        %119 = sbr.rel (%p116) target = $region12
      $region11: #{building_block_forward.15} parent=5 // pred_region
        %s120 = ssub.s32 %s12, 1
        // Predicated region
        $region13: #{building_block_forward.15} parent=11 // pred_check
          %p121 = pneg %p59
        $region14: #{building_block_forward.15} parent=11 // pred_check_branch
          %123 = sbr.rel (%p121) target = $region16
        $region15: #{building_block_forward.15} parent=11 // pred_region
          _
        $region16: #{building_block_forward.15} parent=11 // pred_fallthru
          _
        // Predicated region
        $region17: #{building_block_forward.15} parent=11 // pred_check
          %p124 = pneg %p80
        $region18: #{building_block_forward.15} parent=11 // pred_check_branch
          %126 = sbr.rel (%p124) target = $region20
        $region19: #{building_block_forward.15} parent=11 // pred_region
          _
        $region20: #{building_block_forward.15} parent=11 // pred_fallthru
          _
      $region12: #{building_block_forward.15} parent=5 // pred_fallthru
        _
      %p127 = scmp.lt.s32.totalorder %s12, 4
      // Predicated region
      $region21: #{building_block_forward.15} parent=5 // pred_check
        %p128 = pneg %p127
      $region22: #{building_block_forward.15} parent=5 // pred_check_branch
        %130 = sbr.rel (%p128) target = $region24
      $region23: #{building_block_forward.15} parent=5 // pred_region
        // Predicated region
        $region25: #{building_block_forward.15} parent=23 // pred_check
          %p131 = pneg %p32
        $region26: #{building_block_forward.15} parent=23 // pred_check_branch
          %133 = sbr.rel (%p131) target = $region28
        $region27: #{building_block_forward.15} parent=23 // pred_region
          %p134 = scmp.lt.s32.totalorder %s12, 3
          %s135 = scalar_select %p134, %s12, 3
          %s136 = smul.addr %s135, 8
          %s137 = scalar_lea.vmem %s0, %s136
        $region28: #{building_block_forward.15} parent=23 // pred_fallthru
          _
      $region24: #{building_block_forward.15} parent=5 // pred_fallthru
        _
      %p138 = scmp.le.s32.totalorder 1, %s12
      %p139 = scmp.lt.s32.totalorder %s12, 5
      %p140 = pnand %p138, %p139
      %p141 = pneg %p140
      // Predicated region
      $region29: #{building_block_forward.15} parent=5 // pred_check
        _
      $region30: #{building_block_forward.15} parent=5 // pred_check_branch
        %143 = sbr.rel (%p140) target = $region32
      $region31: #{building_block_forward.15} parent=5 // pred_region
        %s144 = ssub.s32 %s12, 1
        %p145 = scmp.lt.s32.totalorder %s17, 3
        %s146 = scalar_select %p145, %s17, 3
        %s147 = smul.addr %s146, 8
        %s148 = scalar_lea.vmem %s0, %s147
        %p149 = pneg %p38
        %p150 = pneg %p35
        %p151 = pneg %p59
        %p152 = pneg %p56
        %p153 = pneg %p80
        %p154 = pneg %p77
        %p155 = pneg %p106
        %p156 = pneg %p103
        %s157 = sand.u32 %s93, 1
        %s158 = scalar_lea.sflag [#allocation3], %s157
        %s159 = sand.u32 %s93, 1
        %s160 = smul.addr %s159, 8
        %s161 = scalar_lea.vmem [#allocation2], %s160
        %p162 = scmp.lt.s32.totalorder %s17, 3
        %s163 = scalar_select %p162, %s17, 3
        %s164 = smul.addr %s163, 8
        %s165 = scalar_lea.vmem %s0, %s164
        %v166 = vld [vmem:[%s165] sm:$0xff]
        %v167 = vld [vmem:[%s1] sm:$0xff]
        %v168 = vld [vmem:[%s1 + $0x8] sm:$0xff]
        %v169 = vld [vmem:[%s1 + $0x10] sm:$0xff]
        %v170 = vld [vmem:[%s1 + $0x18] sm:$0xff]
        %v171 = vld [vmem:[%s1 + $0x20] sm:$0xff]
        %v172 = vld [vmem:[%s1 + $0x28] sm:$0xff]
        %v173 = vld [vmem:[%s2] sm:$0x1]
        %v175 = vperm.slane %v173, 0
        %vm177 = vcmask 392192
        %v179 = vsel %vm177, %v166, 0
        %181 = vmatpush.msra.mxu0 0.0
        %182 = vmatpush.msra.mxu0 0.0
        %183 = vmatpush.msra.mxu0 0.0
        %184 = vmatpush.msra.mxu0 0.0
        %185 = vmatpush.msra.mxu0 0.0
        %186 = vmatpush.msra.mxu0 0.0
        %187 = vmatpush.msra.mxu0 0.0
        %188 = vmatpush.msra.mxu0 0.0
        %189 = vmatpush.msra.mxu0 0.0
        %190 = vmatpush.msra.mxu0 0.0
        %191 = vmatpush.msra.mxu0 %v172
        %192 = vmatpush.msra.mxu0 %v171
        %193 = vmatpush.msra.mxu0 %v170
        %194 = vmatpush.msra.mxu0 %v169
        %195 = vmatpush.msra.mxu0 %v168
        %196 = vmatpush.msra.mxu0 %v167
        %197 = vmatmul.f32.gmra.mxu0 %v179
        %v198 = vpop.f32.mrf.mxu0
        %v199 = vadd.f32 %v175, %v198
        %200 = vdwg.mxu0
        %vm201 = vcmp.gt.f32.partialorder %v199, 0.0
        %v202 = vmul.f32 %v199, 0.2
        %v203 = vsel %vm201, %v199, %v202
        %vm204 = vcmask 261120
        %205 = vst.msk [vmem:[%s161] sm:$0xff] %vm204, %v203
        %s206 = sand.u32 %s93, 1
        %s207 = scalar_lea.sflag [#allocation3], %s206
        %s208 = sand.u32 %s93, 1
        %s209 = smul.addr %s208, 8
        %s210 = scalar_lea.vmem [#allocation2], %s209
        // Predicated region
        $region33: #{building_block_forward.15} parent=31 // pred_check
          %p211 = pneg %p103
        $region34: #{building_block_forward.15} parent=31 // pred_check_branch
          %213 = sbr.rel (%p211) target = $region36
        $region35: #{building_block_forward.15} parent=31 // pred_region
          %215 = vsyncadd %s207, 0
          %s216 = smul.addr %s17, 8
          %s217 = scalar_lea.hbm %s3, %s216
          %s219 = sshll.u32 %s210, 4
          %s220 = int_to_ptr.vmem [resolvable:$true] %s219
          %s221 = sshll.u32 %s217, 4
          %s222 = int_to_ptr.hbm [resolvable:$true] %s221
          %224 = dma.vmem_to_hbm [thread:$0]  %s220, 128, %s222, %s207
        $region36: #{building_block_forward.15} parent=31 // pred_fallthru
          _
      $region32: #{building_block_forward.15} parent=5 // pred_fallthru
        _
      %p225 = scmp.le.s32.totalorder 2, %s12
      // Predicated region
      $region37: #{building_block_forward.15} parent=5 // pred_check
        %p226 = pneg %p225
      $region38: #{building_block_forward.15} parent=5 // pred_check_branch
        %228 = sbr.rel (%p226) target = $region40
      $region39: #{building_block_forward.15} parent=5 // pred_region
        %s229 = ssub.s32 %s12, 2
        // Predicated region
        $region41: #{building_block_forward.15} parent=39 // pred_check
          %p230 = pneg %p109
        $region42: #{building_block_forward.15} parent=39 // pred_check_branch
          %232 = sbr.rel (%p230) target = $region44
        $region43: #{building_block_forward.15} parent=39 // pred_region
          %s233 = sand.u32 %s94, 1
          %s234 = scalar_lea.sflag [#allocation3], %s233
          %s235 = sand.u32 %s94, 1
          %s236 = smul.addr %s235, 8
          %s237 = scalar_lea.vmem [#allocation2], %s236
          %239 = dma.done %s234, 128
        $region44: #{building_block_forward.15} parent=39 // pred_fallthru
          _
      $region40: #{building_block_forward.15} parent=5 // pred_fallthru
        _
    $region6: #{building_block_forward.15} parent=1 // loop_footer
      %s16 = sadd.s32 1, %s12
    $region7: #{building_block_forward.15} parent=1 // loop_footer_branch
      %11 = sbr.rel target = $region3
    $region8: #{building_block_forward.15} parent=1 // loop_exit
      _
    %240 = vsyncpa [#allocation3], 1
    %s241 = scalar_lea.sflag [#allocation3], 1
    %242 = vsyncpa %s241, 1

</llo_original>
